<compile_context>
chip_gen: v7x
topology: tpu7x:2x2x1
jax: 0.10.0
libtpu: 0.0.40
codegen_flags: <defaults>
</compile_context>

<pallas_src>
from functools import partial

import jax
import jax.numpy as jnp
from jax import lax
from jax.experimental import pallas as pl
from jax.experimental.pallas import tpu as pltpu

EMBED_DIM = 32
DEPTH = 4
NUM_HEADS = 4
HEAD_DIM = EMBED_DIM // NUM_HEADS
FF_DIM = 2048          # PyTorch TransformerEncoderLayer default dim_feedforward
LN_EPS = 1e-5          # PyTorch default layer_norm_eps


def _layernorm(h, gamma, beta):
    # One-pass LayerNorm: mean and E[x^2] together, var = E[x^2] - mu^2.
    # h: (Bt, S, E) f32; gamma/beta: (1, E) -> broadcast
    mu = jnp.mean(h, axis=-1, keepdims=True)
    m2 = jnp.mean(h * h, axis=-1, keepdims=True)
    var = jnp.maximum(m2 - mu * mu, 0.0)
    return (h - mu) * lax.rsqrt(var + LN_EPS) * gamma + beta


def saint_kernel(x_ref, emb_ref,
                 wqkv_ref, bqkv_ref, wo_ref, bo_ref,
                 w1_ref, b1_ref, w2_ref, b2_ref,
                 ln1g_ref, ln1b_ref, ln2g_ref, ln2b_ref,
                 wfc_ref, bfc_ref,
                 o_ref, h_ref, *, ff_bf16):
    x = x_ref[...]                       # (Bt, S) f32
    emb = emb_ref[...]                   # (S, E) f32
    Bt, S = x.shape
    E = emb.shape[1]
    H, Dh = NUM_HEADS, HEAD_DIM
    BS = Bt * S
    bf16 = jnp.bfloat16

    # Feature embedding: (Bt, S, 1) * (1, S, E) -> (Bt, S, E), kept in VMEM scratch.
    h_ref[...] = x[:, :, None] * emb[None, :, :]

    def layer_body(l, carry):
        h = h_ref[...]                                                     # (Bt, S, E)

        # ---- multi-head self-attention over the feature axis ----
        h2d = h.reshape(BS, E)
        # fused Q/K/V projection; 1/sqrt(Dh) already folded into the Q columns/bias
        qkv = jnp.dot(h2d.astype(bf16), wqkv_ref[l],
                      preferred_element_type=jnp.float32) + bqkv_ref[l]    # (BS, 3E)

        head_outs = []
        for hh in range(H):
            qh = qkv[:, 0 * E + hh * Dh: 0 * E + (hh + 1) * Dh].reshape(Bt, S, Dh)
            kh = qkv[:, 1 * E + hh * Dh: 1 * E + (hh + 1) * Dh].reshape(Bt, S, Dh)
            vh = qkv[:, 2 * E + hh * Dh: 2 * E + (hh + 1) * Dh].reshape(Bt, S, Dh)

            s = jnp.einsum('bqd,bkd->bqk', qh.astype(bf16), kh.astype(bf16),
                           preferred_element_type=jnp.float32)             # (Bt, S, S)
            s = s - jnp.max(s, axis=-1, keepdims=True)
            p = jnp.exp(s)
            p = p * pl.reciprocal(jnp.sum(p, axis=-1, keepdims=True), approx=True)
            head_outs.append(
                jnp.einsum('bqk,bkd->bqd', p.astype(bf16), vh.astype(bf16),
                           preferred_element_type=jnp.float32))            # (Bt, S, Dh)

        # concatenate heads -> one lane-dense (E, E) output projection, bias added once
        o_heads = jnp.concatenate(head_outs, axis=-1).reshape(BS, E)       # (BS, E)
        attn = jnp.dot(o_heads.astype(bf16), wo_ref[l],
                       preferred_element_type=jnp.float32) + bo_ref[l]     # (BS, E)
        h = _layernorm(h + attn.reshape(Bt, S, E), ln1g_ref[l], ln1b_ref[l])

        # ---- feed-forward (relu, dim_feedforward = 2048) ----
        h2d = h.reshape(BS, E)
        ff = jnp.dot(h2d.astype(bf16), w1_ref[l],
                     preferred_element_type=jnp.float32)                   # (BS, F)
        if ff_bf16:
            # bf16 epilogue (v6e / v7x): bias + ReLU in bf16, feed second GEMM directly.
            ff = jnp.maximum(ff.astype(bf16) + b1_ref[l].astype(bf16), 0)
        else:
            # v5e has no bf16 VALU: keep the elementwise chain in f32.
            ff = jnp.maximum(ff + b1_ref[l], 0.0).astype(bf16)
        ff = jnp.dot(ff, w2_ref[l],
                     preferred_element_type=jnp.float32) + b2_ref[l]       # (BS, E)
        h_ref[...] = _layernorm(h + ff.reshape(Bt, S, E), ln2g_ref[l], ln2b_ref[l])
        return carry

    lax.fori_loop(0, DEPTH, layer_body, 0)

    # ---- mean pool over features + final linear (E -> 1) ----
    h = h_ref[...]
    pooled = jnp.mean(h, axis=1)                                           # (Bt, E)
    out = jnp.sum(pooled * wfc_ref[...], axis=-1, keepdims=True) + bfc_ref[...]
    o_ref[...] = out.astype(o_ref.dtype)


def init_params(key, input_dim):
    """Deterministic synthetic parameters (xavier-uniform-ish weights), per-head layout."""
    E, F, H, D, Dh = EMBED_DIM, FF_DIM, NUM_HEADS, DEPTH, HEAD_DIM

    def xavier(key, shape, fan_in, fan_out):
        lim = (6.0 / (fan_in + fan_out)) ** 0.5
        return jax.random.uniform(key, shape, jnp.float32, -lim, lim)

    ks = jax.random.split(key, 16)
    return {
        'emb': xavier(ks[0], (input_dim, E), input_dim, E),
        'wq': xavier(ks[1], (D, H, E, Dh), E, E),
        'wk': xavier(ks[2], (D, H, E, Dh), E, E),
        'wv': xavier(ks[3], (D, H, E, Dh), E, E),
        'bq': 0.01 * jax.random.normal(ks[4], (D, H, 1, Dh), jnp.float32),
        'bk': 0.01 * jax.random.normal(ks[5], (D, H, 1, Dh), jnp.float32),
        'bv': 0.01 * jax.random.normal(ks[6], (D, H, 1, Dh), jnp.float32),
        'wo': xavier(ks[7], (D, H, Dh, E), E, E),
        'bo': 0.01 * jax.random.normal(ks[8], (D, 1, E), jnp.float32),
        'w1': xavier(ks[9], (D, E, F), E, F),
        'b1': 0.01 * jax.random.normal(ks[10], (D, 1, F), jnp.float32),
        'w2': xavier(ks[11], (D, F, E), F, E),
        'b2': 0.01 * jax.random.normal(ks[12], (D, 1, E), jnp.float32),
        'ln1g': jnp.ones((D, 1, E), jnp.float32),
        'ln1b': jnp.zeros((D, 1, E), jnp.float32),
        'ln2g': jnp.ones((D, 1, E), jnp.float32),
        'ln2b': jnp.zeros((D, 1, E), jnp.float32),
        'wfc': xavier(ks[13], (1, E), E, 1),
        'bfc': 0.01 * jax.random.normal(ks[14], (1, 1), jnp.float32),
    }


def fuse_params(p):
    """Fuse per-head Q/K/V into one (E, 3E) weight per layer (1/sqrt(Dh) folded into Q),
    concatenate the per-head output projection into (E, E), cast GEMM weights to bf16."""
    D, H, E, Dh = DEPTH, NUM_HEADS, EMBED_DIM, HEAD_DIM
    scale = 1.0 / (Dh ** 0.5)

    def merge_w(w):   # (D, H, E, Dh) -> (D, E, H*Dh); head h occupies columns [h*Dh,(h+1)*Dh)
        return jnp.transpose(w, (0, 2, 1, 3)).reshape(D, E, H * Dh)

    def merge_b(b):   # (D, H, 1, Dh) -> (D, 1, H*Dh)
        return jnp.transpose(b, (0, 2, 1, 3)).reshape(D, 1, H * Dh)

    wqkv = jnp.concatenate(
        [merge_w(p['wq']) * scale, merge_w(p['wk']), merge_w(p['wv'])], axis=-1)   # (D, E, 3E)
    bqkv = jnp.concatenate(
        [merge_b(p['bq']) * scale, merge_b(p['bk']), merge_b(p['bv'])], axis=-1)   # (D, 1, 3E)
    wo = p['wo'].reshape(D, H * Dh, E)                                             # (D, E, E)

    bf16 = jnp.bfloat16
    return {
        'emb': p['emb'],
        'wqkv': wqkv.astype(bf16), 'bqkv': bqkv,
        'wo': wo.astype(bf16), 'bo': p['bo'],
        'w1': p['w1'].astype(bf16), 'b1': p['b1'],
        'w2': p['w2'].astype(bf16), 'b2': p['b2'],
        'ln1g': p['ln1g'], 'ln1b': p['ln1b'],
        'ln2g': p['ln2g'], 'ln2b': p['ln2b'],
        'wfc': p['wfc'], 'bfc': p['bfc'],
    }


def _resident_spec(arr):
    # Full-array block with a constant index map: stays VMEM-resident across the grid.
    nd = arr.ndim
    return pl.BlockSpec(arr.shape, lambda i, _nd=nd: (0,) * _nd)


def _chip_config():
    """Generation-specific tile / VMEM / dtype choices (v5e, v6e, v7x)."""
    try:
        kind = jax.devices()[0].device_kind.lower()
    except Exception:
        kind = ""
    is_v5 = "v5" in kind
    is_v7 = ("v7" in kind) or ("7x" in kind)
    big_vmem = not is_v7                       # v5e / v6e: 128 MiB VMEM; v7x: 64 MiB per TC
    return dict(
        block_b=256 if big_vmem else 128,
        vmem_cap=(96 if big_vmem else 48) * 2**20,
        ff_bf16=not is_v5,                     # v5e has no bf16 VALU -> keep f32 epilogue
        split_small_batch=is_v7,               # keep >= 2 grid tiles so both TCs get work
    )


@partial(jax.jit, static_argnames=("block_b", "vmem_cap", "ff_bf16"))
def _saint_forward_impl(x, fparams, *, block_b, vmem_cap, ff_bf16):
    B, S = x.shape
    Bt = min(block_b, B)
    Bp = ((B + Bt - 1) // Bt) * Bt            # pad batch to a multiple of the tile
    if Bp != B:
        x = jnp.pad(x, ((0, Bp - B), (0, 0)))

    weights = (fparams['emb'],
               fparams['wqkv'], fparams['bqkv'], fparams['wo'], fparams['bo'],
               fparams['w1'], fparams['b1'], fparams['w2'], fparams['b2'],
               fparams['ln1g'], fparams['ln1b'], fparams['ln2g'], fparams['ln2b'],
               fparams['wfc'], fparams['bfc'])

    in_specs = [pl.BlockSpec((Bt, S), lambda i: (i, 0))]
    in_specs += [_resident_spec(w) for w in weights]

    # VMEM budget: ~1 MiB resident bf16 weights + a few copies of the (Bt*S, FF_DIM)
    # intermediate for the current tile; capped per chip generation.
    ff_bytes = Bt * S * FF_DIM * 4
    vmem_limit = int(min(vmem_cap, max(32 * 2**20, 3 * ff_bytes + 16 * 2**20)))

    kernel = partial(saint_kernel, ff_bf16=ff_bf16)

    out = pl.pallas_call(
        kernel,
        out_shape=jax.ShapeDtypeStruct((Bp, 1), jnp.float32),
        grid=(Bp // Bt,),
        in_specs=in_specs,
        out_specs=pl.BlockSpec((Bt, 1), lambda i: (i, 0)),
        scratch_shapes=[pltpu.VMEM((Bt, S, EMBED_DIM), jnp.float32)],
        compiler_params=pltpu.CompilerParams(
            dimension_semantics=("parallel",),
            vmem_limit_bytes=vmem_limit),
    )(x, *weights)
    return out[:B]


def saint_forward(x, fparams):
    cfg = _chip_config()
    B = x.shape[0]
    block_b = cfg["block_b"]
    if cfg["split_small_batch"] and 16 <= B <= block_b:
        # v7x: shrink the tile so the 1-D "parallel" grid has >= 2 tiles (2 TCs/chip).
        block_b = max(8, (((B + 1) // 2) + 7) // 8 * 8)
    return _saint_forward_impl(x, fparams, block_b=block_b,
                               vmem_cap=cfg["vmem_cap"], ff_bf16=cfg["ff_bf16"])


if __name__ == "__main__":
    batch = 2
    input_dim = 8          # number of tabular features (== sequence length)

    key = jax.random.PRNGKey(0)
    k_x, k_p = jax.random.split(key)
    x = jax.random.normal(k_x, (batch, input_dim), jnp.float32)
    params = init_params(k_p, input_dim)
    fparams = fuse_params(params)

    out = saint_forward(x, fparams)
    out = jax.block_until_ready(out)
    assert out.shape == (batch, 1), out.shape
    assert bool(jnp.all(jnp.isfinite(out)))
    print("KERNEL_OK")
</pallas_src>

<mosaic_0001>
module attributes {stable_mosaic.version = 11 : i64} {
  func.func @saint_kernel(%arg0: i32, %arg1: memref<2x8xf32, #tpu.memory_space<vmem>>, %arg2: memref<8x32xf32, #tpu.memory_space<vmem>>, %arg3: memref<4x32x96xbf16, #tpu.memory_space<vmem>>, %arg4: memref<4x1x96xf32, #tpu.memory_space<vmem>>, %arg5: memref<4x32x32xbf16, #tpu.memory_space<vmem>>, %arg6: memref<4x1x32xf32, #tpu.memory_space<vmem>>, %arg7: memref<4x32x2048xbf16, #tpu.memory_space<vmem>>, %arg8: memref<4x1x2048xf32, #tpu.memory_space<vmem>>, %arg9: memref<4x2048x32xbf16, #tpu.memory_space<vmem>>, %arg10: memref<4x1x32xf32, #tpu.memory_space<vmem>>, %arg11: memref<4x1x32xf32, #tpu.memory_space<vmem>>, %arg12: memref<4x1x32xf32, #tpu.memory_space<vmem>>, %arg13: memref<4x1x32xf32, #tpu.memory_space<vmem>>, %arg14: memref<4x1x32xf32, #tpu.memory_space<vmem>>, %arg15: memref<1x32xf32, #tpu.memory_space<vmem>>, %arg16: memref<1x1xf32, #tpu.memory_space<vmem>>, %arg17: memref<2x1xf32, #tpu.memory_space<vmem>>, %arg18: memref<2x8x32xf32, #tpu.memory_space<vmem>>) attributes {dimension_semantics = [#tpu.dimension_semantics<parallel>], iteration_bounds = array<i64: 1>, scalar_prefetch = 0 : i64, scratch_operands = 1 : i64, tpu.core_type = #tpu.core_type<tc>, window_params = [{transform_indices = @transform_0, window_bounds = array<i64: 2, 8>}, {pipeline_mode = #tpu.pipeline_mode<synchronous>, transform_indices = @transform_1, window_bounds = array<i64: 8, 32>}, {pipeline_mode = #tpu.pipeline_mode<synchronous>, transform_indices = @transform_2, window_bounds = array<i64: 4, 32, 96>}, {pipeline_mode = #tpu.pipeline_mode<synchronous>, transform_indices = @transform_3, window_bounds = array<i64: 4, 1, 96>}, {pipeline_mode = #tpu.pipeline_mode<synchronous>, transform_indices = @transform_4, window_bounds = array<i64: 4, 32, 32>}, {pipeline_mode = #tpu.pipeline_mode<synchronous>, transform_indices = @transform_5, window_bounds = array<i64: 4, 1, 32>}, {pipeline_mode = #tpu.pipeline_mode<synchronous>, transform_indices = @transform_6, window_bounds = array<i64: 4, 32, 2048>}, {pipeline_mode = #tpu.pipeline_mode<synchronous>, transform_indices = @transform_7, window_bounds = array<i64: 4, 1, 2048>}, {pipeline_mode = #tpu.pipeline_mode<synchronous>, transform_indices = @transform_8, window_bounds = array<i64: 4, 2048, 32>}, {pipeline_mode = #tpu.pipeline_mode<synchronous>, transform_indices = @transform_9, window_bounds = array<i64: 4, 1, 32>}, {pipeline_mode = #tpu.pipeline_mode<synchronous>, transform_indices = @transform_10, window_bounds = array<i64: 4, 1, 32>}, {pipeline_mode = #tpu.pipeline_mode<synchronous>, transform_indices = @transform_11, window_bounds = array<i64: 4, 1, 32>}, {pipeline_mode = #tpu.pipeline_mode<synchronous>, transform_indices = @transform_12, window_bounds = array<i64: 4, 1, 32>}, {pipeline_mode = #tpu.pipeline_mode<synchronous>, transform_indices = @transform_13, window_bounds = array<i64: 4, 1, 32>}, {pipeline_mode = #tpu.pipeline_mode<synchronous>, transform_indices = @transform_14, window_bounds = array<i64: 1, 32>}, {pipeline_mode = #tpu.pipeline_mode<synchronous>, transform_indices = @transform_15, window_bounds = array<i64: 1, 1>}, {transform_indices = @transform_16, window_bounds = array<i64: 2, 1>}]} {
    %c0 = arith.constant 0 : index
    %c0_0 = arith.constant 0 : index
    %0 = vector.load %arg1[%c0, %c0_0] : memref<2x8xf32, #tpu.memory_space<vmem>>, vector<2x8xf32>
    %c0_1 = arith.constant 0 : index
    %c0_2 = arith.constant 0 : index
    %1 = vector.load %arg2[%c0_1, %c0_2] : memref<8x32xf32, #tpu.memory_space<vmem>>, vector<8x32xf32>
    %2 = vector.shape_cast %0 : vector<2x8xf32> to vector<2x8x1xf32>
    %3 = vector.shape_cast %1 : vector<8x32xf32> to vector<1x8x32xf32>
    %4 = vector.broadcast %2 : vector<2x8x1xf32> to vector<2x8x32xf32>
    %5 = vector.broadcast %3 : vector<1x8x32xf32> to vector<2x8x32xf32>
    %6 = arith.mulf %4, %5 : vector<2x8x32xf32>
    %c0_3 = arith.constant 0 : index
    %c0_4 = arith.constant 0 : index
    %c0_5 = arith.constant 0 : index
    %7 = vector.load %arg18[%c0_3, %c0_4, %c0_5] : memref<2x8x32xf32, #tpu.memory_space<vmem>>, vector<2x8x32xf32>
    tpu.vector_store %arg18[%c0_3, %c0_4, %c0_5], %6 {strides = array<i32>} : memref<2x8x32xf32, #tpu.memory_space<vmem>>, vector<2x8x32xf32>,
    %c0_i32 = arith.constant 0 : i32
    %c4_i32 = arith.constant 4 : i32
    %8 = arith.addi %c0_i32, %c4_i32 : i32
    %c1_i32 = arith.constant 1 : i32
    scf.for %arg19 = %c0_i32 to %8 step %c1_i32  : i32 {
      %c0_18 = arith.constant 0 : index
      %c0_19 = arith.constant 0 : index
      %c0_20 = arith.constant 0 : index
      %22 = vector.load %arg18[%c0_18, %c0_19, %c0_20] : memref<2x8x32xf32, #tpu.memory_space<vmem>>, vector<2x8x32xf32>
      %23 = vector.shape_cast %22 : vector<2x8x32xf32> to vector<16x32xf32>
      %24 = arith.truncf %23 : vector<16x32xf32> to vector<16x32xbf16>
      %25 = arith.index_cast %arg19 : i32 to index
      %c0_21 = arith.constant 0 : index
      %c0_22 = arith.constant 0 : index
      %26 = vector.load %arg3[%25, %c0_21, %c0_22] : memref<4x32x96xbf16, #tpu.memory_space<vmem>>, vector<1x32x96xbf16>
      %27 = vector.shape_cast %26 : vector<1x32x96xbf16> to vector<32x96xbf16>
      %cst_23 = arith.constant dense<0.000000e+00> : vector<16x96xf32>
      %28 = tpu.matmul %24, %27, %cst_23 {dimension_numbers = #tpu.dot_dimension_numbers<[1], [0], [0], [1], [0, 0, 1, 1], [], []>} : vector<16x32xbf16>, vector<32x96xbf16>, vector<16x96xf32> -> vector<16x96xf32>
      %29 = arith.index_cast %arg19 : i32 to index
      %c0_24 = arith.constant 0 : index
      %c0_25 = arith.constant 0 : index
      %30 = vector.load %arg4[%29, %c0_24, %c0_25] : memref<4x1x96xf32, #tpu.memory_space<vmem>>, vector<1x1x96xf32>
      %31 = vector.shape_cast %30 : vector<1x1x96xf32> to vector<1x96xf32>
      %32 = vector.broadcast %31 : vector<1x96xf32> to vector<16x96xf32>
      %33 = arith.addf %28, %32 : vector<16x96xf32>
      %34 = vector.extract_strided_slice %33 {offsets = [0, 0], sizes = [16, 8], strides = [1, 1]} : vector<16x96xf32> to vector<16x8xf32>
      %35 = vector.shape_cast %34 : vector<16x8xf32> to vector<2x8x8xf32>
      %36 = vector.extract_strided_slice %33 {offsets = [0, 32], sizes = [16, 8], strides = [1, 1]} : vector<16x96xf32> to vector<16x8xf32>
      %37 = vector.shape_cast %36 : vector<16x8xf32> to vector<2x8x8xf32>
      %38 = vector.extract_strided_slice %33 {offsets = [0, 64], sizes = [16, 8], strides = [1, 1]} : vector<16x96xf32> to vector<16x8xf32>
      %39 = vector.shape_cast %38 : vector<16x8xf32> to vector<2x8x8xf32>
      %40 = arith.truncf %35 : vector<2x8x8xf32> to vector<2x8x8xbf16>
      %41 = arith.truncf %37 : vector<2x8x8xf32> to vector<2x8x8xbf16>
      "tpu.trace_start"() <{level = 10 : i32, message = "bqd,bkd->bqk"}> : () -> ()
      %cst_26 = arith.constant dense<0.000000e+00> : vector<2x8x8xf32>
      %42 = tpu.matmul %40, %41, %cst_26 {dimension_numbers = #tpu.dot_dimension_numbers<[2], [2], [1], [1], [0, 0, 0, 1, 1, 1], [0], [0]>} : vector<2x8x8xbf16>, vector<2x8x8xbf16>, vector<2x8x8xf32> -> vector<2x8x8xf32>
      "tpu.trace_stop"() : () -> ()
      %cst_27 = arith.constant dense<0xFF800000> : vector<2x8xf32>
      %43 = vector.multi_reduction <maximumf>, %42, %cst_27 [2] : vector<2x8x8xf32> to vector<2x8xf32>
      %44 = vector.shape_cast %43 : vector<2x8xf32> to vector<2x8x1xf32>
      %45 = vector.broadcast %44 : vector<2x8x1xf32> to vector<2x8x8xf32>
      %46 = arith.subf %42, %45 : vector<2x8x8xf32>
      %47 = math.exp %46 : vector<2x8x8xf32>
      %cst_28 = arith.constant dense<0.000000e+00> : vector<2x8xf32>
      %48 = vector.multi_reduction <add>, %47, %cst_28 [2] : vector<2x8x8xf32> to vector<2x8xf32>
      %49 = vector.shape_cast %48 : vector<2x8xf32> to vector<2x8x1xf32>
      %50 = tpu.reciprocal %49 {approx = true} : vector<2x8x1xf32> -> vector<2x8x1xf32>
      %51 = vector.broadcast %50 : vector<2x8x1xf32> to vector<2x8x8xf32>
      %52 = arith.mulf %47, %51 : vector<2x8x8xf32>
      %53 = arith.truncf %52 : vector<2x8x8xf32> to vector<2x8x8xbf16>
      %54 = arith.truncf %39 : vector<2x8x8xf32> to vector<2x8x8xbf16>
      "tpu.trace_start"() <{level = 10 : i32, message = "bqk,bkd->bqd"}> : () -> ()
      %cst_29 = arith.constant dense<0.000000e+00> : vector<2x8x8xf32>
      %55 = tpu.matmul %53, %54, %cst_29 {dimension_numbers = #tpu.dot_dimension_numbers<[2], [1], [1], [2], [0, 0, 0, 1, 1, 2], [0], [0]>} : vector<2x8x8xbf16>, vector<2x8x8xbf16>, vector<2x8x8xf32> -> vector<2x8x8xf32>
      "tpu.trace_stop"() : () -> ()
      %56 = vector.extract_strided_slice %33 {offsets = [0, 8], sizes = [16, 8], strides = [1, 1]} : vector<16x96xf32> to vector<16x8xf32>
      %57 = vector.shape_cast %56 : vector<16x8xf32> to vector<2x8x8xf32>
      %58 = vector.extract_strided_slice %33 {offsets = [0, 40], sizes = [16, 8], strides = [1, 1]} : vector<16x96xf32> to vector<16x8xf32>
      %59 = vector.shape_cast %58 : vector<16x8xf32> to vector<2x8x8xf32>
      %60 = vector.extract_strided_slice %33 {offsets = [0, 72], sizes = [16, 8], strides = [1, 1]} : vector<16x96xf32> to vector<16x8xf32>
      %61 = vector.shape_cast %60 : vector<16x8xf32> to vector<2x8x8xf32>
      %62 = arith.truncf %57 : vector<2x8x8xf32> to vector<2x8x8xbf16>
      %63 = arith.truncf %59 : vector<2x8x8xf32> to vector<2x8x8xbf16>
      "tpu.trace_start"() <{level = 10 : i32, message = "bqd,bkd->bqk"}> : () -> ()
      %cst_30 = arith.constant dense<0.000000e+00> : vector<2x8x8xf32>
      %64 = tpu.matmul %62, %63, %cst_30 {dimension_numbers = #tpu.dot_dimension_numbers<[2], [2], [1], [1], [0, 0, 0, 1, 1, 1], [0], [0]>} : vector<2x8x8xbf16>, vector<2x8x8xbf16>, vector<2x8x8xf32> -> vector<2x8x8xf32>
      "tpu.trace_stop"() : () -> ()
      %cst_31 = arith.constant dense<0xFF800000> : vector<2x8xf32>
      %65 = vector.multi_reduction <maximumf>, %64, %cst_31 [2] : vector<2x8x8xf32> to vector<2x8xf32>
      %66 = vector.shape_cast %65 : vector<2x8xf32> to vector<2x8x1xf32>
      %67 = vector.broadcast %66 : vector<2x8x1xf32> to vector<2x8x8xf32>
      %68 = arith.subf %64, %67 : vector<2x8x8xf32>
      %69 = math.exp %68 : vector<2x8x8xf32>
      %cst_32 = arith.constant dense<0.000000e+00> : vector<2x8xf32>
      %70 = vector.multi_reduction <add>, %69, %cst_32 [2] : vector<2x8x8xf32> to vector<2x8xf32>
      %71 = vector.shape_cast %70 : vector<2x8xf32> to vector<2x8x1xf32>
      %72 = tpu.reciprocal %71 {approx = true} : vector<2x8x1xf32> -> vector<2x8x1xf32>
      %73 = vector.broadcast %72 : vector<2x8x1xf32> to vector<2x8x8xf32>
      %74 = arith.mulf %69, %73 : vector<2x8x8xf32>
      %75 = arith.truncf %74 : vector<2x8x8xf32> to vector<2x8x8xbf16>
      %76 = arith.truncf %61 : vector<2x8x8xf32> to vector<2x8x8xbf16>
      "tpu.trace_start"() <{level = 10 : i32, message = "bqk,bkd->bqd"}> : () -> ()
      %cst_33 = arith.constant dense<0.000000e+00> : vector<2x8x8xf32>
      %77 = tpu.matmul %75, %76, %cst_33 {dimension_numbers = #tpu.dot_dimension_numbers<[2], [1], [1], [2], [0, 0, 0, 1, 1, 2], [0], [0]>} : vector<2x8x8xbf16>, vector<2x8x8xbf16>, vector<2x8x8xf32> -> vector<2x8x8xf32>
      "tpu.trace_stop"() : () -> ()
      %78 = vector.extract_strided_slice %33 {offsets = [0, 16], sizes = [16, 8], strides = [1, 1]} : vector<16x96xf32> to vector<16x8xf32>
      %79 = vector.shape_cast %78 : vector<16x8xf32> to vector<2x8x8xf32>
      %80 = vector.extract_strided_slice %33 {offsets = [0, 48], sizes = [16, 8], strides = [1, 1]} : vector<16x96xf32> to vector<16x8xf32>
      %81 = vector.shape_cast %80 : vector<16x8xf32> to vector<2x8x8xf32>
      %82 = vector.extract_strided_slice %33 {offsets = [0, 80], sizes = [16, 8], strides = [1, 1]} : vector<16x96xf32> to vector<16x8xf32>
      %83 = vector.shape_cast %82 : vector<16x8xf32> to vector<2x8x8xf32>
      %84 = arith.truncf %79 : vector<2x8x8xf32> to vector<2x8x8xbf16>
      %85 = arith.truncf %81 : vector<2x8x8xf32> to vector<2x8x8xbf16>
      "tpu.trace_start"() <{level = 10 : i32, message = "bqd,bkd->bqk"}> : () -> ()
      %cst_34 = arith.constant dense<0.000000e+00> : vector<2x8x8xf32>
      %86 = tpu.matmul %84, %85, %cst_34 {dimension_numbers = #tpu.dot_dimension_numbers<[2], [2], [1], [1], [0, 0, 0, 1, 1, 1], [0], [0]>} : vector<2x8x8xbf16>, vector<2x8x8xbf16>, vector<2x8x8xf32> -> vector<2x8x8xf32>
      "tpu.trace_stop"() : () -> ()
      %cst_35 = arith.constant dense<0xFF800000> : vector<2x8xf32>
      %87 = vector.multi_reduction <maximumf>, %86, %cst_35 [2] : vector<2x8x8xf32> to vector<2x8xf32>
      %88 = vector.shape_cast %87 : vector<2x8xf32> to vector<2x8x1xf32>
      %89 = vector.broadcast %88 : vector<2x8x1xf32> to vector<2x8x8xf32>
      %90 = arith.subf %86, %89 : vector<2x8x8xf32>
      %91 = math.exp %90 : vector<2x8x8xf32>
      %cst_36 = arith.constant dense<0.000000e+00> : vector<2x8xf32>
      %92 = vector.multi_reduction <add>, %91, %cst_36 [2] : vector<2x8x8xf32> to vector<2x8xf32>
      %93 = vector.shape_cast %92 : vector<2x8xf32> to vector<2x8x1xf32>
      %94 = tpu.reciprocal %93 {approx = true} : vector<2x8x1xf32> -> vector<2x8x1xf32>
      %95 = vector.broadcast %94 : vector<2x8x1xf32> to vector<2x8x8xf32>
      %96 = arith.mulf %91, %95 : vector<2x8x8xf32>
      %97 = arith.truncf %96 : vector<2x8x8xf32> to vector<2x8x8xbf16>
      %98 = arith.truncf %83 : vector<2x8x8xf32> to vector<2x8x8xbf16>
      "tpu.trace_start"() <{level = 10 : i32, message = "bqk,bkd->bqd"}> : () -> ()
      %cst_37 = arith.constant dense<0.000000e+00> : vector<2x8x8xf32>
      %99 = tpu.matmul %97, %98, %cst_37 {dimension_numbers = #tpu.dot_dimension_numbers<[2], [1], [1], [2], [0, 0, 0, 1, 1, 2], [0], [0]>} : vector<2x8x8xbf16>, vector<2x8x8xbf16>, vector<2x8x8xf32> -> vector<2x8x8xf32>
      "tpu.trace_stop"() : () -> ()
      %100 = vector.extract_strided_slice %33 {offsets = [0, 24], sizes = [16, 8], strides = [1, 1]} : vector<16x96xf32> to vector<16x8xf32>
      %101 = vector.shape_cast %100 : vector<16x8xf32> to vector<2x8x8xf32>
      %102 = vector.extract_strided_slice %33 {offsets = [0, 56], sizes = [16, 8], strides = [1, 1]} : vector<16x96xf32> to vector<16x8xf32>
      %103 = vector.shape_cast %102 : vector<16x8xf32> to vector<2x8x8xf32>
      %104 = vector.extract_strided_slice %33 {offsets = [0, 88], sizes = [16, 8], strides = [1, 1]} : vector<16x96xf32> to vector<16x8xf32>
      %105 = vector.shape_cast %104 : vector<16x8xf32> to vector<2x8x8xf32>
      %106 = arith.truncf %101 : vector<2x8x8xf32> to vector<2x8x8xbf16>
      %107 = arith.truncf %103 : vector<2x8x8xf32> to vector<2x8x8xbf16>
      "tpu.trace_start"() <{level = 10 : i32, message = "bqd,bkd->bqk"}> : () -> ()
      %cst_38 = arith.constant dense<0.000000e+00> : vector<2x8x8xf32>
      %108 = tpu.matmul %106, %107, %cst_38 {dimension_numbers = #tpu.dot_dimension_numbers<[2], [2], [1], [1], [0, 0, 0, 1, 1, 1], [0], [0]>} : vector<2x8x8xbf16>, vector<2x8x8xbf16>, vector<2x8x8xf32> -> vector<2x8x8xf32>
      "tpu.trace_stop"() : () -> ()
      %cst_39 = arith.constant dense<0xFF800000> : vector<2x8xf32>
      %109 = vector.multi_reduction <maximumf>, %108, %cst_39 [2] : vector<2x8x8xf32> to vector<2x8xf32>
      %110 = vector.shape_cast %109 : vector<2x8xf32> to vector<2x8x1xf32>
      %111 = vector.broadcast %110 : vector<2x8x1xf32> to vector<2x8x8xf32>
      %112 = arith.subf %108, %111 : vector<2x8x8xf32>
      %113 = math.exp %112 : vector<2x8x8xf32>
      %cst_40 = arith.constant dense<0.000000e+00> : vector<2x8xf32>
      %114 = vector.multi_reduction <add>, %113, %cst_40 [2] : vector<2x8x8xf32> to vector<2x8xf32>
      %115 = vector.shape_cast %114 : vector<2x8xf32> to vector<2x8x1xf32>
      %116 = tpu.reciprocal %115 {approx = true} : vector<2x8x1xf32> -> vector<2x8x1xf32>
      %117 = vector.broadcast %116 : vector<2x8x1xf32> to vector<2x8x8xf32>
      %118 = arith.mulf %113, %117 : vector<2x8x8xf32>
      %119 = arith.truncf %118 : vector<2x8x8xf32> to vector<2x8x8xbf16>
      %120 = arith.truncf %105 : vector<2x8x8xf32> to vector<2x8x8xbf16>
      "tpu.trace_start"() <{level = 10 : i32, message = "bqk,bkd->bqd"}> : () -> ()
      %cst_41 = arith.constant dense<0.000000e+00> : vector<2x8x8xf32>
      %121 = tpu.matmul %119, %120, %cst_41 {dimension_numbers = #tpu.dot_dimension_numbers<[2], [1], [1], [2], [0, 0, 0, 1, 1, 2], [0], [0]>} : vector<2x8x8xbf16>, vector<2x8x8xbf16>, vector<2x8x8xf32> -> vector<2x8x8xf32>
      "tpu.trace_stop"() : () -> ()
      %122 = tpu.concatenate %55, %77, %99, %121 in 2 : vector<2x8x8xf32>, vector<2x8x8xf32>, vector<2x8x8xf32>, vector<2x8x8xf32> -> vector<2x8x32xf32>
      %123 = vector.shape_cast %122 : vector<2x8x32xf32> to vector<16x32xf32>
      %124 = arith.truncf %123 : vector<16x32xf32> to vector<16x32xbf16>
      %125 = arith.index_cast %arg19 : i32 to index
      %c0_42 = arith.constant 0 : index
      %c0_43 = arith.constant 0 : index
      %126 = vector.load %arg5[%125, %c0_42, %c0_43] : memref<4x32x32xbf16, #tpu.memory_space<vmem>>, vector<1x32x32xbf16>
      %127 = vector.shape_cast %126 : vector<1x32x32xbf16> to vector<32x32xbf16>
      %cst_44 = arith.constant dense<0.000000e+00> : vector<16x32xf32>
      %128 = tpu.matmul %124, %127, %cst_44 {dimension_numbers = #tpu.dot_dimension_numbers<[1], [0], [0], [1], [0, 0, 1, 1], [], []>} : vector<16x32xbf16>, vector<32x32xbf16>, vector<16x32xf32> -> vector<16x32xf32>
      %129 = arith.index_cast %arg19 : i32 to index
      %c0_45 = arith.constant 0 : index
      %c0_46 = arith.constant 0 : index
      %130 = vector.load %arg6[%129, %c0_45, %c0_46] : memref<4x1x32xf32, #tpu.memory_space<vmem>>, vector<1x1x32xf32>
      %131 = vector.shape_cast %130 : vector<1x1x32xf32> to vector<1x32xf32>
      %132 = vector.broadcast %131 : vector<1x32xf32> to vector<16x32xf32>
      %133 = arith.addf %128, %132 : vector<16x32xf32>
      %134 = vector.shape_cast %133 : vector<16x32xf32> to vector<2x8x32xf32>
      %135 = arith.addf %22, %134 : vector<2x8x32xf32>
      %136 = arith.index_cast %arg19 : i32 to index
      %c0_47 = arith.constant 0 : index
      %c0_48 = arith.constant 0 : index
      %137 = vector.load %arg11[%136, %c0_47, %c0_48] : memref<4x1x32xf32, #tpu.memory_space<vmem>>, vector<1x1x32xf32>
      %138 = vector.shape_cast %137 : vector<1x1x32xf32> to vector<1x32xf32>
      %139 = arith.index_cast %arg19 : i32 to index
      %c0_49 = arith.constant 0 : index
      %c0_50 = arith.constant 0 : index
      %140 = vector.load %arg12[%139, %c0_49, %c0_50] : memref<4x1x32xf32, #tpu.memory_space<vmem>>, vector<1x1x32xf32>
      %141 = vector.shape_cast %140 : vector<1x1x32xf32> to vector<1x32xf32>
      %cst_51 = arith.constant dense<0.000000e+00> : vector<2x8xf32>
      %142 = vector.multi_reduction <add>, %135, %cst_51 [2] : vector<2x8x32xf32> to vector<2x8xf32>
      %143 = vector.shape_cast %142 : vector<2x8xf32> to vector<2x8x1xf32>
      %cst_52 = arith.constant 3.200000e+01 : f32
      %144 = vector.broadcast %cst_52 : f32 to vector<2x8x1xf32>
      %145 = arith.divf %143, %144 : vector<2x8x1xf32>
      %146 = arith.mulf %135, %135 : vector<2x8x32xf32>
      %cst_53 = arith.constant dense<0.000000e+00> : vector<2x8xf32>
      %147 = vector.multi_reduction <add>, %146, %cst_53 [2] : vector<2x8x32xf32> to vector<2x8xf32>
      %148 = vector.shape_cast %147 : vector<2x8xf32> to vector<2x8x1xf32>
      %cst_54 = arith.constant 3.200000e+01 : f32
      %149 = vector.broadcast %cst_54 : f32 to vector<2x8x1xf32>
      %150 = arith.divf %148, %149 : vector<2x8x1xf32>
      %151 = arith.mulf %145, %145 : vector<2x8x1xf32>
      %152 = arith.subf %150, %151 : vector<2x8x1xf32>
      %cst_55 = arith.constant 0.000000e+00 : f32
      %153 = vector.broadcast %cst_55 : f32 to vector<2x8x1xf32>
      %154 = arith.maximumf %152, %153 : vector<2x8x1xf32>
      %155 = vector.broadcast %145 : vector<2x8x1xf32> to vector<2x8x32xf32>
      %156 = arith.subf %135, %155 : vector<2x8x32xf32>
      %cst_56 = arith.constant 9.99999974E-6 : f32
      %157 = vector.broadcast %cst_56 : f32 to vector<2x8x1xf32>
      %158 = arith.addf %154, %157 : vector<2x8x1xf32>
      %159 = math.rsqrt %158 : vector<2x8x1xf32>
      %160 = vector.broadcast %159 : vector<2x8x1xf32> to vector<2x8x32xf32>
      %161 = arith.mulf %156, %160 : vector<2x8x32xf32>
      %162 = vector.shape_cast %138 : vector<1x32xf32> to vector<1x1x32xf32>
      %163 = vector.broadcast %162 : vector<1x1x32xf32> to vector<2x8x32xf32>
      %164 = arith.mulf %161, %163 : vector<2x8x32xf32>
      %165 = vector.shape_cast %141 : vector<1x32xf32> to vector<1x1x32xf32>
      %166 = vector.broadcast %165 : vector<1x1x32xf32> to vector<2x8x32xf32>
      %167 = arith.addf %164, %166 : vector<2x8x32xf32>
      %168 = vector.shape_cast %167 : vector<2x8x32xf32> to vector<16x32xf32>
      %169 = arith.truncf %168 : vector<16x32xf32> to vector<16x32xbf16>
      %170 = arith.index_cast %arg19 : i32 to index
      %c0_57 = arith.constant 0 : index
      %c0_58 = arith.constant 0 : index
      %171 = vector.load %arg7[%170, %c0_57, %c0_58] : memref<4x32x2048xbf16, #tpu.memory_space<vmem>>, vector<1x32x2048xbf16>
      %172 = vector.shape_cast %171 : vector<1x32x2048xbf16> to vector<32x2048xbf16>
      %cst_59 = arith.constant dense<0.000000e+00> : vector<16x2048xf32>
      %173 = tpu.matmul %169, %172, %cst_59 {dimension_numbers = #tpu.dot_dimension_numbers<[1], [0], [0], [1], [0, 0, 1, 1], [], []>} : vector<16x32xbf16>, vector<32x2048xbf16>, vector<16x2048xf32> -> vector<16x2048xf32>
      %174 = arith.truncf %173 : vector<16x2048xf32> to vector<16x2048xbf16>
      %175 = arith.index_cast %arg19 : i32 to index
      %c0_60 = arith.constant 0 : index
      %c0_61 = arith.constant 0 : index
      %176 = vector.load %arg8[%175, %c0_60, %c0_61] : memref<4x1x2048xf32, #tpu.memory_space<vmem>>, vector<1x1x2048xf32>
      %177 = vector.shape_cast %176 : vector<1x1x2048xf32> to vector<1x2048xf32>
      %178 = arith.truncf %177 : vector<1x2048xf32> to vector<1x2048xbf16>
      %179 = vector.broadcast %178 : vector<1x2048xbf16> to vector<16x2048xbf16>
      %180 = arith.addf %174, %179 : vector<16x2048xbf16>
      %cst_62 = arith.constant 0.000000e+00 : bf16
      %181 = vector.broadcast %cst_62 : bf16 to vector<16x2048xbf16>
      %182 = arith.maximumf %180, %181 : vector<16x2048xbf16>
      %183 = arith.index_cast %arg19 : i32 to index
      %c0_63 = arith.constant 0 : index
      %c0_64 = arith.constant 0 : index
      %184 = vector.load %arg9[%183, %c0_63, %c0_64] : memref<4x2048x32xbf16, #tpu.memory_space<vmem>>, vector<1x2048x32xbf16>
      %185 = vector.shape_cast %184 : vector<1x2048x32xbf16> to vector<2048x32xbf16>
      %cst_65 = arith.constant dense<0.000000e+00> : vector<16x32xf32>
      %186 = tpu.matmul %182, %185, %cst_65 {dimension_numbers = #tpu.dot_dimension_numbers<[1], [0], [0], [1], [0, 0, 1, 1], [], []>} : vector<16x2048xbf16>, vector<2048x32xbf16>, vector<16x32xf32> -> vector<16x32xf32>
      %187 = arith.index_cast %arg19 : i32 to index
      %c0_66 = arith.constant 0 : index
      %c0_67 = arith.constant 0 : index
      %188 = vector.load %arg10[%187, %c0_66, %c0_67] : memref<4x1x32xf32, #tpu.memory_space<vmem>>, vector<1x1x32xf32>
      %189 = vector.shape_cast %188 : vector<1x1x32xf32> to vector<1x32xf32>
      %190 = vector.broadcast %189 : vector<1x32xf32> to vector<16x32xf32>
      %191 = arith.addf %186, %190 : vector<16x32xf32>
      %192 = vector.shape_cast %191 : vector<16x32xf32> to vector<2x8x32xf32>
      %193 = arith.addf %167, %192 : vector<2x8x32xf32>
      %194 = arith.index_cast %arg19 : i32 to index
      %c0_68 = arith.constant 0 : index
      %c0_69 = arith.constant 0 : index
      %195 = vector.load %arg13[%194, %c0_68, %c0_69] : memref<4x1x32xf32, #tpu.memory_space<vmem>>, vector<1x1x32xf32>
      %196 = vector.shape_cast %195 : vector<1x1x32xf32> to vector<1x32xf32>
      %197 = arith.index_cast %arg19 : i32 to index
      %c0_70 = arith.constant 0 : index
      %c0_71 = arith.constant 0 : index
      %198 = vector.load %arg14[%197, %c0_70, %c0_71] : memref<4x1x32xf32, #tpu.memory_space<vmem>>, vector<1x1x32xf32>
      %199 = vector.shape_cast %198 : vector<1x1x32xf32> to vector<1x32xf32>
      %cst_72 = arith.constant dense<0.000000e+00> : vector<2x8xf32>
      %200 = vector.multi_reduction <add>, %193, %cst_72 [2] : vector<2x8x32xf32> to vector<2x8xf32>
      %201 = vector.shape_cast %200 : vector<2x8xf32> to vector<2x8x1xf32>
      %cst_73 = arith.constant 3.200000e+01 : f32
      %202 = vector.broadcast %cst_73 : f32 to vector<2x8x1xf32>
      %203 = arith.divf %201, %202 : vector<2x8x1xf32>
      %204 = arith.mulf %193, %193 : vector<2x8x32xf32>
      %cst_74 = arith.constant dense<0.000000e+00> : vector<2x8xf32>
      %205 = vector.multi_reduction <add>, %204, %cst_74 [2] : vector<2x8x32xf32> to vector<2x8xf32>
      %206 = vector.shape_cast %205 : vector<2x8xf32> to vector<2x8x1xf32>
      %cst_75 = arith.constant 3.200000e+01 : f32
      %207 = vector.broadcast %cst_75 : f32 to vector<2x8x1xf32>
      %208 = arith.divf %206, %207 : vector<2x8x1xf32>
      %209 = arith.mulf %203, %203 : vector<2x8x1xf32>
      %210 = arith.subf %208, %209 : vector<2x8x1xf32>
      %cst_76 = arith.constant 0.000000e+00 : f32
      %211 = vector.broadcast %cst_76 : f32 to vector<2x8x1xf32>
      %212 = arith.maximumf %210, %211 : vector<2x8x1xf32>
      %213 = vector.broadcast %203 : vector<2x8x1xf32> to vector<2x8x32xf32>
      %214 = arith.subf %193, %213 : vector<2x8x32xf32>
      %cst_77 = arith.constant 9.99999974E-6 : f32
      %215 = vector.broadcast %cst_77 : f32 to vector<2x8x1xf32>
      %216 = arith.addf %212, %215 : vector<2x8x1xf32>
      %217 = math.rsqrt %216 : vector<2x8x1xf32>
      %218 = vector.broadcast %217 : vector<2x8x1xf32> to vector<2x8x32xf32>
      %219 = arith.mulf %214, %218 : vector<2x8x32xf32>
      %220 = vector.shape_cast %196 : vector<1x32xf32> to vector<1x1x32xf32>
      %221 = vector.broadcast %220 : vector<1x1x32xf32> to vector<2x8x32xf32>
      %222 = arith.mulf %219, %221 : vector<2x8x32xf32>
      %223 = vector.shape_cast %199 : vector<1x32xf32> to vector<1x1x32xf32>
      %224 = vector.broadcast %223 : vector<1x1x32xf32> to vector<2x8x32xf32>
      %225 = arith.addf %222, %224 : vector<2x8x32xf32>
      %c0_78 = arith.constant 0 : index
      %c0_79 = arith.constant 0 : index
      %c0_80 = arith.constant 0 : index
      %226 = vector.load %arg18[%c0_78, %c0_79, %c0_80] : memref<2x8x32xf32, #tpu.memory_space<vmem>>, vector<2x8x32xf32>
      tpu.vector_store %arg18[%c0_78, %c0_79, %c0_80], %225 {strides = array<i32>} : memref<2x8x32xf32, #tpu.memory_space<vmem>>, vector<2x8x32xf32>,
    }
    %c4_i32_6 = arith.constant 4 : i32
    %c0_7 = arith.constant 0 : index
    %c0_8 = arith.constant 0 : index
    %c0_9 = arith.constant 0 : index
    %9 = vector.load %arg18[%c0_7, %c0_8, %c0_9] : memref<2x8x32xf32, #tpu.memory_space<vmem>>, vector<2x8x32xf32>
    %cst = arith.constant dense<0.000000e+00> : vector<2x32xf32>
    %10 = vector.multi_reduction <add>, %9, %cst [1] : vector<2x8x32xf32> to vector<2x32xf32>
    %cst_10 = arith.constant 8.000000e+00 : f32
    %11 = vector.broadcast %cst_10 : f32 to vector<2x32xf32>
    %12 = arith.divf %10, %11 : vector<2x32xf32>
    %c0_11 = arith.constant 0 : index
    %c0_12 = arith.constant 0 : index
    %13 = vector.load %arg15[%c0_11, %c0_12] : memref<1x32xf32, #tpu.memory_space<vmem>>, vector<1x32xf32>
    %14 = vector.broadcast %13 : vector<1x32xf32> to vector<2x32xf32>
    %15 = arith.mulf %12, %14 : vector<2x32xf32>
    %cst_13 = arith.constant dense<0.000000e+00> : vector<2xf32>
    %16 = vector.multi_reduction <add>, %15, %cst_13 [1] : vector<2x32xf32> to vector<2xf32>
    %17 = vector.shape_cast %16 : vector<2xf32> to vector<2x1xf32>
    %c0_14 = arith.constant 0 : index
    %c0_15 = arith.constant 0 : index
    %18 = vector.load %arg16[%c0_14, %c0_15] : memref<1x1xf32, #tpu.memory_space<vmem>>, vector<1x1xf32>
    %19 = vector.broadcast %18 : vector<1x1xf32> to vector<2x1xf32>
    %20 = arith.addf %17, %19 : vector<2x1xf32>
    %c0_16 = arith.constant 0 : index
    %c0_17 = arith.constant 0 : index
    %21 = vector.load %arg17[%c0_16, %c0_17] : memref<2x1xf32, #tpu.memory_space<vmem>>, vector<2x1xf32>
    tpu.vector_store %arg17[%c0_16, %c0_17], %20 {strides = array<i32>} : memref<2x1xf32, #tpu.memory_space<vmem>>, vector<2x1xf32>,
    return
  }
  func.func @transform_0(%arg0: i32) -> (i32, i32) {
    %c0_i32 = arith.constant 0 : i32
    %c0_i32_0 = arith.constant 0 : i32
    return %arg0, %c0_i32 : i32, i32
  }
  func.func @transform_1(%arg0: i32) -> (i32, i32) {
    %c0_i32 = arith.constant 0 : i32
    %c0_i32_0 = arith.constant 0 : i32
    %c0_i32_1 = arith.constant 0 : i32
    return %c0_i32, %c0_i32_0 : i32, i32
  }
  func.func @transform_2(%arg0: i32) -> (i32, i32, i32) {
    %c0_i32 = arith.constant 0 : i32
    %c0_i32_0 = arith.constant 0 : i32
    %c0_i32_1 = arith.constant 0 : i32
    %c0_i32_2 = arith.constant 0 : i32
    return %c0_i32, %c0_i32_0, %c0_i32_1 : i32, i32, i32
  }
  func.func @transform_3(%arg0: i32) -> (i32, i32, i32) {
    %c0_i32 = arith.constant 0 : i32
    %c0_i32_0 = arith.constant 0 : i32
    %c0_i32_1 = arith.constant 0 : i32
    %c0_i32_2 = arith.constant 0 : i32
    return %c0_i32, %c0_i32_0, %c0_i32_1 : i32, i32, i32
  }
  func.func @transform_4(%arg0: i32) -> (i32, i32, i32) {
    %c0_i32 = arith.constant 0 : i32
    %c0_i32_0 = arith.constant 0 : i32
    %c0_i32_1 = arith.constant 0 : i32
    %c0_i32_2 = arith.constant 0 : i32
    return %c0_i32, %c0_i32_0, %c0_i32_1 : i32, i32, i32
  }
  func.func @transform_5(%arg0: i32) -> (i32, i32, i32) {
    %c0_i32 = arith.constant 0 : i32
    %c0_i32_0 = arith.constant 0 : i32
    %c0_i32_1 = arith.constant 0 : i32
    %c0_i32_2 = arith.constant 0 : i32
    return %c0_i32, %c0_i32_0, %c0_i32_1 : i32, i32, i32
  }
  func.func @transform_6(%arg0: i32) -> (i32, i32, i32) {
    %c0_i32 = arith.constant 0 : i32
    %c0_i32_0 = arith.constant 0 : i32
    %c0_i32_1 = arith.constant 0 : i32
    %c0_i32_2 = arith.constant 0 : i32
    return %c0_i32, %c0_i32_0, %c0_i32_1 : i32, i32, i32
  }
  func.func @transform_7(%arg0: i32) -> (i32, i32, i32) {
    %c0_i32 = arith.constant 0 : i32
    %c0_i32_0 = arith.constant 0 : i32
    %c0_i32_1 = arith.constant 0 : i32
    %c0_i32_2 = arith.constant 0 : i32
    return %c0_i32, %c0_i32_0, %c0_i32_1 : i32, i32, i32
  }
  func.func @transform_8(%arg0: i32) -> (i32, i32, i32) {
    %c0_i32 = arith.constant 0 : i32
    %c0_i32_0 = arith.constant 0 : i32
    %c0_i32_1 = arith.constant 0 : i32
    %c0_i32_2 = arith.constant 0 : i32
    return %c0_i32, %c0_i32_0, %c0_i32_1 : i32, i32, i32
  }
  func.func @transform_9(%arg0: i32) -> (i32, i32, i32) {
    %c0_i32 = arith.constant 0 : i32
    %c0_i32_0 = arith.constant 0 : i32
    %c0_i32_1 = arith.constant 0 : i32
    %c0_i32_2 = arith.constant 0 : i32
    return %c0_i32, %c0_i32_0, %c0_i32_1 : i32, i32, i32
  }
  func.func @transform_10(%arg0: i32) -> (i32, i32, i32) {
    %c0_i32 = arith.constant 0 : i32
    %c0_i32_0 = arith.constant 0 : i32
    %c0_i32_1 = arith.constant 0 : i32
    %c0_i32_2 = arith.constant 0 : i32
    return %c0_i32, %c0_i32_0, %c0_i32_1 : i32, i32, i32
  }
  func.func @transform_11(%arg0: i32) -> (i32, i32, i32) {
    %c0_i32 = arith.constant 0 : i32
    %c0_i32_0 = arith.constant 0 : i32
    %c0_i32_1 = arith.constant 0 : i32
    %c0_i32_2 = arith.constant 0 : i32
    return %c0_i32, %c0_i32_0, %c0_i32_1 : i32, i32, i32
  }
  func.func @transform_12(%arg0: i32) -> (i32, i32, i32) {
    %c0_i32 = arith.constant 0 : i32
    %c0_i32_0 = arith.constant 0 : i32
    %c0_i32_1 = arith.constant 0 : i32
    %c0_i32_2 = arith.constant 0 : i32
    return %c0_i32, %c0_i32_0, %c0_i32_1 : i32, i32, i32
  }
  func.func @transform_13(%arg0: i32) -> (i32, i32, i32) {
    %c0_i32 = arith.constant 0 : i32
    %c0_i32_0 = arith.constant 0 : i32
    %c0_i32_1 = arith.constant 0 : i32
    %c0_i32_2 = arith.constant 0 : i32
    return %c0_i32, %c0_i32_0, %c0_i32_1 : i32, i32, i32
  }
  func.func @transform_14(%arg0: i32) -> (i32, i32) {
    %c0_i32 = arith.constant 0 : i32
    %c0_i32_0 = arith.constant 0 : i32
    %c0_i32_1 = arith.constant 0 : i32
    return %c0_i32, %c0_i32_0 : i32, i32
  }
  func.func @transform_15(%arg0: i32) -> (i32, i32) {
    %c0_i32 = arith.constant 0 : i32
    %c0_i32_0 = arith.constant 0 : i32
    %c0_i32_1 = arith.constant 0 : i32
    return %c0_i32, %c0_i32_0 : i32, i32
  }
  func.func @transform_16(%arg0: i32) -> (i32, i32) {
    %c0_i32 = arith.constant 0 : i32
    %c0_i32_0 = arith.constant 0 : i32
    return %arg0, %c0_i32 : i32, i32
  }
}

</mosaic_0001>

<llo_original>
// kernel: _saint_forward_impl.1
$region0: #{_saint_forward_impl.1}
  #allocation0 [shape = 'u32[]', space=smem, size = 0x4, offset = 0x4, fixed_abs, tag = 'smem constant byte address 0x4 - core index']
  #allocation1 [shape = 'u32[144,128]{1,0:T(1,128)}', space=vmem, size = 0x12000, scoped, tag = 'internal scratch']
  #allocation2 [shape = 'f32[2,8,32]{2,1,0:T(8,128)}', space=vmem, size = 0x2000, scoped, tag = 'scratch operand']
  #allocation3 [shape = 'f32[1,1]{1,0:T(1,128)S(1)}', space=vmem, size = 0x200, scoped, tag = 'scoped memory for _saint_forward_impl.1']
  %s0 = inlined_call_operand.vmem [shape: f32[2,8], index: 0, kind: input, shape index: {}]
  %s1 = inlined_call_operand.vmem [shape: f32[8,32], index: 1, kind: input, shape index: {}]
  %s2 = inlined_call_operand.vmem [shape: bf16[4,32,96], index: 2, kind: input, shape index: {}]
  %s3 = inlined_call_operand.vmem [shape: f32[4,1,96], index: 3, kind: input, shape index: {}]
  %s4 = inlined_call_operand.vmem [shape: bf16[4,32,32], index: 4, kind: input, shape index: {}]
  %s5 = inlined_call_operand.vmem [shape: f32[4,1,32], index: 5, kind: input, shape index: {}]
  %s6 = inlined_call_operand.vmem [shape: bf16[4,32,2048], index: 6, kind: input, shape index: {}]
  %s7 = inlined_call_operand.vmem [shape: f32[4,1,2048], index: 7, kind: input, shape index: {}]
  %s8 = inlined_call_operand.vmem [shape: bf16[4,2048,32], index: 8, kind: input, shape index: {}]
  %s9 = inlined_call_operand.vmem [shape: f32[4,1,32], index: 9, kind: input, shape index: {}]
  %s10 = inlined_call_operand.vmem [shape: f32[4,1,32], index: 10, kind: input, shape index: {}]
  %s11 = inlined_call_operand.vmem [shape: f32[4,1,32], index: 11, kind: input, shape index: {}]
  %s12 = inlined_call_operand.vmem [shape: f32[4,1,32], index: 12, kind: input, shape index: {}]
  %s13 = inlined_call_operand.vmem [shape: f32[4,1,32], index: 13, kind: input, shape index: {}]
  %s14 = inlined_call_operand.vmem [shape: f32[1,32], index: 14, kind: input, shape index: {}]
  %s15 = inlined_call_operand.<no memory space> [shape: f32[1,1], index: 15, kind: input, shape index: {}]
  %s16 = inlined_call_operand.vmem [shape: f32[2,1], index: 16, kind: output, shape index: {}]
  %s17 = sld [smem:[#allocation0]]
  $region81: #{_saint_forward_impl.1} parent=0
    _
  %s19 = ssub.s32 1, %s17
  %s20 = scalar_select 0, %s19, %s17
  %v21 = vstv %s15
  %22 = vst [vmem:[#allocation3] sm:$0x1] %v21
  // Predicated region
  $region2: #{_saint_forward_impl.1} parent=0 // pred_check
    _
  $region3: #{_saint_forward_impl.1} parent=0 // pred_check_branch
    %24 = sbr.rel (0) target = $region5
  $region4: #{_saint_forward_impl.1} parent=0 // pred_region
    _
  $region5: #{_saint_forward_impl.1} parent=0 // pred_fallthru
    _
  // Predicated region
  $region6: #{_saint_forward_impl.1} parent=0 // pred_check
    _
  $region7: #{_saint_forward_impl.1} parent=0 // pred_check_branch
    %26 = sbr.rel (0) target = $region9
  $region8: #{_saint_forward_impl.1} parent=0 // pred_region
    _
  $region9: #{_saint_forward_impl.1} parent=0 // pred_fallthru
    _
  // Predicated region
  $region10: #{_saint_forward_impl.1} parent=0 // pred_check
    _
  $region11: #{_saint_forward_impl.1} parent=0 // pred_check_branch
    %28 = sbr.rel (0) target = $region13
  $region12: #{_saint_forward_impl.1} parent=0 // pred_region
    _
  $region13: #{_saint_forward_impl.1} parent=0 // pred_fallthru
    _
  // Predicated region
  $region14: #{_saint_forward_impl.1} parent=0 // pred_check
    _
  $region15: #{_saint_forward_impl.1} parent=0 // pred_check_branch
    %30 = sbr.rel (0) target = $region17
  $region16: #{_saint_forward_impl.1} parent=0 // pred_region
    _
  $region17: #{_saint_forward_impl.1} parent=0 // pred_fallthru
    _
  // Predicated region
  $region18: #{_saint_forward_impl.1} parent=0 // pred_check
    _
  $region19: #{_saint_forward_impl.1} parent=0 // pred_check_branch
    %32 = sbr.rel (0) target = $region21
  $region20: #{_saint_forward_impl.1} parent=0 // pred_region
    _
  $region21: #{_saint_forward_impl.1} parent=0 // pred_fallthru
    _
  // Predicated region
  $region22: #{_saint_forward_impl.1} parent=0 // pred_check
    _
  $region23: #{_saint_forward_impl.1} parent=0 // pred_check_branch
    %34 = sbr.rel (0) target = $region25
  $region24: #{_saint_forward_impl.1} parent=0 // pred_region
    _
  $region25: #{_saint_forward_impl.1} parent=0 // pred_fallthru
    _
  // Predicated region
  $region26: #{_saint_forward_impl.1} parent=0 // pred_check
    _
  $region27: #{_saint_forward_impl.1} parent=0 // pred_check_branch
    %36 = sbr.rel (0) target = $region29
  $region28: #{_saint_forward_impl.1} parent=0 // pred_region
    _
  $region29: #{_saint_forward_impl.1} parent=0 // pred_fallthru
    _
  // Predicated region
  $region30: #{_saint_forward_impl.1} parent=0 // pred_check
    _
  $region31: #{_saint_forward_impl.1} parent=0 // pred_check_branch
    %38 = sbr.rel (0) target = $region33
  $region32: #{_saint_forward_impl.1} parent=0 // pred_region
    _
  $region33: #{_saint_forward_impl.1} parent=0 // pred_fallthru
    _
  // Predicated region
  $region34: #{_saint_forward_impl.1} parent=0 // pred_check
    _
  $region35: #{_saint_forward_impl.1} parent=0 // pred_check_branch
    %40 = sbr.rel (0) target = $region37
  $region36: #{_saint_forward_impl.1} parent=0 // pred_region
    _
  $region37: #{_saint_forward_impl.1} parent=0 // pred_fallthru
    _
  // Predicated region
  $region38: #{_saint_forward_impl.1} parent=0 // pred_check
    _
  $region39: #{_saint_forward_impl.1} parent=0 // pred_check_branch
    %42 = sbr.rel (0) target = $region41
  $region40: #{_saint_forward_impl.1} parent=0 // pred_region
    _
  $region41: #{_saint_forward_impl.1} parent=0 // pred_fallthru
    _
  // Predicated region
  $region42: #{_saint_forward_impl.1} parent=0 // pred_check
    _
  $region43: #{_saint_forward_impl.1} parent=0 // pred_check_branch
    %44 = sbr.rel (0) target = $region45
  $region44: #{_saint_forward_impl.1} parent=0 // pred_region
    _
  $region45: #{_saint_forward_impl.1} parent=0 // pred_fallthru
    _
  // Predicated region
  $region46: #{_saint_forward_impl.1} parent=0 // pred_check
    _
  $region47: #{_saint_forward_impl.1} parent=0 // pred_check_branch
    %46 = sbr.rel (0) target = $region49
  $region48: #{_saint_forward_impl.1} parent=0 // pred_region
    _
  $region49: #{_saint_forward_impl.1} parent=0 // pred_fallthru
    _
  // Predicated region
  $region50: #{_saint_forward_impl.1} parent=0 // pred_check
    _
  $region51: #{_saint_forward_impl.1} parent=0 // pred_check_branch
    %48 = sbr.rel (0) target = $region53
  $region52: #{_saint_forward_impl.1} parent=0 // pred_region
    _
  $region53: #{_saint_forward_impl.1} parent=0 // pred_fallthru
    _
  // Predicated region
  $region54: #{_saint_forward_impl.1} parent=0 // pred_check
    _
  $region55: #{_saint_forward_impl.1} parent=0 // pred_check_branch
    %50 = sbr.rel (0) target = $region57
  $region56: #{_saint_forward_impl.1} parent=0 // pred_region
    _
  $region57: #{_saint_forward_impl.1} parent=0 // pred_fallthru
    _
  // Predicated region
  $region58: #{_saint_forward_impl.1} parent=0 // pred_check
    _
  $region59: #{_saint_forward_impl.1} parent=0 // pred_check_branch
    %52 = sbr.rel (0) target = $region61
  $region60: #{_saint_forward_impl.1} parent=0 // pred_region
    _
  $region61: #{_saint_forward_impl.1} parent=0 // pred_fallthru
    _
  // Predicated region
  $region62: #{_saint_forward_impl.1} parent=0 // pred_check
    _
  $region63: #{_saint_forward_impl.1} parent=0 // pred_check_branch
    %54 = sbr.rel (0) target = $region65
  $region64: #{_saint_forward_impl.1} parent=0 // pred_region
    _
  $region65: #{_saint_forward_impl.1} parent=0 // pred_fallthru
    _
  %v56 = vld [vmem:[%s0] sm:$0x3]
  %v57 = vld [vmem:[%s1] sm:$0xff]
  %v58 = vlaneseq
  %v59 = vshrl.u32 %v58, 7
  %v60 = vsub.s32 0, %v59
  %v61 = vrot.slane %v56, %v60
  %63 = vbcast.lane.b32.xlu0 %v61, 256
  %v64 = vpop.permute.xlu0 %63
  %v65 = vlaneseq
  %v66 = vshrl.u32 %v65, 7
  %v67 = vsub.s32 1, %v66
  %v68 = vrot.slane %v56, %v67
  %70 = vbcast.lane.b32.xlu0 %v68, 256
  %v71 = vpop.permute.xlu0 %70
  %v72 = vmul.f32 %v64, %v57
  %v73 = vmul.f32 %v71, %v57
  %vm74 = vcmask 261120
  %75 = vst.msk [vmem:[#allocation2] sm:$0xff] %vm74, %v72
  %76 = vst.msk [vmem:[#allocation2 + $0x8] sm:$0xff] %vm74, %v73
  loop: start=0, step=1, limit=4
  $region66: #{_saint_forward_impl.1} parent=0 // loop_pre_header
    _
  $region67: #{_saint_forward_impl.1} parent=0 // loop_header
    %s78 = sphi 0, %s82
    %p79 = scmp.ge.s32.totalorder %s78, 4
  $region68: #{_saint_forward_impl.1} parent=0 // loop_header_branch
    %81 = sbr.rel (%p79) target = $region72
  $region69: #{_saint_forward_impl.1} parent=0 // loop_body
    %v83 = vld [vmem:[#allocation2] sm:$0xff]
    %v84 = vld [vmem:[#allocation2 + $0x8] sm:$0xff]
    %v85 = vpack.c.bf16 %v84, %v83
    %s86 = smul.u32 %s78, 4
    %s87 = smul.addr %s86, 4
    %s88 = scalar_lea.vmem %s2, %s87
    %v89 = vld [vmem:[%s88] sm:$0xf]
    %v90 = vld [vmem:[%s88 + $0x4] sm:$0xf]
    %v91 = vld [vmem:[%s88 + $0x8] sm:$0xf]
    %v92 = vld [vmem:[%s88 + $0xc] sm:$0xf]
    %s93 = scalar_lea.vmem %s3, %s78
    %v94 = vld [vmem:[%s93] sm:$0x1]
    %v96 = vlaneseq
    %v97 = vshrl.u32 %v96, 7
    %v98 = vsub.s32 0, %v97
    %v99 = vrot.slane %v94, %v98
    %v105 = vunpack.c.l.b16 %v89
    %v106 = vunpack.c.l.b16 %v90
    %v107 = vunpack.c.l.b16 %v91
    %v108 = vunpack.c.l.b16 %v92
    %v109 = vpack.c.b16 %v106, %v105
    %v110 = vpack.c.b16 %v108, %v107
    %v114 = vsel %vm74, %v85, 0
    %116 = vmatprep.subr.bf16.mxu0 0
    %117 = vmatpush1.bf16.msra.mxu0 %v109
    %118 = vmatprep.subr.bf16.mxu0 0
    %119 = vmatpush1.bf16.msra.mxu0 %v110
    %120 = vmatprep.subr.bf16.mxu0 0
    %121 = vmatpush1.bf16.msra.mxu0 0
    %122 = vmatprep.subr.bf16.mxu0 0
    %123 = vmatpush1.bf16.msra.mxu0 0
    %124 = vmatprep.subr.bf16.mxu0 0
    %125 = vmatpush1.bf16.msra.mxu0 0
    %126 = vmatprep.subr.bf16.mxu0 0
    %127 = vmatpush1.bf16.msra.mxu0 0
    %128 = vmatprep.subr.bf16.mxu0 0
    %129 = vmatpush1.bf16.msra.mxu0 0
    %130 = vmatprep.subr.bf16.mxu0 0
    %131 = vmatpush1.bf16.msra.mxu0 0
    %132 = vmatprep.subr.bf16.mxu0 0
    %133 = vmatpush1.bf16.msra.mxu0 0
    %134 = vmatprep.subr.bf16.mxu0 0
    %135 = vmatpush1.bf16.msra.mxu0 0
    %136 = vmatprep.subr.bf16.mxu0 0
    %137 = vmatpush1.bf16.msra.mxu0 0
    %138 = vmatprep.subr.bf16.mxu0 0
    %139 = vmatpush1.bf16.msra.mxu0 0
    %140 = vmatprep.subr.bf16.mxu0 0
    %141 = vmatpush1.bf16.msra.mxu0 0
    %142 = vmatprep.subr.bf16.mxu0 0
    %143 = vmatpush1.bf16.msra.mxu0 0
    %144 = vmatprep.subr.bf16.mxu0 0
    %145 = vmatpush1.bf16.msra.mxu0 0
    %146 = vmatprep.subr.bf16.mxu0 0
    %147 = vmatpush1.bf16.msra.mxu0 0
    %148 = vmatprep.mubr.bf16.mxu0 0
    %149 = vmatmul.mubr.bf16.gmra.mrb[0].mxu0 %v114
    %v150 = vpop.f32.mrb[0].mxu0
    %v151 = vadd.f32 %v99, %v150
    %v152 = vpop.f32.mrb[0].mxu0
    %v153 = vpop.f32.mrb[0].mxu0
    %v154 = vadd.f32 %v99, %v153
    %v155 = vpop.f32.mrb[0].mxu0
    %156 = vdwg.mxu0
    %v157 = vpack.c.bf16 %v151, %v151
    %v158 = vpack.c.bf16 %v154, %v154
    %160 = vrot.lane.b32.xlu0 %v157, 96
    %v161 = vpop.permute.xlu0 %160
    %vm162 = vcmask 64512
    %v164 = vsel %vm162, %v157, 0
    %v167 = vsel %vm162, %v161, 0
    %169 = vmatprep.subr.bf16.mxu0 0
    %170 = vmatpush1.bf16.xpose.msra.mxu0 %v167
    %171 = vmatprep.subr.bf16.mxu0 0
    %172 = vmatpush1.bf16.xpose.msra.mxu0 0
    %173 = vmatprep.subr.bf16.mxu0 0
    %174 = vmatpush1.bf16.xpose.msra.mxu0 0
    %175 = vmatprep.subr.bf16.mxu0 0
    %176 = vmatpush1.bf16.xpose.msra.mxu0 0
    %177 = vmatprep.subr.bf16.mxu0 0
    %178 = vmatpush1.bf16.xpose.msra.mxu0 0
    %179 = vmatprep.subr.bf16.mxu0 0
    %180 = vmatpush1.bf16.xpose.msra.mxu0 0
    %181 = vmatprep.subr.bf16.mxu0 0
    %182 = vmatpush1.bf16.xpose.msra.mxu0 0
    %183 = vmatprep.subr.bf16.mxu0 0
    %184 = vmatpush1.bf16.xpose.msra.mxu0 0
    %185 = vmatprep.subr.bf16.mxu0 0
    %186 = vmatpush1.bf16.xpose.msra.mxu0 0
    %187 = vmatprep.subr.bf16.mxu0 0
    %188 = vmatpush1.bf16.xpose.msra.mxu0 0
    %189 = vmatprep.subr.bf16.mxu0 0
    %190 = vmatpush1.bf16.xpose.msra.mxu0 0
    %191 = vmatprep.subr.bf16.mxu0 0
    %192 = vmatpush1.bf16.xpose.msra.mxu0 0
    %193 = vmatprep.subr.bf16.mxu0 0
    %194 = vmatpush1.bf16.xpose.msra.mxu0 0
    %195 = vmatprep.subr.bf16.mxu0 0
    %196 = vmatpush1.bf16.xpose.msra.mxu0 0
    %197 = vmatprep.subr.bf16.mxu0 0
    %198 = vmatpush1.bf16.xpose.msra.mxu0 0
    %199 = vmatprep.subr.bf16.mxu0 0
    %200 = vmatpush1.bf16.xpose.msra.mxu0 0
    %201 = vmatprep.mubr.bf16.mxu0 0
    %202 = vmatmul.mubr.bf16.gmra.mrb[0].mxu0 %v164
    %v203 = vpop.f32.mrb[0].mxu0
    %v204 = vadd.f32 0.0, %v203
    %v205 = vpop.f32.mrb[0].mxu0
    %v206 = vpop.f32.mrb[0].mxu0
    %v207 = vpop.f32.mrb[0].mxu0
    %208 = vdwg.mxu0
    %210 = vrot.lane.b32.xlu0 %v158, 96
    %v211 = vpop.permute.xlu0 %210
    %v213 = vsel %vm162, %v158, 0
    %v216 = vsel %vm162, %v211, 0
    %218 = vmatprep.subr.bf16.mxu0 0
    %219 = vmatpush1.bf16.xpose.msra.mxu0 %v216
    %220 = vmatprep.subr.bf16.mxu0 0
    %221 = vmatpush1.bf16.xpose.msra.mxu0 0
    %222 = vmatprep.subr.bf16.mxu0 0
    %223 = vmatpush1.bf16.xpose.msra.mxu0 0
    %224 = vmatprep.subr.bf16.mxu0 0
    %225 = vmatpush1.bf16.xpose.msra.mxu0 0
    %226 = vmatprep.subr.bf16.mxu0 0
    %227 = vmatpush1.bf16.xpose.msra.mxu0 0
    %228 = vmatprep.subr.bf16.mxu0 0
    %229 = vmatpush1.bf16.xpose.msra.mxu0 0
    %230 = vmatprep.subr.bf16.mxu0 0
    %231 = vmatpush1.bf16.xpose.msra.mxu0 0
    %232 = vmatprep.subr.bf16.mxu0 0
    %233 = vmatpush1.bf16.xpose.msra.mxu0 0
    %234 = vmatprep.subr.bf16.mxu0 0
    %235 = vmatpush1.bf16.xpose.msra.mxu0 0
    %236 = vmatprep.subr.bf16.mxu0 0
    %237 = vmatpush1.bf16.xpose.msra.mxu0 0
    %238 = vmatprep.subr.bf16.mxu0 0
    %239 = vmatpush1.bf16.xpose.msra.mxu0 0
    %240 = vmatprep.subr.bf16.mxu0 0
    %241 = vmatpush1.bf16.xpose.msra.mxu0 0
    %242 = vmatprep.subr.bf16.mxu0 0
    %243 = vmatpush1.bf16.xpose.msra.mxu0 0
    %244 = vmatprep.subr.bf16.mxu0 0
    %245 = vmatpush1.bf16.xpose.msra.mxu0 0
    %246 = vmatprep.subr.bf16.mxu0 0
    %247 = vmatpush1.bf16.xpose.msra.mxu0 0
    %248 = vmatprep.subr.bf16.mxu0 0
    %249 = vmatpush1.bf16.xpose.msra.mxu0 0
    %250 = vmatprep.mubr.bf16.mxu0 0
    %251 = vmatmul.mubr.bf16.gmra.mrb[0].mxu0 %v213
    %v252 = vpop.f32.mrb[0].mxu0
    %v253 = vadd.f32 0.0, %v252
    %v254 = vpop.f32.mrb[0].mxu0
    %v255 = vpop.f32.mrb[0].mxu0
    %v256 = vpop.f32.mrb[0].mxu0
    %257 = vdwg.mxu0
    %v258 = vsel %vm162, %v204, -inf
    %259 = vmax.xlane.f32.xlu0 %v258
    %v260 = vpop.xlane.xlu0 %259
    %v261 = vsel %vm162, %v253, -inf
    %262 = vmax.xlane.f32.xlu0 %v261
    %v263 = vpop.xlane.xlu0 %262
    %v264 = vsub.f32 %v204, %v260
    %v265 = vsub.f32 %v253, %v263
    %v266 = vmul.f32 %v264, 1.442695
    %v267 = vpow.pop %v266
    %v268 = vmul.f32 %v265, 1.442695
    %v269 = vpow.pop %v268
    %v270 = vsel %vm162, %v267, 0.0
    %271 = vadd.xlane.f32.xlu0 %v270
    %v272 = vpop.xlane.xlu0 %271
    %v273 = vsel %vm162, %v269, 0.0
    %274 = vadd.xlane.f32.xlu0 %v273
    %v275 = vpop.xlane.xlu0 %274
    %v276 = vrcp.pop %v272
    %v277 = vrcp.pop %v275
    %v278 = vmul.f32 %v267, %v276
    %v279 = vmul.f32 %v269, %v277
    %v280 = vpack.c.bf16 %v278, %v278
    %v281 = vpack.c.bf16 %v279, %v279
    %282 = vrot.lane.b32.xlu0 %v157, 64
    %v283 = vpop.permute.xlu0 %282
    %v285 = vsel %vm162, %v280, 0
    %vm287 = vcmask 1043456
    %v289 = vsel %vm287, %v283, 0
    %291 = vmatprep.subr.bf16.mxu0 0
    %292 = vmatpush1.bf16.msra.mxu0 %v289
    %293 = vmatprep.subr.bf16.mxu0 0
    %294 = vmatpush1.bf16.msra.mxu0 0
    %295 = vmatprep.subr.bf16.mxu0 0
    %296 = vmatpush1.bf16.msra.mxu0 0
    %297 = vmatprep.subr.bf16.mxu0 0
    %298 = vmatpush1.bf16.msra.mxu0 0
    %299 = vmatprep.subr.bf16.mxu0 0
    %300 = vmatpush1.bf16.msra.mxu0 0
    %301 = vmatprep.subr.bf16.mxu0 0
    %302 = vmatpush1.bf16.msra.mxu0 0
    %303 = vmatprep.subr.bf16.mxu0 0
    %304 = vmatpush1.bf16.msra.mxu0 0
    %305 = vmatprep.subr.bf16.mxu0 0
    %306 = vmatpush1.bf16.msra.mxu0 0
    %307 = vmatprep.subr.bf16.mxu0 0
    %308 = vmatpush1.bf16.msra.mxu0 0
    %309 = vmatprep.subr.bf16.mxu0 0
    %310 = vmatpush1.bf16.msra.mxu0 0
    %311 = vmatprep.subr.bf16.mxu0 0
    %312 = vmatpush1.bf16.msra.mxu0 0
    %313 = vmatprep.subr.bf16.mxu0 0
    %314 = vmatpush1.bf16.msra.mxu0 0
    %315 = vmatprep.subr.bf16.mxu0 0
    %316 = vmatpush1.bf16.msra.mxu0 0
    %317 = vmatprep.subr.bf16.mxu0 0
    %318 = vmatpush1.bf16.msra.mxu0 0
    %319 = vmatprep.subr.bf16.mxu0 0
    %320 = vmatpush1.bf16.msra.mxu0 0
    %321 = vmatprep.subr.bf16.mxu0 0
    %322 = vmatpush1.bf16.msra.mxu0 0
    %323 = vmatprep.mubr.bf16.mxu0 0
    %324 = vmatmul.mubr.bf16.gmra.mrb[0].mxu0 %v285
    %v325 = vpop.f32.mrb[0].mxu0
    %v326 = vadd.f32 0.0, %v325
    %v327 = vpop.f32.mrb[0].mxu0
    %v328 = vpop.f32.mrb[0].mxu0
    %v329 = vpop.f32.mrb[0].mxu0
    %330 = vdwg.mxu0
    %331 = vrot.lane.b32.xlu0 %v158, 64
    %v332 = vpop.permute.xlu0 %331
    %v334 = vsel %vm162, %v281, 0
    %v337 = vsel %vm287, %v332, 0
    %339 = vmatprep.subr.bf16.mxu0 0
    %340 = vmatpush1.bf16.msra.mxu0 %v337
    %341 = vmatprep.subr.bf16.mxu0 0
    %342 = vmatpush1.bf16.msra.mxu0 0
    %343 = vmatprep.subr.bf16.mxu0 0
    %344 = vmatpush1.bf16.msra.mxu0 0
    %345 = vmatprep.subr.bf16.mxu0 0
    %346 = vmatpush1.bf16.msra.mxu0 0
    %347 = vmatprep.subr.bf16.mxu0 0
    %348 = vmatpush1.bf16.msra.mxu0 0
    %349 = vmatprep.subr.bf16.mxu0 0
    %350 = vmatpush1.bf16.msra.mxu0 0
    %351 = vmatprep.subr.bf16.mxu0 0
    %352 = vmatpush1.bf16.msra.mxu0 0
    %353 = vmatprep.subr.bf16.mxu0 0
    %354 = vmatpush1.bf16.msra.mxu0 0
    %355 = vmatprep.subr.bf16.mxu0 0
    %356 = vmatpush1.bf16.msra.mxu0 0
    %357 = vmatprep.subr.bf16.mxu0 0
    %358 = vmatpush1.bf16.msra.mxu0 0
    %359 = vmatprep.subr.bf16.mxu0 0
    %360 = vmatpush1.bf16.msra.mxu0 0
    %361 = vmatprep.subr.bf16.mxu0 0
    %362 = vmatpush1.bf16.msra.mxu0 0
    %363 = vmatprep.subr.bf16.mxu0 0
    %364 = vmatpush1.bf16.msra.mxu0 0
    %365 = vmatprep.subr.bf16.mxu0 0
    %366 = vmatpush1.bf16.msra.mxu0 0
    %367 = vmatprep.subr.bf16.mxu0 0
    %368 = vmatpush1.bf16.msra.mxu0 0
    %369 = vmatprep.subr.bf16.mxu0 0
    %370 = vmatpush1.bf16.msra.mxu0 0
    %371 = vmatprep.mubr.bf16.mxu0 0
    %372 = vmatmul.mubr.bf16.gmra.mrb[0].mxu0 %v334
    %v373 = vpop.f32.mrb[0].mxu0
    %v374 = vadd.f32 0.0, %v373
    %v375 = vpop.f32.mrb[0].mxu0
    %v376 = vpop.f32.mrb[0].mxu0
    %v377 = vpop.f32.mrb[0].mxu0
    %378 = vdwg.mxu0
    %379 = vrot.lane.b32.xlu0 %v157, 120
    %v380 = vpop.permute.xlu0 %379
    %381 = vrot.lane.b32.xlu0 %v157, 88
    %v382 = vpop.permute.xlu0 %381
    %v384 = vsel %vm162, %v380, 0
    %v387 = vsel %vm162, %v382, 0
    %389 = vmatprep.subr.bf16.mxu0 0
    %390 = vmatpush1.bf16.xpose.msra.mxu0 %v387
    %391 = vmatprep.subr.bf16.mxu0 0
    %392 = vmatpush1.bf16.xpose.msra.mxu0 0
    %393 = vmatprep.subr.bf16.mxu0 0
    %394 = vmatpush1.bf16.xpose.msra.mxu0 0
    %395 = vmatprep.subr.bf16.mxu0 0
    %396 = vmatpush1.bf16.xpose.msra.mxu0 0
    %397 = vmatprep.subr.bf16.mxu0 0
    %398 = vmatpush1.bf16.xpose.msra.mxu0 0
    %399 = vmatprep.subr.bf16.mxu0 0
    %400 = vmatpush1.bf16.xpose.msra.mxu0 0
    %401 = vmatprep.subr.bf16.mxu0 0
    %402 = vmatpush1.bf16.xpose.msra.mxu0 0
    %403 = vmatprep.subr.bf16.mxu0 0
    %404 = vmatpush1.bf16.xpose.msra.mxu0 0
    %405 = vmatprep.subr.bf16.mxu0 0
    %406 = vmatpush1.bf16.xpose.msra.mxu0 0
    %407 = vmatprep.subr.bf16.mxu0 0
    %408 = vmatpush1.bf16.xpose.msra.mxu0 0
    %409 = vmatprep.subr.bf16.mxu0 0
    %410 = vmatpush1.bf16.xpose.msra.mxu0 0
    %411 = vmatprep.subr.bf16.mxu0 0
    %412 = vmatpush1.bf16.xpose.msra.mxu0 0
    %413 = vmatprep.subr.bf16.mxu0 0
    %414 = vmatpush1.bf16.xpose.msra.mxu0 0
    %415 = vmatprep.subr.bf16.mxu0 0
    %416 = vmatpush1.bf16.xpose.msra.mxu0 0
    %417 = vmatprep.subr.bf16.mxu0 0
    %418 = vmatpush1.bf16.xpose.msra.mxu0 0
    %419 = vmatprep.subr.bf16.mxu0 0
    %420 = vmatpush1.bf16.xpose.msra.mxu0 0
    %421 = vmatprep.mubr.bf16.mxu0 0
    %422 = vmatmul.mubr.bf16.gmra.mrb[0].mxu0 %v384
    %v423 = vpop.f32.mrb[0].mxu0
    %v424 = vadd.f32 0.0, %v423
    %v425 = vpop.f32.mrb[0].mxu0
    %v426 = vpop.f32.mrb[0].mxu0
    %v427 = vpop.f32.mrb[0].mxu0
    %428 = vdwg.mxu0
    %429 = vrot.lane.b32.xlu0 %v158, 120
    %v430 = vpop.permute.xlu0 %429
    %431 = vrot.lane.b32.xlu0 %v158, 88
    %v432 = vpop.permute.xlu0 %431
    %v434 = vsel %vm162, %v430, 0
    %v437 = vsel %vm162, %v432, 0
    %439 = vmatprep.subr.bf16.mxu0 0
    %440 = vmatpush1.bf16.xpose.msra.mxu0 %v437
    %441 = vmatprep.subr.bf16.mxu0 0
    %442 = vmatpush1.bf16.xpose.msra.mxu0 0
    %443 = vmatprep.subr.bf16.mxu0 0
    %444 = vmatpush1.bf16.xpose.msra.mxu0 0
    %445 = vmatprep.subr.bf16.mxu0 0
    %446 = vmatpush1.bf16.xpose.msra.mxu0 0
    %447 = vmatprep.subr.bf16.mxu0 0
    %448 = vmatpush1.bf16.xpose.msra.mxu0 0
    %449 = vmatprep.subr.bf16.mxu0 0
    %450 = vmatpush1.bf16.xpose.msra.mxu0 0
    %451 = vmatprep.subr.bf16.mxu0 0
    %452 = vmatpush1.bf16.xpose.msra.mxu0 0
    %453 = vmatprep.subr.bf16.mxu0 0
    %454 = vmatpush1.bf16.xpose.msra.mxu0 0
    %455 = vmatprep.subr.bf16.mxu0 0
    %456 = vmatpush1.bf16.xpose.msra.mxu0 0
    %457 = vmatprep.subr.bf16.mxu0 0
    %458 = vmatpush1.bf16.xpose.msra.mxu0 0
    %459 = vmatprep.subr.bf16.mxu0 0
    %460 = vmatpush1.bf16.xpose.msra.mxu0 0
    %461 = vmatprep.subr.bf16.mxu0 0
    %462 = vmatpush1.bf16.xpose.msra.mxu0 0
    %463 = vmatprep.subr.bf16.mxu0 0
    %464 = vmatpush1.bf16.xpose.msra.mxu0 0
    %465 = vmatprep.subr.bf16.mxu0 0
    %466 = vmatpush1.bf16.xpose.msra.mxu0 0
    %467 = vmatprep.subr.bf16.mxu0 0
    %468 = vmatpush1.bf16.xpose.msra.mxu0 0
    %469 = vmatprep.subr.bf16.mxu0 0
    %470 = vmatpush1.bf16.xpose.msra.mxu0 0
    %471 = vmatprep.mubr.bf16.mxu0 0
    %472 = vmatmul.mubr.bf16.gmra.mrb[0].mxu0 %v434
    %v473 = vpop.f32.mrb[0].mxu0
    %v474 = vadd.f32 0.0, %v473
    %v475 = vpop.f32.mrb[0].mxu0
    %v476 = vpop.f32.mrb[0].mxu0
    %v477 = vpop.f32.mrb[0].mxu0
    %478 = vdwg.mxu0
    %v479 = vsel %vm162, %v424, -inf
    %480 = vmax.xlane.f32.xlu0 %v479
    %v481 = vpop.xlane.xlu0 %480
    %v482 = vsel %vm162, %v474, -inf
    %483 = vmax.xlane.f32.xlu0 %v482
    %v484 = vpop.xlane.xlu0 %483
    %v485 = vsub.f32 %v424, %v481
    %v486 = vsub.f32 %v474, %v484
    %v487 = vmul.f32 %v485, 1.442695
    %v488 = vpow.pop %v487
    %v489 = vmul.f32 %v486, 1.442695
    %v490 = vpow.pop %v489
    %v491 = vsel %vm162, %v488, 0.0
    %492 = vadd.xlane.f32.xlu0 %v491
    %v493 = vpop.xlane.xlu0 %492
    %v494 = vsel %vm162, %v490, 0.0
    %495 = vadd.xlane.f32.xlu0 %v494
    %v496 = vpop.xlane.xlu0 %495
    %v497 = vrcp.pop %v493
    %v498 = vrcp.pop %v496
    %v499 = vmul.f32 %v488, %v497
    %v500 = vmul.f32 %v490, %v498
    %v501 = vpack.c.bf16 %v499, %v499
    %v502 = vpack.c.bf16 %v500, %v500
    %503 = vrot.lane.b32.xlu0 %v157, 56
    %v504 = vpop.permute.xlu0 %503
    %v506 = vsel %vm162, %v501, 0
    %v509 = vsel %vm287, %v504, 0
    %511 = vmatprep.subr.bf16.mxu0 0
    %512 = vmatpush1.bf16.msra.mxu0 %v509
    %513 = vmatprep.subr.bf16.mxu0 0
    %514 = vmatpush1.bf16.msra.mxu0 0
    %515 = vmatprep.subr.bf16.mxu0 0
    %516 = vmatpush1.bf16.msra.mxu0 0
    %517 = vmatprep.subr.bf16.mxu0 0
    %518 = vmatpush1.bf16.msra.mxu0 0
    %519 = vmatprep.subr.bf16.mxu0 0
    %520 = vmatpush1.bf16.msra.mxu0 0
    %521 = vmatprep.subr.bf16.mxu0 0
    %522 = vmatpush1.bf16.msra.mxu0 0
    %523 = vmatprep.subr.bf16.mxu0 0
    %524 = vmatpush1.bf16.msra.mxu0 0
    %525 = vmatprep.subr.bf16.mxu0 0
    %526 = vmatpush1.bf16.msra.mxu0 0
    %527 = vmatprep.subr.bf16.mxu0 0
    %528 = vmatpush1.bf16.msra.mxu0 0
    %529 = vmatprep.subr.bf16.mxu0 0
    %530 = vmatpush1.bf16.msra.mxu0 0
    %531 = vmatprep.subr.bf16.mxu0 0
    %532 = vmatpush1.bf16.msra.mxu0 0
    %533 = vmatprep.subr.bf16.mxu0 0
    %534 = vmatpush1.bf16.msra.mxu0 0
    %535 = vmatprep.subr.bf16.mxu0 0
    %536 = vmatpush1.bf16.msra.mxu0 0
    %537 = vmatprep.subr.bf16.mxu0 0
    %538 = vmatpush1.bf16.msra.mxu0 0
    %539 = vmatprep.subr.bf16.mxu0 0
    %540 = vmatpush1.bf16.msra.mxu0 0
    %541 = vmatprep.subr.bf16.mxu0 0
    %542 = vmatpush1.bf16.msra.mxu0 0
    %543 = vmatprep.mubr.bf16.mxu0 0
    %544 = vmatmul.mubr.bf16.gmra.mrb[0].mxu0 %v506
    %v545 = vpop.f32.mrb[0].mxu0
    %v546 = vadd.f32 0.0, %v545
    %v547 = vpop.f32.mrb[0].mxu0
    %v548 = vpop.f32.mrb[0].mxu0
    %v549 = vpop.f32.mrb[0].mxu0
    %550 = vdwg.mxu0
    %551 = vrot.lane.b32.xlu0 %v158, 56
    %v552 = vpop.permute.xlu0 %551
    %v554 = vsel %vm162, %v502, 0
    %v557 = vsel %vm287, %v552, 0
    %559 = vmatprep.subr.bf16.mxu0 0
    %560 = vmatpush1.bf16.msra.mxu0 %v557
    %561 = vmatprep.subr.bf16.mxu0 0
    %562 = vmatpush1.bf16.msra.mxu0 0
    %563 = vmatprep.subr.bf16.mxu0 0
    %564 = vmatpush1.bf16.msra.mxu0 0
    %565 = vmatprep.subr.bf16.mxu0 0
    %566 = vmatpush1.bf16.msra.mxu0 0
    %567 = vmatprep.subr.bf16.mxu0 0
    %568 = vmatpush1.bf16.msra.mxu0 0
    %569 = vmatprep.subr.bf16.mxu0 0
    %570 = vmatpush1.bf16.msra.mxu0 0
    %571 = vmatprep.subr.bf16.mxu0 0
    %572 = vmatpush1.bf16.msra.mxu0 0
    %573 = vmatprep.subr.bf16.mxu0 0
    %574 = vmatpush1.bf16.msra.mxu0 0
    %575 = vmatprep.subr.bf16.mxu0 0
    %576 = vmatpush1.bf16.msra.mxu0 0
    %577 = vmatprep.subr.bf16.mxu0 0
    %578 = vmatpush1.bf16.msra.mxu0 0
    %579 = vmatprep.subr.bf16.mxu0 0
    %580 = vmatpush1.bf16.msra.mxu0 0
    %581 = vmatprep.subr.bf16.mxu0 0
    %582 = vmatpush1.bf16.msra.mxu0 0
    %583 = vmatprep.subr.bf16.mxu0 0
    %584 = vmatpush1.bf16.msra.mxu0 0
    %585 = vmatprep.subr.bf16.mxu0 0
    %586 = vmatpush1.bf16.msra.mxu0 0
    %587 = vmatprep.subr.bf16.mxu0 0
    %588 = vmatpush1.bf16.msra.mxu0 0
    %589 = vmatprep.subr.bf16.mxu0 0
    %590 = vmatpush1.bf16.msra.mxu0 0
    %591 = vmatprep.mubr.bf16.mxu0 0
    %592 = vmatmul.mubr.bf16.gmra.mrb[0].mxu0 %v554
    %v593 = vpop.f32.mrb[0].mxu0
    %v594 = vadd.f32 0.0, %v593
    %v595 = vpop.f32.mrb[0].mxu0
    %v596 = vpop.f32.mrb[0].mxu0
    %v597 = vpop.f32.mrb[0].mxu0
    %598 = vdwg.mxu0
    %599 = vrot.lane.b32.xlu0 %v157, 112
    %v600 = vpop.permute.xlu0 %599
    %601 = vrot.lane.b32.xlu0 %v157, 80
    %v602 = vpop.permute.xlu0 %601
    %v604 = vsel %vm162, %v600, 0
    %v607 = vsel %vm162, %v602, 0
    %609 = vmatprep.subr.bf16.mxu0 0
    %610 = vmatpush1.bf16.xpose.msra.mxu0 %v607
    %611 = vmatprep.subr.bf16.mxu0 0
    %612 = vmatpush1.bf16.xpose.msra.mxu0 0
    %613 = vmatprep.subr.bf16.mxu0 0
    %614 = vmatpush1.bf16.xpose.msra.mxu0 0
    %615 = vmatprep.subr.bf16.mxu0 0
    %616 = vmatpush1.bf16.xpose.msra.mxu0 0
    %617 = vmatprep.subr.bf16.mxu0 0
    %618 = vmatpush1.bf16.xpose.msra.mxu0 0
    %619 = vmatprep.subr.bf16.mxu0 0
    %620 = vmatpush1.bf16.xpose.msra.mxu0 0
    %621 = vmatprep.subr.bf16.mxu0 0
    %622 = vmatpush1.bf16.xpose.msra.mxu0 0
    %623 = vmatprep.subr.bf16.mxu0 0
    %624 = vmatpush1.bf16.xpose.msra.mxu0 0
    %625 = vmatprep.subr.bf16.mxu0 0
    %626 = vmatpush1.bf16.xpose.msra.mxu0 0
    %627 = vmatprep.subr.bf16.mxu0 0
    %628 = vmatpush1.bf16.xpose.msra.mxu0 0
    %629 = vmatprep.subr.bf16.mxu0 0
    %630 = vmatpush1.bf16.xpose.msra.mxu0 0
    %631 = vmatprep.subr.bf16.mxu0 0
    %632 = vmatpush1.bf16.xpose.msra.mxu0 0
    %633 = vmatprep.subr.bf16.mxu0 0
    %634 = vmatpush1.bf16.xpose.msra.mxu0 0
    %635 = vmatprep.subr.bf16.mxu0 0
    %636 = vmatpush1.bf16.xpose.msra.mxu0 0
    %637 = vmatprep.subr.bf16.mxu0 0
    %638 = vmatpush1.bf16.xpose.msra.mxu0 0
    %639 = vmatprep.subr.bf16.mxu0 0
    %640 = vmatpush1.bf16.xpose.msra.mxu0 0
    %641 = vmatprep.mubr.bf16.mxu0 0
    %642 = vmatmul.mubr.bf16.gmra.mrb[0].mxu0 %v604
    %v643 = vpop.f32.mrb[0].mxu0
    %v644 = vadd.f32 0.0, %v643
    %v645 = vpop.f32.mrb[0].mxu0
    %v646 = vpop.f32.mrb[0].mxu0
    %v647 = vpop.f32.mrb[0].mxu0
    %648 = vdwg.mxu0
    %649 = vrot.lane.b32.xlu0 %v158, 112
    %v650 = vpop.permute.xlu0 %649
    %651 = vrot.lane.b32.xlu0 %v158, 80
    %v652 = vpop.permute.xlu0 %651
    %v654 = vsel %vm162, %v650, 0
    %v657 = vsel %vm162, %v652, 0
    %659 = vmatprep.subr.bf16.mxu0 0
    %660 = vmatpush1.bf16.xpose.msra.mxu0 %v657
    %661 = vmatprep.subr.bf16.mxu0 0
    %662 = vmatpush1.bf16.xpose.msra.mxu0 0
    %663 = vmatprep.subr.bf16.mxu0 0
    %664 = vmatpush1.bf16.xpose.msra.mxu0 0
    %665 = vmatprep.subr.bf16.mxu0 0
    %666 = vmatpush1.bf16.xpose.msra.mxu0 0
    %667 = vmatprep.subr.bf16.mxu0 0
    %668 = vmatpush1.bf16.xpose.msra.mxu0 0
    %669 = vmatprep.subr.bf16.mxu0 0
    %670 = vmatpush1.bf16.xpose.msra.mxu0 0
    %671 = vmatprep.subr.bf16.mxu0 0
    %672 = vmatpush1.bf16.xpose.msra.mxu0 0
    %673 = vmatprep.subr.bf16.mxu0 0
    %674 = vmatpush1.bf16.xpose.msra.mxu0 0
    %675 = vmatprep.subr.bf16.mxu0 0
    %676 = vmatpush1.bf16.xpose.msra.mxu0 0
    %677 = vmatprep.subr.bf16.mxu0 0
    %678 = vmatpush1.bf16.xpose.msra.mxu0 0
    %679 = vmatprep.subr.bf16.mxu0 0
    %680 = vmatpush1.bf16.xpose.msra.mxu0 0
    %681 = vmatprep.subr.bf16.mxu0 0
    %682 = vmatpush1.bf16.xpose.msra.mxu0 0
    %683 = vmatprep.subr.bf16.mxu0 0
    %684 = vmatpush1.bf16.xpose.msra.mxu0 0
    %685 = vmatprep.subr.bf16.mxu0 0
    %686 = vmatpush1.bf16.xpose.msra.mxu0 0
    %687 = vmatprep.subr.bf16.mxu0 0
    %688 = vmatpush1.bf16.xpose.msra.mxu0 0
    %689 = vmatprep.subr.bf16.mxu0 0
    %690 = vmatpush1.bf16.xpose.msra.mxu0 0
    %691 = vmatprep.mubr.bf16.mxu0 0
    %692 = vmatmul.mubr.bf16.gmra.mrb[0].mxu0 %v654
    %v693 = vpop.f32.mrb[0].mxu0
    %v694 = vadd.f32 0.0, %v693
    %v695 = vpop.f32.mrb[0].mxu0
    %v696 = vpop.f32.mrb[0].mxu0
    %v697 = vpop.f32.mrb[0].mxu0
    %698 = vdwg.mxu0
    %v699 = vsel %vm162, %v644, -inf
    %700 = vmax.xlane.f32.xlu0 %v699
    %v701 = vpop.xlane.xlu0 %700
    %v702 = vsel %vm162, %v694, -inf
    %703 = vmax.xlane.f32.xlu0 %v702
    %v704 = vpop.xlane.xlu0 %703
    %v705 = vsub.f32 %v644, %v701
    %v706 = vsub.f32 %v694, %v704
    %v707 = vmul.f32 %v705, 1.442695
    %v708 = vpow.pop %v707
    %v709 = vmul.f32 %v706, 1.442695
    %v710 = vpow.pop %v709
    %v711 = vsel %vm162, %v708, 0.0
    %712 = vadd.xlane.f32.xlu0 %v711
    %v713 = vpop.xlane.xlu0 %712
    %v714 = vsel %vm162, %v710, 0.0
    %715 = vadd.xlane.f32.xlu0 %v714
    %v716 = vpop.xlane.xlu0 %715
    %v717 = vrcp.pop %v713
    %v718 = vrcp.pop %v716
    %v719 = vmul.f32 %v708, %v717
    %v720 = vmul.f32 %v710, %v718
    %v721 = vpack.c.bf16 %v719, %v719
    %v722 = vpack.c.bf16 %v720, %v720
    %723 = vrot.lane.b32.xlu0 %v157, 48
    %v724 = vpop.permute.xlu0 %723
    %v726 = vsel %vm162, %v721, 0
    %v729 = vsel %vm287, %v724, 0
    %731 = vmatprep.subr.bf16.mxu0 0
    %732 = vmatpush1.bf16.msra.mxu0 %v729
    %733 = vmatprep.subr.bf16.mxu0 0
    %734 = vmatpush1.bf16.msra.mxu0 0
    %735 = vmatprep.subr.bf16.mxu0 0
    %736 = vmatpush1.bf16.msra.mxu0 0
    %737 = vmatprep.subr.bf16.mxu0 0
    %738 = vmatpush1.bf16.msra.mxu0 0
    %739 = vmatprep.subr.bf16.mxu0 0
    %740 = vmatpush1.bf16.msra.mxu0 0
    %741 = vmatprep.subr.bf16.mxu0 0
    %742 = vmatpush1.bf16.msra.mxu0 0
    %743 = vmatprep.subr.bf16.mxu0 0
    %744 = vmatpush1.bf16.msra.mxu0 0
    %745 = vmatprep.subr.bf16.mxu0 0
    %746 = vmatpush1.bf16.msra.mxu0 0
    %747 = vmatprep.subr.bf16.mxu0 0
    %748 = vmatpush1.bf16.msra.mxu0 0
    %749 = vmatprep.subr.bf16.mxu0 0
    %750 = vmatpush1.bf16.msra.mxu0 0
    %751 = vmatprep.subr.bf16.mxu0 0
    %752 = vmatpush1.bf16.msra.mxu0 0
    %753 = vmatprep.subr.bf16.mxu0 0
    %754 = vmatpush1.bf16.msra.mxu0 0
    %755 = vmatprep.subr.bf16.mxu0 0
    %756 = vmatpush1.bf16.msra.mxu0 0
    %757 = vmatprep.subr.bf16.mxu0 0
    %758 = vmatpush1.bf16.msra.mxu0 0
    %759 = vmatprep.subr.bf16.mxu0 0
    %760 = vmatpush1.bf16.msra.mxu0 0
    %761 = vmatprep.subr.bf16.mxu0 0
    %762 = vmatpush1.bf16.msra.mxu0 0
    %763 = vmatprep.mubr.bf16.mxu0 0
    %764 = vmatmul.mubr.bf16.gmra.mrb[0].mxu0 %v726
    %v765 = vpop.f32.mrb[0].mxu0
    %v766 = vadd.f32 0.0, %v765
    %v767 = vpop.f32.mrb[0].mxu0
    %v768 = vpop.f32.mrb[0].mxu0
    %v769 = vpop.f32.mrb[0].mxu0
    %770 = vdwg.mxu0
    %771 = vrot.lane.b32.xlu0 %v158, 48
    %v772 = vpop.permute.xlu0 %771
    %v774 = vsel %vm162, %v722, 0
    %v777 = vsel %vm287, %v772, 0
    %779 = vmatprep.subr.bf16.mxu0 0
    %780 = vmatpush1.bf16.msra.mxu0 %v777
    %781 = vmatprep.subr.bf16.mxu0 0
    %782 = vmatpush1.bf16.msra.mxu0 0
    %783 = vmatprep.subr.bf16.mxu0 0
    %784 = vmatpush1.bf16.msra.mxu0 0
    %785 = vmatprep.subr.bf16.mxu0 0
    %786 = vmatpush1.bf16.msra.mxu0 0
    %787 = vmatprep.subr.bf16.mxu0 0
    %788 = vmatpush1.bf16.msra.mxu0 0
    %789 = vmatprep.subr.bf16.mxu0 0
    %790 = vmatpush1.bf16.msra.mxu0 0
    %791 = vmatprep.subr.bf16.mxu0 0
    %792 = vmatpush1.bf16.msra.mxu0 0
    %793 = vmatprep.subr.bf16.mxu0 0
    %794 = vmatpush1.bf16.msra.mxu0 0
    %795 = vmatprep.subr.bf16.mxu0 0
    %796 = vmatpush1.bf16.msra.mxu0 0
    %797 = vmatprep.subr.bf16.mxu0 0
    %798 = vmatpush1.bf16.msra.mxu0 0
    %799 = vmatprep.subr.bf16.mxu0 0
    %800 = vmatpush1.bf16.msra.mxu0 0
    %801 = vmatprep.subr.bf16.mxu0 0
    %802 = vmatpush1.bf16.msra.mxu0 0
    %803 = vmatprep.subr.bf16.mxu0 0
    %804 = vmatpush1.bf16.msra.mxu0 0
    %805 = vmatprep.subr.bf16.mxu0 0
    %806 = vmatpush1.bf16.msra.mxu0 0
    %807 = vmatprep.subr.bf16.mxu0 0
    %808 = vmatpush1.bf16.msra.mxu0 0
    %809 = vmatprep.subr.bf16.mxu0 0
    %810 = vmatpush1.bf16.msra.mxu0 0
    %811 = vmatprep.mubr.bf16.mxu0 0
    %812 = vmatmul.mubr.bf16.gmra.mrb[0].mxu0 %v774
    %v813 = vpop.f32.mrb[0].mxu0
    %v814 = vadd.f32 0.0, %v813
    %v815 = vpop.f32.mrb[0].mxu0
    %v816 = vpop.f32.mrb[0].mxu0
    %v817 = vpop.f32.mrb[0].mxu0
    %818 = vdwg.mxu0
    %819 = vrot.lane.b32.xlu0 %v157, 104
    %v820 = vpop.permute.xlu0 %819
    %821 = vrot.lane.b32.xlu0 %v157, 72
    %v822 = vpop.permute.xlu0 %821
    %v824 = vsel %vm162, %v820, 0
    %v827 = vsel %vm162, %v822, 0
    %829 = vmatprep.subr.bf16.mxu0 0
    %830 = vmatpush1.bf16.xpose.msra.mxu0 %v827
    %831 = vmatprep.subr.bf16.mxu0 0
    %832 = vmatpush1.bf16.xpose.msra.mxu0 0
    %833 = vmatprep.subr.bf16.mxu0 0
    %834 = vmatpush1.bf16.xpose.msra.mxu0 0
    %835 = vmatprep.subr.bf16.mxu0 0
    %836 = vmatpush1.bf16.xpose.msra.mxu0 0
    %837 = vmatprep.subr.bf16.mxu0 0
    %838 = vmatpush1.bf16.xpose.msra.mxu0 0
    %839 = vmatprep.subr.bf16.mxu0 0
    %840 = vmatpush1.bf16.xpose.msra.mxu0 0
    %841 = vmatprep.subr.bf16.mxu0 0
    %842 = vmatpush1.bf16.xpose.msra.mxu0 0
    %843 = vmatprep.subr.bf16.mxu0 0
    %844 = vmatpush1.bf16.xpose.msra.mxu0 0
    %845 = vmatprep.subr.bf16.mxu0 0
    %846 = vmatpush1.bf16.xpose.msra.mxu0 0
    %847 = vmatprep.subr.bf16.mxu0 0
    %848 = vmatpush1.bf16.xpose.msra.mxu0 0
    %849 = vmatprep.subr.bf16.mxu0 0
    %850 = vmatpush1.bf16.xpose.msra.mxu0 0
    %851 = vmatprep.subr.bf16.mxu0 0
    %852 = vmatpush1.bf16.xpose.msra.mxu0 0
    %853 = vmatprep.subr.bf16.mxu0 0
    %854 = vmatpush1.bf16.xpose.msra.mxu0 0
    %855 = vmatprep.subr.bf16.mxu0 0
    %856 = vmatpush1.bf16.xpose.msra.mxu0 0
    %857 = vmatprep.subr.bf16.mxu0 0
    %858 = vmatpush1.bf16.xpose.msra.mxu0 0
    %859 = vmatprep.subr.bf16.mxu0 0
    %860 = vmatpush1.bf16.xpose.msra.mxu0 0
    %861 = vmatprep.mubr.bf16.mxu0 0
    %862 = vmatmul.mubr.bf16.gmra.mrb[0].mxu0 %v824
    %v863 = vpop.f32.mrb[0].mxu0
    %v864 = vadd.f32 0.0, %v863
    %v865 = vpop.f32.mrb[0].mxu0
    %v866 = vpop.f32.mrb[0].mxu0
    %v867 = vpop.f32.mrb[0].mxu0
    %868 = vdwg.mxu0
    %869 = vrot.lane.b32.xlu0 %v158, 104
    %v870 = vpop.permute.xlu0 %869
    %871 = vrot.lane.b32.xlu0 %v158, 72
    %v872 = vpop.permute.xlu0 %871
    %v874 = vsel %vm162, %v870, 0
    %v877 = vsel %vm162, %v872, 0
    %879 = vmatprep.subr.bf16.mxu0 0
    %880 = vmatpush1.bf16.xpose.msra.mxu0 %v877
    %881 = vmatprep.subr.bf16.mxu0 0
    %882 = vmatpush1.bf16.xpose.msra.mxu0 0
    %883 = vmatprep.subr.bf16.mxu0 0
    %884 = vmatpush1.bf16.xpose.msra.mxu0 0
    %885 = vmatprep.subr.bf16.mxu0 0
    %886 = vmatpush1.bf16.xpose.msra.mxu0 0
    %887 = vmatprep.subr.bf16.mxu0 0
    %888 = vmatpush1.bf16.xpose.msra.mxu0 0
    %889 = vmatprep.subr.bf16.mxu0 0
    %890 = vmatpush1.bf16.xpose.msra.mxu0 0
    %891 = vmatprep.subr.bf16.mxu0 0
    %892 = vmatpush1.bf16.xpose.msra.mxu0 0
    %893 = vmatprep.subr.bf16.mxu0 0
    %894 = vmatpush1.bf16.xpose.msra.mxu0 0
    %895 = vmatprep.subr.bf16.mxu0 0
    %896 = vmatpush1.bf16.xpose.msra.mxu0 0
    %897 = vmatprep.subr.bf16.mxu0 0
    %898 = vmatpush1.bf16.xpose.msra.mxu0 0
    %899 = vmatprep.subr.bf16.mxu0 0
    %900 = vmatpush1.bf16.xpose.msra.mxu0 0
    %901 = vmatprep.subr.bf16.mxu0 0
    %902 = vmatpush1.bf16.xpose.msra.mxu0 0
    %903 = vmatprep.subr.bf16.mxu0 0
    %904 = vmatpush1.bf16.xpose.msra.mxu0 0
    %905 = vmatprep.subr.bf16.mxu0 0
    %906 = vmatpush1.bf16.xpose.msra.mxu0 0
    %907 = vmatprep.subr.bf16.mxu0 0
    %908 = vmatpush1.bf16.xpose.msra.mxu0 0
    %909 = vmatprep.subr.bf16.mxu0 0
    %910 = vmatpush1.bf16.xpose.msra.mxu0 0
    %911 = vmatprep.mubr.bf16.mxu0 0
    %912 = vmatmul.mubr.bf16.gmra.mrb[0].mxu0 %v874
    %v913 = vpop.f32.mrb[0].mxu0
    %v914 = vadd.f32 0.0, %v913
    %v915 = vpop.f32.mrb[0].mxu0
    %v916 = vpop.f32.mrb[0].mxu0
    %v917 = vpop.f32.mrb[0].mxu0
    %918 = vdwg.mxu0
    %v919 = vsel %vm162, %v864, -inf
    %920 = vmax.xlane.f32.xlu0 %v919
    %v921 = vpop.xlane.xlu0 %920
    %v922 = vsel %vm162, %v914, -inf
    %923 = vmax.xlane.f32.xlu0 %v922
    %v924 = vpop.xlane.xlu0 %923
    %v925 = vsub.f32 %v864, %v921
    %v926 = vsub.f32 %v914, %v924
    %v927 = vmul.f32 %v925, 1.442695
    %v928 = vpow.pop %v927
    %v929 = vmul.f32 %v926, 1.442695
    %v930 = vpow.pop %v929
    %v931 = vsel %vm162, %v928, 0.0
    %932 = vadd.xlane.f32.xlu0 %v931
    %v933 = vpop.xlane.xlu0 %932
    %v934 = vsel %vm162, %v930, 0.0
    %935 = vadd.xlane.f32.xlu0 %v934
    %v936 = vpop.xlane.xlu0 %935
    %v937 = vrcp.pop %v933
    %v938 = vrcp.pop %v936
    %v939 = vmul.f32 %v928, %v937
    %v940 = vmul.f32 %v930, %v938
    %v941 = vpack.c.bf16 %v939, %v939
    %v942 = vpack.c.bf16 %v940, %v940
    %943 = vrot.lane.b32.xlu0 %v157, 40
    %v944 = vpop.permute.xlu0 %943
    %v946 = vsel %vm162, %v941, 0
    %v949 = vsel %vm287, %v944, 0
    %951 = vmatprep.subr.bf16.mxu0 0
    %952 = vmatpush1.bf16.msra.mxu0 %v949
    %953 = vmatprep.subr.bf16.mxu0 0
    %954 = vmatpush1.bf16.msra.mxu0 0
    %955 = vmatprep.subr.bf16.mxu0 0
    %956 = vmatpush1.bf16.msra.mxu0 0
    %957 = vmatprep.subr.bf16.mxu0 0
    %958 = vmatpush1.bf16.msra.mxu0 0
    %959 = vmatprep.subr.bf16.mxu0 0
    %960 = vmatpush1.bf16.msra.mxu0 0
    %961 = vmatprep.subr.bf16.mxu0 0
    %962 = vmatpush1.bf16.msra.mxu0 0
    %963 = vmatprep.subr.bf16.mxu0 0
    %964 = vmatpush1.bf16.msra.mxu0 0
    %965 = vmatprep.subr.bf16.mxu0 0
    %966 = vmatpush1.bf16.msra.mxu0 0
    %967 = vmatprep.subr.bf16.mxu0 0
    %968 = vmatpush1.bf16.msra.mxu0 0
    %969 = vmatprep.subr.bf16.mxu0 0
    %970 = vmatpush1.bf16.msra.mxu0 0
    %971 = vmatprep.subr.bf16.mxu0 0
    %972 = vmatpush1.bf16.msra.mxu0 0
    %973 = vmatprep.subr.bf16.mxu0 0
    %974 = vmatpush1.bf16.msra.mxu0 0
    %975 = vmatprep.subr.bf16.mxu0 0
    %976 = vmatpush1.bf16.msra.mxu0 0
    %977 = vmatprep.subr.bf16.mxu0 0
    %978 = vmatpush1.bf16.msra.mxu0 0
    %979 = vmatprep.subr.bf16.mxu0 0
    %980 = vmatpush1.bf16.msra.mxu0 0
    %981 = vmatprep.subr.bf16.mxu0 0
    %982 = vmatpush1.bf16.msra.mxu0 0
    %983 = vmatprep.mubr.bf16.mxu0 0
    %984 = vmatmul.mubr.bf16.gmra.mrb[0].mxu0 %v946
    %v985 = vpop.f32.mrb[0].mxu0
    %v986 = vadd.f32 0.0, %v985
    %v987 = vpop.f32.mrb[0].mxu0
    %v988 = vpop.f32.mrb[0].mxu0
    %v989 = vpop.f32.mrb[0].mxu0
    %990 = vdwg.mxu0
    %991 = vrot.lane.b32.xlu0 %v158, 40
    %v992 = vpop.permute.xlu0 %991
    %v994 = vsel %vm162, %v942, 0
    %v997 = vsel %vm287, %v992, 0
    %999 = vmatprep.subr.bf16.mxu0 0
    %1000 = vmatpush1.bf16.msra.mxu0 %v997
    %1001 = vmatprep.subr.bf16.mxu0 0
    %1002 = vmatpush1.bf16.msra.mxu0 0
    %1003 = vmatprep.subr.bf16.mxu0 0
    %1004 = vmatpush1.bf16.msra.mxu0 0
    %1005 = vmatprep.subr.bf16.mxu0 0
    %1006 = vmatpush1.bf16.msra.mxu0 0
    %1007 = vmatprep.subr.bf16.mxu0 0
    %1008 = vmatpush1.bf16.msra.mxu0 0
    %1009 = vmatprep.subr.bf16.mxu0 0
    %1010 = vmatpush1.bf16.msra.mxu0 0
    %1011 = vmatprep.subr.bf16.mxu0 0
    %1012 = vmatpush1.bf16.msra.mxu0 0
    %1013 = vmatprep.subr.bf16.mxu0 0
    %1014 = vmatpush1.bf16.msra.mxu0 0
    %1015 = vmatprep.subr.bf16.mxu0 0
    %1016 = vmatpush1.bf16.msra.mxu0 0
    %1017 = vmatprep.subr.bf16.mxu0 0
    %1018 = vmatpush1.bf16.msra.mxu0 0
    %1019 = vmatprep.subr.bf16.mxu0 0
    %1020 = vmatpush1.bf16.msra.mxu0 0
    %1021 = vmatprep.subr.bf16.mxu0 0
    %1022 = vmatpush1.bf16.msra.mxu0 0
    %1023 = vmatprep.subr.bf16.mxu0 0
    %1024 = vmatpush1.bf16.msra.mxu0 0
    %1025 = vmatprep.subr.bf16.mxu0 0
    %1026 = vmatpush1.bf16.msra.mxu0 0
    %1027 = vmatprep.subr.bf16.mxu0 0
    %1028 = vmatpush1.bf16.msra.mxu0 0
    %1029 = vmatprep.subr.bf16.mxu0 0
    %1030 = vmatpush1.bf16.msra.mxu0 0
    %1031 = vmatprep.mubr.bf16.mxu0 0
    %1032 = vmatmul.mubr.bf16.gmra.mrb[0].mxu0 %v994
    %v1033 = vpop.f32.mrb[0].mxu0
    %v1034 = vadd.f32 0.0, %v1033
    %v1035 = vpop.f32.mrb[0].mxu0
    %v1036 = vpop.f32.mrb[0].mxu0
    %v1037 = vpop.f32.mrb[0].mxu0
    %1038 = vdwg.mxu0
    %1041 = vrot.lane.b32.xlu0 %v546, 8
    %v1042 = vpop.permute.xlu0 %1041
    %1043 = vrot.lane.b32.xlu0 %v594, 8
    %v1044 = vpop.permute.xlu0 %1043
    %1049 = vrot.lane.b32.xlu0 %v766, 16
    %v1050 = vpop.permute.xlu0 %1049
    %1051 = vrot.lane.b32.xlu0 %v814, 16
    %v1052 = vpop.permute.xlu0 %1051
    %1057 = vrot.lane.b32.xlu0 %v986, 24
    %v1058 = vpop.permute.xlu0 %1057
    %1059 = vrot.lane.b32.xlu0 %v1034, 24
    %v1060 = vpop.permute.xlu0 %1059
    %v1063 = vsel %vm162, %v326, %v1042
    %v1064 = vsel %vm162, %v374, %v1044
    %vm1065 = vcmask 130048
    %v1066 = vsel %vm1065, %v1063, %v1050
    %v1067 = vsel %vm1065, %v1064, %v1052
    %vm1068 = vcmask 195584
    %v1069 = vsel %vm1068, %v1066, %v1058
    %v1070 = vsel %vm1068, %v1067, %v1060
    %v1071 = vpack.c.bf16 %v1070, %v1069
    %s1072 = smul.addr %s86, 4
    %s1073 = scalar_lea.vmem %s4, %s1072
    %v1074 = vld [vmem:[%s1073] sm:$0xf]
    %v1075 = vld [vmem:[%s1073 + $0x4] sm:$0xf]
    %v1076 = vld [vmem:[%s1073 + $0x8] sm:$0xf]
    %v1077 = vld [vmem:[%s1073 + $0xc] sm:$0xf]
    %s1078 = scalar_lea.vmem %s5, %s78
    %v1079 = vld [vmem:[%s1078] sm:$0x1]
    %v1081 = vlaneseq
    %v1082 = vshrl.u32 %v1081, 7
    %v1083 = vsub.s32 0, %v1082
    %v1084 = vrot.slane %v1079, %v1083
    %v1090 = vunpack.c.l.b16 %v1074
    %v1091 = vunpack.c.l.b16 %v1075
    %v1092 = vunpack.c.l.b16 %v1076
    %v1093 = vunpack.c.l.b16 %v1077
    %v1094 = vpack.c.b16 %v1091, %v1090
    %v1095 = vpack.c.b16 %v1093, %v1092
    %v1099 = vsel %vm74, %v1071, 0
    %1101 = vmatprep.subr.bf16.mxu0 0
    %1102 = vmatpush1.bf16.msra.mxu0 %v1094
    %1103 = vmatprep.subr.bf16.mxu0 0
    %1104 = vmatpush1.bf16.msra.mxu0 %v1095
    %1105 = vmatprep.subr.bf16.mxu0 0
    %1106 = vmatpush1.bf16.msra.mxu0 0
    %1107 = vmatprep.subr.bf16.mxu0 0
    %1108 = vmatpush1.bf16.msra.mxu0 0
    %1109 = vmatprep.subr.bf16.mxu0 0
    %1110 = vmatpush1.bf16.msra.mxu0 0
    %1111 = vmatprep.subr.bf16.mxu0 0
    %1112 = vmatpush1.bf16.msra.mxu0 0
    %1113 = vmatprep.subr.bf16.mxu0 0
    %1114 = vmatpush1.bf16.msra.mxu0 0
    %1115 = vmatprep.subr.bf16.mxu0 0
    %1116 = vmatpush1.bf16.msra.mxu0 0
    %1117 = vmatprep.subr.bf16.mxu0 0
    %1118 = vmatpush1.bf16.msra.mxu0 0
    %1119 = vmatprep.subr.bf16.mxu0 0
    %1120 = vmatpush1.bf16.msra.mxu0 0
    %1121 = vmatprep.subr.bf16.mxu0 0
    %1122 = vmatpush1.bf16.msra.mxu0 0
    %1123 = vmatprep.subr.bf16.mxu0 0
    %1124 = vmatpush1.bf16.msra.mxu0 0
    %1125 = vmatprep.subr.bf16.mxu0 0
    %1126 = vmatpush1.bf16.msra.mxu0 0
    %1127 = vmatprep.subr.bf16.mxu0 0
    %1128 = vmatpush1.bf16.msra.mxu0 0
    %1129 = vmatprep.subr.bf16.mxu0 0
    %1130 = vmatpush1.bf16.msra.mxu0 0
    %1131 = vmatprep.subr.bf16.mxu0 0
    %1132 = vmatpush1.bf16.msra.mxu0 0
    %1133 = vmatprep.mubr.bf16.mxu0 0
    %1134 = vmatmul.mubr.bf16.gmra.mrb[0].mxu0 %v1099
    %v1135 = vpop.f32.mrb[0].mxu0
    %v1136 = vadd.f32 %v1084, %v1135
    %v1137 = vpop.f32.mrb[0].mxu0
    %v1138 = vpop.f32.mrb[0].mxu0
    %v1139 = vadd.f32 %v1084, %v1138
    %v1140 = vpop.f32.mrb[0].mxu0
    %1141 = vdwg.mxu0
    %v1142 = vadd.f32 %v83, %v1136
    %v1143 = vadd.f32 %v84, %v1139
    %s1144 = scalar_lea.vmem %s10, %s78
    %v1145 = vld [vmem:[%s1144] sm:$0x1]
    %s1146 = scalar_lea.vmem %s11, %s78
    %v1147 = vld [vmem:[%s1146] sm:$0x1]
    %v1148 = vsel %vm74, %v1142, 0.0
    %1149 = vadd.xlane.f32.xlu0 %v1148
    %v1150 = vpop.xlane.xlu0 %1149
    %v1151 = vsel %vm74, %v1143, 0.0
    %1152 = vadd.xlane.f32.xlu0 %v1151
    %v1153 = vpop.xlane.xlu0 %1152
    %v1154 = vrcp.pop 32.0
    %v1155 = vmul.f32 %v1150, %v1154
    %v1156 = vmul.f32 %v1153, %v1154
    %v1157 = vmul.f32 %v1142, %v1142
    %v1158 = vmul.f32 %v1143, %v1143
    %v1159 = vsel %vm74, %v1157, 0.0
    %1160 = vadd.xlane.f32.xlu0 %v1159
    %v1161 = vpop.xlane.xlu0 %1160
    %v1162 = vsel %vm74, %v1158, 0.0
    %1163 = vadd.xlane.f32.xlu0 %v1162
    %v1164 = vpop.xlane.xlu0 %1163
    %v1165 = vmul.f32 %v1161, %v1154
    %v1166 = vmul.f32 %v1164, %v1154
    %v1167 = vmul.f32 %v1155, %v1155
    %v1168 = vmul.f32 %v1156, %v1156
    %v1169 = vsub.f32 %v1165, %v1167
    %v1170 = vsub.f32 %v1166, %v1168
    %v1171 = vmax.f32 %v1169, 0.0
    %v1172 = vmax.f32 %v1170, 0.0
    %v1173 = vsub.f32 %v1142, %v1155
    %v1174 = vsub.f32 %v1143, %v1156
    %v1175 = vadd.f32 %v1171, 1e-05
    %v1176 = vadd.f32 %v1172, 1e-05
    %v1177 = vrsqrt.pop %v1175
    %v1178 = vrsqrt.pop %v1176
    %v1179 = vmul.f32 %v1173, %v1177
    %v1180 = vmul.f32 %v1174, %v1178
    %v1182 = vlaneseq
    %v1183 = vshrl.u32 %v1182, 7
    %v1184 = vsub.s32 0, %v1183
    %v1185 = vrot.slane %v1145, %v1184
    %v1187 = vmul.f32 %v1179, %v1185
    %v1188 = vmul.f32 %v1180, %v1185
    %v1190 = vlaneseq
    %v1191 = vshrl.u32 %v1190, 7
    %v1192 = vsub.s32 0, %v1191
    %v1193 = vrot.slane %v1147, %v1192
    %v1195 = vadd.f32 %v1187, %v1193
    %v1196 = vadd.f32 %v1188, %v1193
    %v1197 = vpack.c.bf16 %v1196, %v1195
    %s1198 = smul.u32 %s78, 64
    %s1199 = smul.addr %s1198, 4
    %s1200 = scalar_lea.vmem %s6, %s1199
    %v1201 = vld [vmem:[%s1200] sm:$0xff]
    %v1202 = vld [vmem:[%s1200 + $0x8] sm:$0xff]
    %v1203 = vld [vmem:[%s1200 + $0x10] sm:$0xff]
    %v1204 = vld [vmem:[%s1200 + $0x18] sm:$0xff]
    %v1205 = vld [vmem:[%s1200 + $0x20] sm:$0xff]
    %v1206 = vld [vmem:[%s1200 + $0x28] sm:$0xff]
    %v1207 = vld [vmem:[%s1200 + $0x30] sm:$0xff]
    %v1208 = vld [vmem:[%s1200 + $0x38] sm:$0xff]
    %v1209 = vld [vmem:[%s1200 + $0x40] sm:$0xff]
    %v1210 = vld [vmem:[%s1200 + $0x48] sm:$0xff]
    %v1211 = vld [vmem:[%s1200 + $0x50] sm:$0xff]
    %v1212 = vld [vmem:[%s1200 + $0x58] sm:$0xff]
    %v1213 = vld [vmem:[%s1200 + $0x60] sm:$0xff]
    %v1214 = vld [vmem:[%s1200 + $0x68] sm:$0xff]
    %v1215 = vld [vmem:[%s1200 + $0x70] sm:$0xff]
    %v1216 = vld [vmem:[%s1200 + $0x78] sm:$0xff]
    %v1217 = vld [vmem:[%s1200 + $0x80] sm:$0xff]
    %v1218 = vld [vmem:[%s1200 + $0x88] sm:$0xff]
    %v1219 = vld [vmem:[%s1200 + $0x90] sm:$0xff]
    %v1220 = vld [vmem:[%s1200 + $0x98] sm:$0xff]
    %v1221 = vld [vmem:[%s1200 + $0xa0] sm:$0xff]
    %v1222 = vld [vmem:[%s1200 + $0xa8] sm:$0xff]
    %v1223 = vld [vmem:[%s1200 + $0xb0] sm:$0xff]
    %v1224 = vld [vmem:[%s1200 + $0xb8] sm:$0xff]
    %v1225 = vld [vmem:[%s1200 + $0xc0] sm:$0xff]
    %v1226 = vld [vmem:[%s1200 + $0xc8] sm:$0xff]
    %v1227 = vld [vmem:[%s1200 + $0xd0] sm:$0xff]
    %v1228 = vld [vmem:[%s1200 + $0xd8] sm:$0xff]
    %v1229 = vld [vmem:[%s1200 + $0xe0] sm:$0xff]
    %v1230 = vld [vmem:[%s1200 + $0xe8] sm:$0xff]
    %v1231 = vld [vmem:[%s1200 + $0xf0] sm:$0xff]
    %v1232 = vld [vmem:[%s1200 + $0xf8] sm:$0xff]
    %v1265 = vunpack.c.l.b16 %v1201
    %v1266 = vunpack.c.h.b16 %v1201
    %v1267 = vunpack.c.l.b16 %v1202
    %v1268 = vunpack.c.h.b16 %v1202
    %v1269 = vunpack.c.l.b16 %v1203
    %v1270 = vunpack.c.h.b16 %v1203
    %v1271 = vunpack.c.l.b16 %v1204
    %v1272 = vunpack.c.h.b16 %v1204
    %v1273 = vunpack.c.l.b16 %v1205
    %v1274 = vunpack.c.h.b16 %v1205
    %v1275 = vunpack.c.l.b16 %v1206
    %v1276 = vunpack.c.h.b16 %v1206
    %v1277 = vunpack.c.l.b16 %v1207
    %v1278 = vunpack.c.h.b16 %v1207
    %v1279 = vunpack.c.l.b16 %v1208
    %v1280 = vunpack.c.h.b16 %v1208
    %v1281 = vunpack.c.l.b16 %v1209
    %v1282 = vunpack.c.h.b16 %v1209
    %v1283 = vunpack.c.l.b16 %v1210
    %v1284 = vunpack.c.h.b16 %v1210
    %v1285 = vunpack.c.l.b16 %v1211
    %v1286 = vunpack.c.h.b16 %v1211
    %v1287 = vunpack.c.l.b16 %v1212
    %v1288 = vunpack.c.h.b16 %v1212
    %v1289 = vunpack.c.l.b16 %v1213
    %v1290 = vunpack.c.h.b16 %v1213
    %v1291 = vunpack.c.l.b16 %v1214
    %v1292 = vunpack.c.h.b16 %v1214
    %v1293 = vunpack.c.l.b16 %v1215
    %v1294 = vunpack.c.h.b16 %v1215
    %v1295 = vunpack.c.l.b16 %v1216
    %v1296 = vunpack.c.h.b16 %v1216
    %v1297 = vunpack.c.l.b16 %v1217
    %v1298 = vunpack.c.h.b16 %v1217
    %v1299 = vunpack.c.l.b16 %v1218
    %v1300 = vunpack.c.h.b16 %v1218
    %v1301 = vunpack.c.l.b16 %v1219
    %v1302 = vunpack.c.h.b16 %v1219
    %v1303 = vunpack.c.l.b16 %v1220
    %v1304 = vunpack.c.h.b16 %v1220
    %v1305 = vunpack.c.l.b16 %v1221
    %v1306 = vunpack.c.h.b16 %v1221
    %v1307 = vunpack.c.l.b16 %v1222
    %v1308 = vunpack.c.h.b16 %v1222
    %v1309 = vunpack.c.l.b16 %v1223
    %v1310 = vunpack.c.h.b16 %v1223
    %v1311 = vunpack.c.l.b16 %v1224
    %v1312 = vunpack.c.h.b16 %v1224
    %v1313 = vunpack.c.l.b16 %v1225
    %v1314 = vunpack.c.h.b16 %v1225
    %v1315 = vunpack.c.l.b16 %v1226
    %v1316 = vunpack.c.h.b16 %v1226
    %v1317 = vunpack.c.l.b16 %v1227
    %v1318 = vunpack.c.h.b16 %v1227
    %v1319 = vunpack.c.l.b16 %v1228
    %v1320 = vunpack.c.h.b16 %v1228
    %v1321 = vunpack.c.l.b16 %v1229
    %v1322 = vunpack.c.h.b16 %v1229
    %v1323 = vunpack.c.l.b16 %v1230
    %v1324 = vunpack.c.h.b16 %v1230
    %v1325 = vunpack.c.l.b16 %v1231
    %v1326 = vunpack.c.h.b16 %v1231
    %v1327 = vunpack.c.l.b16 %v1232
    %v1328 = vunpack.c.h.b16 %v1232
    %v1329 = vpack.c.b16 %v1281, %v1265
    %v1330 = vpack.c.b16 %v1282, %v1266
    %v1331 = vpack.c.b16 %v1283, %v1267
    %v1332 = vpack.c.b16 %v1284, %v1268
    %v1333 = vpack.c.b16 %v1285, %v1269
    %v1334 = vpack.c.b16 %v1286, %v1270
    %v1335 = vpack.c.b16 %v1287, %v1271
    %v1336 = vpack.c.b16 %v1288, %v1272
    %v1337 = vpack.c.b16 %v1289, %v1273
    %v1338 = vpack.c.b16 %v1290, %v1274
    %v1339 = vpack.c.b16 %v1291, %v1275
    %v1340 = vpack.c.b16 %v1292, %v1276
    %v1341 = vpack.c.b16 %v1293, %v1277
    %v1342 = vpack.c.b16 %v1294, %v1278
    %v1343 = vpack.c.b16 %v1295, %v1279
    %v1344 = vpack.c.b16 %v1296, %v1280
    %v1345 = vpack.c.b16 %v1313, %v1297
    %v1346 = vpack.c.b16 %v1314, %v1298
    %v1347 = vpack.c.b16 %v1315, %v1299
    %v1348 = vpack.c.b16 %v1316, %v1300
    %v1349 = vpack.c.b16 %v1317, %v1301
    %v1350 = vpack.c.b16 %v1318, %v1302
    %v1351 = vpack.c.b16 %v1319, %v1303
    %v1352 = vpack.c.b16 %v1320, %v1304
    %v1353 = vpack.c.b16 %v1321, %v1305
    %v1354 = vpack.c.b16 %v1322, %v1306
    %v1355 = vpack.c.b16 %v1323, %v1307
    %v1356 = vpack.c.b16 %v1324, %v1308
    %v1357 = vpack.c.b16 %v1325, %v1309
    %v1358 = vpack.c.b16 %v1326, %v1310
    %v1359 = vpack.c.b16 %v1327, %v1311
    %v1360 = vpack.c.b16 %v1328, %v1312
    %v1394 = vsel %vm74, %v1197, 0
    %1396 = vmatprep.subr.bf16.mxu0 %v1330
    %1397 = vmatpush1.bf16.msra.mxu0 %v1329
    %1398 = vmatprep.subr.bf16.mxu0 %v1346
    %1399 = vmatpush1.bf16.msra.mxu0 %v1345
    %1400 = vmatprep.subr.bf16.mxu0 0
    %1401 = vmatpush1.bf16.msra.mxu0 0
    %1402 = vmatprep.subr.bf16.mxu0 0
    %1403 = vmatpush1.bf16.msra.mxu0 0
    %1404 = vmatprep.subr.bf16.mxu0 0
    %1405 = vmatpush1.bf16.msra.mxu0 0
    %1406 = vmatprep.subr.bf16.mxu0 0
    %1407 = vmatpush1.bf16.msra.mxu0 0
    %1408 = vmatprep.subr.bf16.mxu0 0
    %1409 = vmatpush1.bf16.msra.mxu0 0
    %1410 = vmatprep.subr.bf16.mxu0 0
    %1411 = vmatpush1.bf16.msra.mxu0 0
    %1412 = vmatprep.subr.bf16.mxu0 0
    %1413 = vmatpush1.bf16.msra.mxu0 0
    %1414 = vmatprep.subr.bf16.mxu0 0
    %1415 = vmatpush1.bf16.msra.mxu0 0
    %1416 = vmatprep.subr.bf16.mxu0 0
    %1417 = vmatpush1.bf16.msra.mxu0 0
    %1418 = vmatprep.subr.bf16.mxu0 0
    %1419 = vmatpush1.bf16.msra.mxu0 0
    %1420 = vmatprep.subr.bf16.mxu0 0
    %1421 = vmatpush1.bf16.msra.mxu0 0
    %1422 = vmatprep.subr.bf16.mxu0 0
    %1423 = vmatpush1.bf16.msra.mxu0 0
    %1424 = vmatprep.subr.bf16.mxu0 0
    %1425 = vmatpush1.bf16.msra.mxu0 0
    %1426 = vmatprep.subr.bf16.mxu0 0
    %1427 = vmatpush1.bf16.msra.mxu0 0
    %1428 = vmatprep.mubr.bf16.mxu0 0
    %1429 = vmatmul.mubr.bf16.gmra.mrb[0].mxu0 %v1394
    %v1430 = vpop.f32.mrb[0].mxu0
    %v1431 = vadd.f32 0.0, %v1430
    %v1432 = vpop.f32.mrb[0].mxu0
    %v1433 = vadd.f32 0.0, %v1432
    %v1434 = vpop.f32.mrb[0].mxu0
    %v1435 = vadd.f32 0.0, %v1434
    %v1436 = vpop.f32.mrb[0].mxu0
    %v1437 = vadd.f32 0.0, %v1436
    %1438 = vdwg.mxu0
    %1439 = vmatprep.subr.bf16.mxu0 %v1332
    %1440 = vmatpush1.bf16.msra.mxu0 %v1331
    %1441 = vmatprep.subr.bf16.mxu0 %v1348
    %1442 = vmatpush1.bf16.msra.mxu0 %v1347
    %1443 = vmatprep.subr.bf16.mxu0 0
    %1444 = vmatpush1.bf16.msra.mxu0 0
    %1445 = vmatprep.subr.bf16.mxu0 0
    %1446 = vmatpush1.bf16.msra.mxu0 0
    %1447 = vmatprep.subr.bf16.mxu0 0
    %1448 = vmatpush1.bf16.msra.mxu0 0
    %1449 = vmatprep.subr.bf16.mxu0 0
    %1450 = vmatpush1.bf16.msra.mxu0 0
    %1451 = vmatprep.subr.bf16.mxu0 0
    %1452 = vmatpush1.bf16.msra.mxu0 0
    %1453 = vmatprep.subr.bf16.mxu0 0
    %1454 = vmatpush1.bf16.msra.mxu0 0
    %1455 = vmatprep.subr.bf16.mxu0 0
    %1456 = vmatpush1.bf16.msra.mxu0 0
    %1457 = vmatprep.subr.bf16.mxu0 0
    %1458 = vmatpush1.bf16.msra.mxu0 0
    %1459 = vmatprep.subr.bf16.mxu0 0
    %1460 = vmatpush1.bf16.msra.mxu0 0
    %1461 = vmatprep.subr.bf16.mxu0 0
    %1462 = vmatpush1.bf16.msra.mxu0 0
    %1463 = vmatprep.subr.bf16.mxu0 0
    %1464 = vmatpush1.bf16.msra.mxu0 0
    %1465 = vmatprep.subr.bf16.mxu0 0
    %1466 = vmatpush1.bf16.msra.mxu0 0
    %1467 = vmatprep.subr.bf16.mxu0 0
    %1468 = vmatpush1.bf16.msra.mxu0 0
    %1469 = vmatprep.subr.bf16.mxu0 0
    %1470 = vmatpush1.bf16.msra.mxu0 0
    %1471 = vmatprep.mubr.bf16.mxu0 0
    %1472 = vmatmul.mubr.bf16.gmra.mrb[0].mxu0 %v1394
    %v1473 = vpop.f32.mrb[0].mxu0
    %v1474 = vadd.f32 0.0, %v1473
    %v1475 = vpop.f32.mrb[0].mxu0
    %v1476 = vadd.f32 0.0, %v1475
    %v1477 = vpop.f32.mrb[0].mxu0
    %v1478 = vadd.f32 0.0, %v1477
    %v1479 = vpop.f32.mrb[0].mxu0
    %v1480 = vadd.f32 0.0, %v1479
    %1481 = vdwg.mxu0
    %1482 = vmatprep.subr.bf16.mxu0 %v1334
    %1483 = vmatpush1.bf16.msra.mxu0 %v1333
    %1484 = vmatprep.subr.bf16.mxu0 %v1350
    %1485 = vmatpush1.bf16.msra.mxu0 %v1349
    %1486 = vmatprep.subr.bf16.mxu0 0
    %1487 = vmatpush1.bf16.msra.mxu0 0
    %1488 = vmatprep.subr.bf16.mxu0 0
    %1489 = vmatpush1.bf16.msra.mxu0 0
    %1490 = vmatprep.subr.bf16.mxu0 0
    %1491 = vmatpush1.bf16.msra.mxu0 0
    %1492 = vmatprep.subr.bf16.mxu0 0
    %1493 = vmatpush1.bf16.msra.mxu0 0
    %1494 = vmatprep.subr.bf16.mxu0 0
    %1495 = vmatpush1.bf16.msra.mxu0 0
    %1496 = vmatprep.subr.bf16.mxu0 0
    %1497 = vmatpush1.bf16.msra.mxu0 0
    %1498 = vmatprep.subr.bf16.mxu0 0
    %1499 = vmatpush1.bf16.msra.mxu0 0
    %1500 = vmatprep.subr.bf16.mxu0 0
    %1501 = vmatpush1.bf16.msra.mxu0 0
    %1502 = vmatprep.subr.bf16.mxu0 0
    %1503 = vmatpush1.bf16.msra.mxu0 0
    %1504 = vmatprep.subr.bf16.mxu0 0
    %1505 = vmatpush1.bf16.msra.mxu0 0
    %1506 = vmatprep.subr.bf16.mxu0 0
    %1507 = vmatpush1.bf16.msra.mxu0 0
    %1508 = vmatprep.subr.bf16.mxu0 0
    %1509 = vmatpush1.bf16.msra.mxu0 0
    %1510 = vmatprep.subr.bf16.mxu0 0
    %1511 = vmatpush1.bf16.msra.mxu0 0
    %1512 = vmatprep.subr.bf16.mxu0 0
    %1513 = vmatpush1.bf16.msra.mxu0 0
    %1514 = vmatprep.mubr.bf16.mxu0 0
    %1515 = vmatmul.mubr.bf16.gmra.mrb[0].mxu0 %v1394
    %v1516 = vpop.f32.mrb[0].mxu0
    %v1517 = vadd.f32 0.0, %v1516
    %v1518 = vpop.f32.mrb[0].mxu0
    %v1519 = vadd.f32 0.0, %v1518
    %v1520 = vpop.f32.mrb[0].mxu0
    %v1521 = vadd.f32 0.0, %v1520
    %v1522 = vpop.f32.mrb[0].mxu0
    %v1523 = vadd.f32 0.0, %v1522
    %1524 = vdwg.mxu0
    %1525 = vmatprep.subr.bf16.mxu0 %v1336
    %1526 = vmatpush1.bf16.msra.mxu0 %v1335
    %1527 = vmatprep.subr.bf16.mxu0 %v1352
    %1528 = vmatpush1.bf16.msra.mxu0 %v1351
    %1529 = vmatprep.subr.bf16.mxu0 0
    %1530 = vmatpush1.bf16.msra.mxu0 0
    %1531 = vmatprep.subr.bf16.mxu0 0
    %1532 = vmatpush1.bf16.msra.mxu0 0
    %1533 = vmatprep.subr.bf16.mxu0 0
    %1534 = vmatpush1.bf16.msra.mxu0 0
    %1535 = vmatprep.subr.bf16.mxu0 0
    %1536 = vmatpush1.bf16.msra.mxu0 0
    %1537 = vmatprep.subr.bf16.mxu0 0
    %1538 = vmatpush1.bf16.msra.mxu0 0
    %1539 = vmatprep.subr.bf16.mxu0 0
    %1540 = vmatpush1.bf16.msra.mxu0 0
    %1541 = vmatprep.subr.bf16.mxu0 0
    %1542 = vmatpush1.bf16.msra.mxu0 0
    %1543 = vmatprep.subr.bf16.mxu0 0
    %1544 = vmatpush1.bf16.msra.mxu0 0
    %1545 = vmatprep.subr.bf16.mxu0 0
    %1546 = vmatpush1.bf16.msra.mxu0 0
    %1547 = vmatprep.subr.bf16.mxu0 0
    %1548 = vmatpush1.bf16.msra.mxu0 0
    %1549 = vmatprep.subr.bf16.mxu0 0
    %1550 = vmatpush1.bf16.msra.mxu0 0
    %1551 = vmatprep.subr.bf16.mxu0 0
    %1552 = vmatpush1.bf16.msra.mxu0 0
    %1553 = vmatprep.subr.bf16.mxu0 0
    %1554 = vmatpush1.bf16.msra.mxu0 0
    %1555 = vmatprep.subr.bf16.mxu0 0
    %1556 = vmatpush1.bf16.msra.mxu0 0
    %1557 = vmatprep.mubr.bf16.mxu0 0
    %1558 = vmatmul.mubr.bf16.gmra.mrb[0].mxu0 %v1394
    %v1559 = vpop.f32.mrb[0].mxu0
    %v1560 = vadd.f32 0.0, %v1559
    %v1561 = vpop.f32.mrb[0].mxu0
    %v1562 = vadd.f32 0.0, %v1561
    %v1563 = vpop.f32.mrb[0].mxu0
    %v1564 = vadd.f32 0.0, %v1563
    %v1565 = vpop.f32.mrb[0].mxu0
    %v1566 = vadd.f32 0.0, %v1565
    %1567 = vdwg.mxu0
    %1568 = vmatprep.subr.bf16.mxu0 %v1338
    %1569 = vmatpush1.bf16.msra.mxu0 %v1337
    %1570 = vmatprep.subr.bf16.mxu0 %v1354
    %1571 = vmatpush1.bf16.msra.mxu0 %v1353
    %1572 = vmatprep.subr.bf16.mxu0 0
    %1573 = vmatpush1.bf16.msra.mxu0 0
    %1574 = vmatprep.subr.bf16.mxu0 0
    %1575 = vmatpush1.bf16.msra.mxu0 0
    %1576 = vmatprep.subr.bf16.mxu0 0
    %1577 = vmatpush1.bf16.msra.mxu0 0
    %1578 = vmatprep.subr.bf16.mxu0 0
    %1579 = vmatpush1.bf16.msra.mxu0 0
    %1580 = vmatprep.subr.bf16.mxu0 0
    %1581 = vmatpush1.bf16.msra.mxu0 0
    %1582 = vmatprep.subr.bf16.mxu0 0
    %1583 = vmatpush1.bf16.msra.mxu0 0
    %1584 = vmatprep.subr.bf16.mxu0 0
    %1585 = vmatpush1.bf16.msra.mxu0 0
    %1586 = vmatprep.subr.bf16.mxu0 0
    %1587 = vmatpush1.bf16.msra.mxu0 0
    %1588 = vmatprep.subr.bf16.mxu0 0
    %1589 = vmatpush1.bf16.msra.mxu0 0
    %1590 = vmatprep.subr.bf16.mxu0 0
    %1591 = vmatpush1.bf16.msra.mxu0 0
    %1592 = vmatprep.subr.bf16.mxu0 0
    %1593 = vmatpush1.bf16.msra.mxu0 0
    %1594 = vmatprep.subr.bf16.mxu0 0
    %1595 = vmatpush1.bf16.msra.mxu0 0
    %1596 = vmatprep.subr.bf16.mxu0 0
    %1597 = vmatpush1.bf16.msra.mxu0 0
    %1598 = vmatprep.subr.bf16.mxu0 0
    %1599 = vmatpush1.bf16.msra.mxu0 0
    %1600 = vmatprep.mubr.bf16.mxu0 0
    %1601 = vmatmul.mubr.bf16.gmra.mrb[0].mxu0 %v1394
    %v1602 = vpop.f32.mrb[0].mxu0
    %v1603 = vadd.f32 0.0, %v1602
    %v1604 = vpop.f32.mrb[0].mxu0
    %v1605 = vadd.f32 0.0, %v1604
    %v1606 = vpop.f32.mrb[0].mxu0
    %v1607 = vadd.f32 0.0, %v1606
    %v1608 = vpop.f32.mrb[0].mxu0
    %v1609 = vadd.f32 0.0, %v1608
    %1610 = vdwg.mxu0
    %1611 = vmatprep.subr.bf16.mxu0 %v1340
    %1612 = vmatpush1.bf16.msra.mxu0 %v1339
    %1613 = vmatprep.subr.bf16.mxu0 %v1356
    %1614 = vmatpush1.bf16.msra.mxu0 %v1355
    %1615 = vmatprep.subr.bf16.mxu0 0
    %1616 = vmatpush1.bf16.msra.mxu0 0
    %1617 = vmatprep.subr.bf16.mxu0 0
    %1618 = vmatpush1.bf16.msra.mxu0 0
    %1619 = vmatprep.subr.bf16.mxu0 0
    %1620 = vmatpush1.bf16.msra.mxu0 0
    %1621 = vmatprep.subr.bf16.mxu0 0
    %1622 = vmatpush1.bf16.msra.mxu0 0
    %1623 = vmatprep.subr.bf16.mxu0 0
    %1624 = vmatpush1.bf16.msra.mxu0 0
    %1625 = vmatprep.subr.bf16.mxu0 0
    %1626 = vmatpush1.bf16.msra.mxu0 0
    %1627 = vmatprep.subr.bf16.mxu0 0
    %1628 = vmatpush1.bf16.msra.mxu0 0
    %1629 = vmatprep.subr.bf16.mxu0 0
    %1630 = vmatpush1.bf16.msra.mxu0 0
    %1631 = vmatprep.subr.bf16.mxu0 0
    %1632 = vmatpush1.bf16.msra.mxu0 0
    %1633 = vmatprep.subr.bf16.mxu0 0
    %1634 = vmatpush1.bf16.msra.mxu0 0
    %1635 = vmatprep.subr.bf16.mxu0 0
    %1636 = vmatpush1.bf16.msra.mxu0 0
    %1637 = vmatprep.subr.bf16.mxu0 0
    %1638 = vmatpush1.bf16.msra.mxu0 0
    %1639 = vmatprep.subr.bf16.mxu0 0
    %1640 = vmatpush1.bf16.msra.mxu0 0
    %1641 = vmatprep.subr.bf16.mxu0 0
    %1642 = vmatpush1.bf16.msra.mxu0 0
    %1643 = vmatprep.mubr.bf16.mxu0 0
    %1644 = vmatmul.mubr.bf16.gmra.mrb[0].mxu0 %v1394
    %v1645 = vpop.f32.mrb[0].mxu0
    %v1646 = vadd.f32 0.0, %v1645
    %v1647 = vpop.f32.mrb[0].mxu0
    %v1648 = vadd.f32 0.0, %v1647
    %v1649 = vpop.f32.mrb[0].mxu0
    %v1650 = vadd.f32 0.0, %v1649
    %v1651 = vpop.f32.mrb[0].mxu0
    %v1652 = vadd.f32 0.0, %v1651
    %1653 = vdwg.mxu0
    %1654 = vmatprep.subr.bf16.mxu0 %v1342
    %1655 = vmatpush1.bf16.msra.mxu0 %v1341
    %1656 = vmatprep.subr.bf16.mxu0 %v1358
    %1657 = vmatpush1.bf16.msra.mxu0 %v1357
    %1658 = vmatprep.subr.bf16.mxu0 0
    %1659 = vmatpush1.bf16.msra.mxu0 0
    %1660 = vmatprep.subr.bf16.mxu0 0
    %1661 = vmatpush1.bf16.msra.mxu0 0
    %1662 = vmatprep.subr.bf16.mxu0 0
    %1663 = vmatpush1.bf16.msra.mxu0 0
    %1664 = vmatprep.subr.bf16.mxu0 0
    %1665 = vmatpush1.bf16.msra.mxu0 0
    %1666 = vmatprep.subr.bf16.mxu0 0
    %1667 = vmatpush1.bf16.msra.mxu0 0
    %1668 = vmatprep.subr.bf16.mxu0 0
    %1669 = vmatpush1.bf16.msra.mxu0 0
    %1670 = vmatprep.subr.bf16.mxu0 0
    %1671 = vmatpush1.bf16.msra.mxu0 0
    %1672 = vmatprep.subr.bf16.mxu0 0
    %1673 = vmatpush1.bf16.msra.mxu0 0
    %1674 = vmatprep.subr.bf16.mxu0 0
    %1675 = vmatpush1.bf16.msra.mxu0 0
    %1676 = vmatprep.subr.bf16.mxu0 0
    %1677 = vmatpush1.bf16.msra.mxu0 0
    %1678 = vmatprep.subr.bf16.mxu0 0
    %1679 = vmatpush1.bf16.msra.mxu0 0
    %1680 = vmatprep.subr.bf16.mxu0 0
    %1681 = vmatpush1.bf16.msra.mxu0 0
    %1682 = vmatprep.subr.bf16.mxu0 0
    %1683 = vmatpush1.bf16.msra.mxu0 0
    %1684 = vmatprep.subr.bf16.mxu0 0
    %1685 = vmatpush1.bf16.msra.mxu0 0
    %1686 = vmatprep.mubr.bf16.mxu0 0
    %1687 = vmatmul.mubr.bf16.gmra.mrb[0].mxu0 %v1394
    %v1688 = vpop.f32.mrb[0].mxu0
    %v1689 = vadd.f32 0.0, %v1688
    %v1690 = vpop.f32.mrb[0].mxu0
    %v1691 = vadd.f32 0.0, %v1690
    %v1692 = vpop.f32.mrb[0].mxu0
    %v1693 = vadd.f32 0.0, %v1692
    %v1694 = vpop.f32.mrb[0].mxu0
    %v1695 = vadd.f32 0.0, %v1694
    %1696 = vdwg.mxu0
    %1697 = vmatprep.subr.bf16.mxu0 %v1344
    %1698 = vmatpush1.bf16.msra.mxu0 %v1343
    %1699 = vmatprep.subr.bf16.mxu0 %v1360
    %1700 = vmatpush1.bf16.msra.mxu0 %v1359
    %1701 = vmatprep.subr.bf16.mxu0 0
    %1702 = vmatpush1.bf16.msra.mxu0 0
    %1703 = vmatprep.subr.bf16.mxu0 0
    %1704 = vmatpush1.bf16.msra.mxu0 0
    %1705 = vmatprep.subr.bf16.mxu0 0
    %1706 = vmatpush1.bf16.msra.mxu0 0
    %1707 = vmatprep.subr.bf16.mxu0 0
    %1708 = vmatpush1.bf16.msra.mxu0 0
    %1709 = vmatprep.subr.bf16.mxu0 0
    %1710 = vmatpush1.bf16.msra.mxu0 0
    %1711 = vmatprep.subr.bf16.mxu0 0
    %1712 = vmatpush1.bf16.msra.mxu0 0
    %1713 = vmatprep.subr.bf16.mxu0 0
    %1714 = vmatpush1.bf16.msra.mxu0 0
    %1715 = vmatprep.subr.bf16.mxu0 0
    %1716 = vmatpush1.bf16.msra.mxu0 0
    %1717 = vmatprep.subr.bf16.mxu0 0
    %1718 = vmatpush1.bf16.msra.mxu0 0
    %1719 = vmatprep.subr.bf16.mxu0 0
    %1720 = vmatpush1.bf16.msra.mxu0 0
    %1721 = vmatprep.subr.bf16.mxu0 0
    %1722 = vmatpush1.bf16.msra.mxu0 0
    %1723 = vmatprep.subr.bf16.mxu0 0
    %1724 = vmatpush1.bf16.msra.mxu0 0
    %1725 = vmatprep.subr.bf16.mxu0 0
    %1726 = vmatpush1.bf16.msra.mxu0 0
    %1727 = vmatprep.subr.bf16.mxu0 0
    %1728 = vmatpush1.bf16.msra.mxu0 0
    %1729 = vmatprep.mubr.bf16.mxu0 0
    %1730 = vmatmul.mubr.bf16.gmra.mrb[0].mxu0 %v1394
    %v1731 = vpop.f32.mrb[0].mxu0
    %v1732 = vadd.f32 0.0, %v1731
    %v1733 = vpop.f32.mrb[0].mxu0
    %v1734 = vadd.f32 0.0, %v1733
    %v1735 = vpop.f32.mrb[0].mxu0
    %v1736 = vadd.f32 0.0, %v1735
    %v1737 = vpop.f32.mrb[0].mxu0
    %v1738 = vadd.f32 0.0, %v1737
    %1739 = vdwg.mxu0
    %v1740 = vpack.c.bf16 %v1435, %v1431
    %v1741 = vpack.c.bf16 %v1437, %v1433
    %v1742 = vpack.c.bf16 %v1478, %v1474
    %v1743 = vpack.c.bf16 %v1480, %v1476
    %v1744 = vpack.c.bf16 %v1521, %v1517
    %v1745 = vpack.c.bf16 %v1523, %v1519
    %v1746 = vpack.c.bf16 %v1564, %v1560
    %v1747 = vpack.c.bf16 %v1566, %v1562
    %v1748 = vpack.c.bf16 %v1607, %v1603
    %v1749 = vpack.c.bf16 %v1609, %v1605
    %v1750 = vpack.c.bf16 %v1650, %v1646
    %v1751 = vpack.c.bf16 %v1652, %v1648
    %v1752 = vpack.c.bf16 %v1693, %v1689
    %v1753 = vpack.c.bf16 %v1695, %v1691
    %v1754 = vpack.c.bf16 %v1736, %v1732
    %v1755 = vpack.c.bf16 %v1738, %v1734
    %s1756 = smul.u32 %s78, 16
    %s1757 = scalar_lea.vmem %s7, %s1756
    %v1758 = vld [vmem:[%s1757] sm:$0xff]
    %v1759 = vld [vmem:[%s1757 + $0x8] sm:$0xff]
    %v1762 = vlaneseq
    %v1763 = vshrl.u32 %v1762, 7
    %v1764 = vsub.s32 0, %v1763
    %v1765 = vrot.slane %v1758, %v1764
    %v1766 = vlaneseq
    %v1767 = vshrl.u32 %v1766, 7
    %v1768 = vsub.s32 1, %v1767
    %v1769 = vrot.slane %v1758, %v1768
    %v1770 = vlaneseq
    %v1771 = vshrl.u32 %v1770, 7
    %v1772 = vsub.s32 2, %v1771
    %v1773 = vrot.slane %v1758, %v1772
    %v1774 = vlaneseq
    %v1775 = vshrl.u32 %v1774, 7
    %v1776 = vsub.s32 3, %v1775
    %v1777 = vrot.slane %v1758, %v1776
    %v1778 = vlaneseq
    %v1779 = vshrl.u32 %v1778, 7
    %v1780 = vsub.s32 4, %v1779
    %v1781 = vrot.slane %v1758, %v1780
    %v1782 = vlaneseq
    %v1783 = vshrl.u32 %v1782, 7
    %v1784 = vsub.s32 5, %v1783
    %v1785 = vrot.slane %v1758, %v1784
    %v1786 = vlaneseq
    %v1787 = vshrl.u32 %v1786, 7
    %v1788 = vsub.s32 6, %v1787
    %v1789 = vrot.slane %v1758, %v1788
    %v1790 = vlaneseq
    %v1791 = vshrl.u32 %v1790, 7
    %v1792 = vsub.s32 7, %v1791
    %v1793 = vrot.slane %v1758, %v1792
    %v1794 = vlaneseq
    %v1795 = vshrl.u32 %v1794, 7
    %v1796 = vsub.s32 0, %v1795
    %v1797 = vrot.slane %v1759, %v1796
    %v1798 = vlaneseq
    %v1799 = vshrl.u32 %v1798, 7
    %v1800 = vsub.s32 1, %v1799
    %v1801 = vrot.slane %v1759, %v1800
    %v1802 = vlaneseq
    %v1803 = vshrl.u32 %v1802, 7
    %v1804 = vsub.s32 2, %v1803
    %v1805 = vrot.slane %v1759, %v1804
    %v1806 = vlaneseq
    %v1807 = vshrl.u32 %v1806, 7
    %v1808 = vsub.s32 3, %v1807
    %v1809 = vrot.slane %v1759, %v1808
    %v1810 = vlaneseq
    %v1811 = vshrl.u32 %v1810, 7
    %v1812 = vsub.s32 4, %v1811
    %v1813 = vrot.slane %v1759, %v1812
    %v1814 = vlaneseq
    %v1815 = vshrl.u32 %v1814, 7
    %v1816 = vsub.s32 5, %v1815
    %v1817 = vrot.slane %v1759, %v1816
    %v1818 = vlaneseq
    %v1819 = vshrl.u32 %v1818, 7
    %v1820 = vsub.s32 6, %v1819
    %v1821 = vrot.slane %v1759, %v1820
    %v1822 = vlaneseq
    %v1823 = vshrl.u32 %v1822, 7
    %v1824 = vsub.s32 7, %v1823
    %v1825 = vrot.slane %v1759, %v1824
    %v1842 = vpack.c.bf16 %v1765, %v1765
    %v1843 = vpack.c.bf16 %v1769, %v1769
    %v1844 = vpack.c.bf16 %v1773, %v1773
    %v1845 = vpack.c.bf16 %v1777, %v1777
    %v1846 = vpack.c.bf16 %v1781, %v1781
    %v1847 = vpack.c.bf16 %v1785, %v1785
    %v1848 = vpack.c.bf16 %v1789, %v1789
    %v1849 = vpack.c.bf16 %v1793, %v1793
    %v1850 = vpack.c.bf16 %v1797, %v1797
    %v1851 = vpack.c.bf16 %v1801, %v1801
    %v1852 = vpack.c.bf16 %v1805, %v1805
    %v1853 = vpack.c.bf16 %v1809, %v1809
    %v1854 = vpack.c.bf16 %v1813, %v1813
    %v1855 = vpack.c.bf16 %v1817, %v1817
    %v1856 = vpack.c.bf16 %v1821, %v1821
    %v1857 = vpack.c.bf16 %v1825, %v1825
    %v1859 = vpack.i.b16 %v1842, %v1842
    %v1861 = vlaneseq
    %v1862 = vshrl.u32 %v1861, 7
    %v1863 = vsub.s32 0, %v1862
    %v1864 = vrot.slane %v1859, %v1863
    %v1866 = vpack.i.b16 %v1843, %v1843
    %v1868 = vlaneseq
    %v1869 = vshrl.u32 %v1868, 7
    %v1870 = vsub.s32 0, %v1869
    %v1871 = vrot.slane %v1866, %v1870
    %v1873 = vpack.i.b16 %v1844, %v1844
    %v1875 = vlaneseq
    %v1876 = vshrl.u32 %v1875, 7
    %v1877 = vsub.s32 0, %v1876
    %v1878 = vrot.slane %v1873, %v1877
    %v1880 = vpack.i.b16 %v1845, %v1845
    %v1882 = vlaneseq
    %v1883 = vshrl.u32 %v1882, 7
    %v1884 = vsub.s32 0, %v1883
    %v1885 = vrot.slane %v1880, %v1884
    %v1887 = vpack.i.b16 %v1846, %v1846
    %v1889 = vlaneseq
    %v1890 = vshrl.u32 %v1889, 7
    %v1891 = vsub.s32 0, %v1890
    %v1892 = vrot.slane %v1887, %v1891
    %v1894 = vpack.i.b16 %v1847, %v1847
    %v1896 = vlaneseq
    %v1897 = vshrl.u32 %v1896, 7
    %v1898 = vsub.s32 0, %v1897
    %v1899 = vrot.slane %v1894, %v1898
    %v1901 = vpack.i.b16 %v1848, %v1848
    %v1903 = vlaneseq
    %v1904 = vshrl.u32 %v1903, 7
    %v1905 = vsub.s32 0, %v1904
    %v1906 = vrot.slane %v1901, %v1905
    %v1908 = vpack.i.b16 %v1849, %v1849
    %v1910 = vlaneseq
    %v1911 = vshrl.u32 %v1910, 7
    %v1912 = vsub.s32 0, %v1911
    %v1913 = vrot.slane %v1908, %v1912
    %v1915 = vpack.i.b16 %v1850, %v1850
    %v1917 = vlaneseq
    %v1918 = vshrl.u32 %v1917, 7
    %v1919 = vsub.s32 0, %v1918
    %v1920 = vrot.slane %v1915, %v1919
    %v1922 = vpack.i.b16 %v1851, %v1851
    %v1924 = vlaneseq
    %v1925 = vshrl.u32 %v1924, 7
    %v1926 = vsub.s32 0, %v1925
    %v1927 = vrot.slane %v1922, %v1926
    %v1929 = vpack.i.b16 %v1852, %v1852
    %v1931 = vlaneseq
    %v1932 = vshrl.u32 %v1931, 7
    %v1933 = vsub.s32 0, %v1932
    %v1934 = vrot.slane %v1929, %v1933
    %v1936 = vpack.i.b16 %v1853, %v1853
    %v1938 = vlaneseq
    %v1939 = vshrl.u32 %v1938, 7
    %v1940 = vsub.s32 0, %v1939
    %v1941 = vrot.slane %v1936, %v1940
    %v1943 = vpack.i.b16 %v1854, %v1854
    %v1945 = vlaneseq
    %v1946 = vshrl.u32 %v1945, 7
    %v1947 = vsub.s32 0, %v1946
    %v1948 = vrot.slane %v1943, %v1947
    %v1950 = vpack.i.b16 %v1855, %v1855
    %v1952 = vlaneseq
    %v1953 = vshrl.u32 %v1952, 7
    %v1954 = vsub.s32 0, %v1953
    %v1955 = vrot.slane %v1950, %v1954
    %v1957 = vpack.i.b16 %v1856, %v1856
    %v1959 = vlaneseq
    %v1960 = vshrl.u32 %v1959, 7
    %v1961 = vsub.s32 0, %v1960
    %v1962 = vrot.slane %v1957, %v1961
    %v1964 = vpack.i.b16 %v1857, %v1857
    %v1966 = vlaneseq
    %v1967 = vshrl.u32 %v1966, 7
    %v1968 = vsub.s32 0, %v1967
    %v1969 = vrot.slane %v1964, %v1968
    %v1970 = vadd.bf16 %v1740, %v1864
    %v1971 = vadd.bf16 %v1741, %v1871
    %v1972 = vadd.bf16 %v1742, %v1878
    %v1973 = vadd.bf16 %v1743, %v1885
    %v1974 = vadd.bf16 %v1744, %v1892
    %v1975 = vadd.bf16 %v1745, %v1899
    %v1976 = vadd.bf16 %v1746, %v1906
    %v1977 = vadd.bf16 %v1747, %v1913
    %v1978 = vadd.bf16 %v1748, %v1920
    %v1979 = vadd.bf16 %v1749, %v1927
    %v1980 = vadd.bf16 %v1750, %v1934
    %v1981 = vadd.bf16 %v1751, %v1941
    %v1982 = vadd.bf16 %v1752, %v1948
    %v1983 = vadd.bf16 %v1753, %v1955
    %v1984 = vadd.bf16 %v1754, %v1962
    %v1985 = vadd.bf16 %v1755, %v1969
    %v1986 = vmax.bf16 %v1970, 0
    %v1987 = vmax.bf16 %v1971, 0
    %v1988 = vmax.bf16 %v1972, 0
    %v1989 = vmax.bf16 %v1973, 0
    %v1990 = vmax.bf16 %v1974, 0
    %v1991 = vmax.bf16 %v1975, 0
    %v1992 = vmax.bf16 %v1976, 0
    %v1993 = vmax.bf16 %v1977, 0
    %v1994 = vmax.bf16 %v1978, 0
    %v1995 = vmax.bf16 %v1979, 0
    %v1996 = vmax.bf16 %v1980, 0
    %v1997 = vmax.bf16 %v1981, 0
    %v1998 = vmax.bf16 %v1982, 0
    %v1999 = vmax.bf16 %v1983, 0
    %v2000 = vmax.bf16 %v1984, 0
    %v2001 = vmax.bf16 %v1985, 0
    %s2002 = smul.u32 %s78, 256
    %s2003 = smul.addr %s2002, 4
    %s2004 = scalar_lea.vmem %s8, %s2003
    %v2005 = vld [vmem:[%s2004] sm:$0xf]
    %v2006 = vld [vmem:[%s2004 + $0x4] sm:$0xf]
    %v2007 = vld [vmem:[%s2004 + $0x8] sm:$0xf]
    %v2008 = vld [vmem:[%s2004 + $0xc] sm:$0xf]
    %v2009 = vld [vmem:[%s2004 + $0x10] sm:$0xf]
    %v2010 = vld [vmem:[%s2004 + $0x14] sm:$0xf]
    %v2011 = vld [vmem:[%s2004 + $0x18] sm:$0xf]
    %v2012 = vld [vmem:[%s2004 + $0x1c] sm:$0xf]
    %v2013 = vld [vmem:[%s2004 + $0x20] sm:$0xf]
    %v2014 = vld [vmem:[%s2004 + $0x24] sm:$0xf]
    %v2015 = vld [vmem:[%s2004 + $0x28] sm:$0xf]
    %v2016 = vld [vmem:[%s2004 + $0x2c] sm:$0xf]
    %v2017 = vld [vmem:[%s2004 + $0x30] sm:$0xf]
    %v2018 = vld [vmem:[%s2004 + $0x34] sm:$0xf]
    %v2019 = vld [vmem:[%s2004 + $0x38] sm:$0xf]
    %v2020 = vld [vmem:[%s2004 + $0x3c] sm:$0xf]
    %v2021 = vld [vmem:[%s2004 + $0x40] sm:$0xf]
    %v2022 = vld [vmem:[%s2004 + $0x44] sm:$0xf]
    %v2023 = vld [vmem:[%s2004 + $0x48] sm:$0xf]
    %v2024 = vld [vmem:[%s2004 + $0x4c] sm:$0xf]
    %v2025 = vld [vmem:[%s2004 + $0x50] sm:$0xf]
    %v2026 = vld [vmem:[%s2004 + $0x54] sm:$0xf]
    %v2027 = vld [vmem:[%s2004 + $0x58] sm:$0xf]
    %v2028 = vld [vmem:[%s2004 + $0x5c] sm:$0xf]
    %v2029 = vld [vmem:[%s2004 + $0x60] sm:$0xf]
    %v2030 = vld [vmem:[%s2004 + $0x64] sm:$0xf]
    %v2031 = vld [vmem:[%s2004 + $0x68] sm:$0xf]
    %v2032 = vld [vmem:[%s2004 + $0x6c] sm:$0xf]
    %v2033 = vld [vmem:[%s2004 + $0x70] sm:$0xf]
    %v2034 = vld [vmem:[%s2004 + $0x74] sm:$0xf]
    %v2035 = vld [vmem:[%s2004 + $0x78] sm:$0xf]
    %v2036 = vld [vmem:[%s2004 + $0x7c] sm:$0xf]
    %v2037 = vld [vmem:[%s2004 + $0x80] sm:$0xf]
    %v2038 = vld [vmem:[%s2004 + $0x84] sm:$0xf]
    %v2039 = vld [vmem:[%s2004 + $0x88] sm:$0xf]
    %v2040 = vld [vmem:[%s2004 + $0x8c] sm:$0xf]
    %v2041 = vld [vmem:[%s2004 + $0x90] sm:$0xf]
    %v2042 = vld [vmem:[%s2004 + $0x94] sm:$0xf]
    %v2043 = vld [vmem:[%s2004 + $0x98] sm:$0xf]
    %v2044 = vld [vmem:[%s2004 + $0x9c] sm:$0xf]
    %v2045 = vld [vmem:[%s2004 + $0xa0] sm:$0xf]
    %v2046 = vld [vmem:[%s2004 + $0xa4] sm:$0xf]
    %v2047 = vld [vmem:[%s2004 + $0xa8] sm:$0xf]
    %v2048 = vld [vmem:[%s2004 + $0xac] sm:$0xf]
    %v2049 = vld [vmem:[%s2004 + $0xb0] sm:$0xf]
    %v2050 = vld [vmem:[%s2004 + $0xb4] sm:$0xf]
    %v2051 = vld [vmem:[%s2004 + $0xb8] sm:$0xf]
    %v2052 = vld [vmem:[%s2004 + $0xbc] sm:$0xf]
    %v2053 = vld [vmem:[%s2004 + $0xc0] sm:$0xf]
    %v2054 = vld [vmem:[%s2004 + $0xc4] sm:$0xf]
    %v2055 = vld [vmem:[%s2004 + $0xc8] sm:$0xf]
    %v2056 = vld [vmem:[%s2004 + $0xcc] sm:$0xf]
    %v2057 = vld [vmem:[%s2004 + $0xd0] sm:$0xf]
    %v2058 = vld [vmem:[%s2004 + $0xd4] sm:$0xf]
    %v2059 = vld [vmem:[%s2004 + $0xd8] sm:$0xf]
    %v2060 = vld [vmem:[%s2004 + $0xdc] sm:$0xf]
    %v2061 = vld [vmem:[%s2004 + $0xe0] sm:$0xf]
    %v2062 = vld [vmem:[%s2004 + $0xe4] sm:$0xf]
    %v2063 = vld [vmem:[%s2004 + $0xe8] sm:$0xf]
    %v2064 = vld [vmem:[%s2004 + $0xec] sm:$0xf]
    %v2065 = vld [vmem:[%s2004 + $0xf0] sm:$0xf]
    %v2066 = vld [vmem:[%s2004 + $0xf4] sm:$0xf]
    %v2067 = vld [vmem:[%s2004 + $0xf8] sm:$0xf]
    %v2068 = vld [vmem:[%s2004 + $0xfc] sm:$0xf]
    %v2069 = vld [vmem:[%s2004 + $0x100] sm:$0xf]
    %v2070 = vld [vmem:[%s2004 + $0x104] sm:$0xf]
    %v2071 = vld [vmem:[%s2004 + $0x108] sm:$0xf]
    %v2072 = vld [vmem:[%s2004 + $0x10c] sm:$0xf]
    %v2073 = vld [vmem:[%s2004 + $0x110] sm:$0xf]
    %v2074 = vld [vmem:[%s2004 + $0x114] sm:$0xf]
    %v2075 = vld [vmem:[%s2004 + $0x118] sm:$0xf]
    %v2076 = vld [vmem:[%s2004 + $0x11c] sm:$0xf]
    %v2077 = vld [vmem:[%s2004 + $0x120] sm:$0xf]
    %v2078 = vld [vmem:[%s2004 + $0x124] sm:$0xf]
    %v2079 = vld [vmem:[%s2004 + $0x128] sm:$0xf]
    %v2080 = vld [vmem:[%s2004 + $0x12c] sm:$0xf]
    %v2081 = vld [vmem:[%s2004 + $0x130] sm:$0xf]
    %v2082 = vld [vmem:[%s2004 + $0x134] sm:$0xf]
    %v2083 = vld [vmem:[%s2004 + $0x138] sm:$0xf]
    %v2084 = vld [vmem:[%s2004 + $0x13c] sm:$0xf]
    %v2085 = vld [vmem:[%s2004 + $0x140] sm:$0xf]
    %v2086 = vld [vmem:[%s2004 + $0x144] sm:$0xf]
    %v2087 = vld [vmem:[%s2004 + $0x148] sm:$0xf]
    %v2088 = vld [vmem:[%s2004 + $0x14c] sm:$0xf]
    %v2089 = vld [vmem:[%s2004 + $0x150] sm:$0xf]
    %v2090 = vld [vmem:[%s2004 + $0x154] sm:$0xf]
    %v2091 = vld [vmem:[%s2004 + $0x158] sm:$0xf]
    %v2092 = vld [vmem:[%s2004 + $0x15c] sm:$0xf]
    %v2093 = vld [vmem:[%s2004 + $0x160] sm:$0xf]
    %v2094 = vld [vmem:[%s2004 + $0x164] sm:$0xf]
    %v2095 = vld [vmem:[%s2004 + $0x168] sm:$0xf]
    %v2096 = vld [vmem:[%s2004 + $0x16c] sm:$0xf]
    %v2097 = vld [vmem:[%s2004 + $0x170] sm:$0xf]
    %v2098 = vld [vmem:[%s2004 + $0x174] sm:$0xf]
    %v2099 = vld [vmem:[%s2004 + $0x178] sm:$0xf]
    %v2100 = vld [vmem:[%s2004 + $0x17c] sm:$0xf]
    %v2101 = vld [vmem:[%s2004 + $0x180] sm:$0xf]
    %v2102 = vld [vmem:[%s2004 + $0x184] sm:$0xf]
    %v2103 = vld [vmem:[%s2004 + $0x188] sm:$0xf]
    %v2104 = vld [vmem:[%s2004 + $0x18c] sm:$0xf]
    %v2105 = vld [vmem:[%s2004 + $0x190] sm:$0xf]
    %v2106 = vld [vmem:[%s2004 + $0x194] sm:$0xf]
    %v2107 = vld [vmem:[%s2004 + $0x198] sm:$0xf]
    %v2108 = vld [vmem:[%s2004 + $0x19c] sm:$0xf]
    %v2109 = vld [vmem:[%s2004 + $0x1a0] sm:$0xf]
    %v2110 = vld [vmem:[%s2004 + $0x1a4] sm:$0xf]
    %v2111 = vld [vmem:[%s2004 + $0x1a8] sm:$0xf]
    %v2112 = vld [vmem:[%s2004 + $0x1ac] sm:$0xf]
    %v2113 = vld [vmem:[%s2004 + $0x1b0] sm:$0xf]
    %v2114 = vld [vmem:[%s2004 + $0x1b4] sm:$0xf]
    %v2115 = vld [vmem:[%s2004 + $0x1b8] sm:$0xf]
    %v2116 = vld [vmem:[%s2004 + $0x1bc] sm:$0xf]
    %v2117 = vld [vmem:[%s2004 + $0x1c0] sm:$0xf]
    %v2118 = vld [vmem:[%s2004 + $0x1c4] sm:$0xf]
    %v2119 = vld [vmem:[%s2004 + $0x1c8] sm:$0xf]
    %v2120 = vld [vmem:[%s2004 + $0x1cc] sm:$0xf]
    %v2121 = vld [vmem:[%s2004 + $0x1d0] sm:$0xf]
    %v2122 = vld [vmem:[%s2004 + $0x1d4] sm:$0xf]
    %v2123 = vld [vmem:[%s2004 + $0x1d8] sm:$0xf]
    %v2124 = vld [vmem:[%s2004 + $0x1dc] sm:$0xf]
    %v2125 = vld [vmem:[%s2004 + $0x1e0] sm:$0xf]
    %v2126 = vld [vmem:[%s2004 + $0x1e4] sm:$0xf]
    %v2127 = vld [vmem:[%s2004 + $0x1e8] sm:$0xf]
    %v2128 = vld [vmem:[%s2004 + $0x1ec] sm:$0xf]
    %v2129 = vld [vmem:[%s2004 + $0x1f0] sm:$0xf]
    %v2130 = vld [vmem:[%s2004 + $0x1f4] sm:$0xf]
    %v2131 = vld [vmem:[%s2004 + $0x1f8] sm:$0xf]
    %v2132 = vld [vmem:[%s2004 + $0x1fc] sm:$0xf]
    %v2133 = vld [vmem:[%s2004 + $0x200] sm:$0xf]
    %v2134 = vld [vmem:[%s2004 + $0x204] sm:$0xf]
    %v2135 = vld [vmem:[%s2004 + $0x208] sm:$0xf]
    %v2136 = vld [vmem:[%s2004 + $0x20c] sm:$0xf]
    %v2137 = vld [vmem:[%s2004 + $0x210] sm:$0xf]
    %v2138 = vld [vmem:[%s2004 + $0x214] sm:$0xf]
    %v2139 = vld [vmem:[%s2004 + $0x218] sm:$0xf]
    %v2140 = vld [vmem:[%s2004 + $0x21c] sm:$0xf]
    %v2141 = vld [vmem:[%s2004 + $0x220] sm:$0xf]
    %v2142 = vld [vmem:[%s2004 + $0x224] sm:$0xf]
    %v2143 = vld [vmem:[%s2004 + $0x228] sm:$0xf]
    %v2144 = vld [vmem:[%s2004 + $0x22c] sm:$0xf]
    %v2145 = vld [vmem:[%s2004 + $0x230] sm:$0xf]
    %v2146 = vld [vmem:[%s2004 + $0x234] sm:$0xf]
    %v2147 = vld [vmem:[%s2004 + $0x238] sm:$0xf]
    %v2148 = vld [vmem:[%s2004 + $0x23c] sm:$0xf]
    %v2149 = vld [vmem:[%s2004 + $0x240] sm:$0xf]
    %v2150 = vld [vmem:[%s2004 + $0x244] sm:$0xf]
    %v2151 = vld [vmem:[%s2004 + $0x248] sm:$0xf]
    %v2152 = vld [vmem:[%s2004 + $0x24c] sm:$0xf]
    %v2153 = vld [vmem:[%s2004 + $0x250] sm:$0xf]
    %v2154 = vld [vmem:[%s2004 + $0x254] sm:$0xf]
    %v2155 = vld [vmem:[%s2004 + $0x258] sm:$0xf]
    %v2156 = vld [vmem:[%s2004 + $0x25c] sm:$0xf]
    %v2157 = vld [vmem:[%s2004 + $0x260] sm:$0xf]
    %v2158 = vld [vmem:[%s2004 + $0x264] sm:$0xf]
    %v2159 = vld [vmem:[%s2004 + $0x268] sm:$0xf]
    %v2160 = vld [vmem:[%s2004 + $0x26c] sm:$0xf]
    %v2161 = vld [vmem:[%s2004 + $0x270] sm:$0xf]
    %v2162 = vld [vmem:[%s2004 + $0x274] sm:$0xf]
    %v2163 = vld [vmem:[%s2004 + $0x278] sm:$0xf]
    %v2164 = vld [vmem:[%s2004 + $0x27c] sm:$0xf]
    %v2165 = vld [vmem:[%s2004 + $0x280] sm:$0xf]
    %v2166 = vld [vmem:[%s2004 + $0x284] sm:$0xf]
    %v2167 = vld [vmem:[%s2004 + $0x288] sm:$0xf]
    %v2168 = vld [vmem:[%s2004 + $0x28c] sm:$0xf]
    %v2169 = vld [vmem:[%s2004 + $0x290] sm:$0xf]
    %v2170 = vld [vmem:[%s2004 + $0x294] sm:$0xf]
    %v2171 = vld [vmem:[%s2004 + $0x298] sm:$0xf]
    %v2172 = vld [vmem:[%s2004 + $0x29c] sm:$0xf]
    %v2173 = vld [vmem:[%s2004 + $0x2a0] sm:$0xf]
    %v2174 = vld [vmem:[%s2004 + $0x2a4] sm:$0xf]
    %v2175 = vld [vmem:[%s2004 + $0x2a8] sm:$0xf]
    %v2176 = vld [vmem:[%s2004 + $0x2ac] sm:$0xf]
    %v2177 = vld [vmem:[%s2004 + $0x2b0] sm:$0xf]
    %v2178 = vld [vmem:[%s2004 + $0x2b4] sm:$0xf]
    %v2179 = vld [vmem:[%s2004 + $0x2b8] sm:$0xf]
    %v2180 = vld [vmem:[%s2004 + $0x2bc] sm:$0xf]
    %v2181 = vld [vmem:[%s2004 + $0x2c0] sm:$0xf]
    %v2182 = vld [vmem:[%s2004 + $0x2c4] sm:$0xf]
    %v2183 = vld [vmem:[%s2004 + $0x2c8] sm:$0xf]
    %v2184 = vld [vmem:[%s2004 + $0x2cc] sm:$0xf]
    %v2185 = vld [vmem:[%s2004 + $0x2d0] sm:$0xf]
    %v2186 = vld [vmem:[%s2004 + $0x2d4] sm:$0xf]
    %v2187 = vld [vmem:[%s2004 + $0x2d8] sm:$0xf]
    %v2188 = vld [vmem:[%s2004 + $0x2dc] sm:$0xf]
    %v2189 = vld [vmem:[%s2004 + $0x2e0] sm:$0xf]
    %v2190 = vld [vmem:[%s2004 + $0x2e4] sm:$0xf]
    %v2191 = vld [vmem:[%s2004 + $0x2e8] sm:$0xf]
    %v2192 = vld [vmem:[%s2004 + $0x2ec] sm:$0xf]
    %v2193 = vld [vmem:[%s2004 + $0x2f0] sm:$0xf]
    %v2194 = vld [vmem:[%s2004 + $0x2f4] sm:$0xf]
    %v2195 = vld [vmem:[%s2004 + $0x2f8] sm:$0xf]
    %v2196 = vld [vmem:[%s2004 + $0x2fc] sm:$0xf]
    %v2197 = vld [vmem:[%s2004 + $0x300] sm:$0xf]
    %v2198 = vld [vmem:[%s2004 + $0x304] sm:$0xf]
    %v2199 = vld [vmem:[%s2004 + $0x308] sm:$0xf]
    %v2200 = vld [vmem:[%s2004 + $0x30c] sm:$0xf]
    %v2201 = vld [vmem:[%s2004 + $0x310] sm:$0xf]
    %v2202 = vld [vmem:[%s2004 + $0x314] sm:$0xf]
    %v2203 = vld [vmem:[%s2004 + $0x318] sm:$0xf]
    %v2204 = vld [vmem:[%s2004 + $0x31c] sm:$0xf]
    %v2205 = vld [vmem:[%s2004 + $0x320] sm:$0xf]
    %v2206 = vld [vmem:[%s2004 + $0x324] sm:$0xf]
    %v2207 = vld [vmem:[%s2004 + $0x328] sm:$0xf]
    %v2208 = vld [vmem:[%s2004 + $0x32c] sm:$0xf]
    %v2209 = vld [vmem:[%s2004 + $0x330] sm:$0xf]
    %v2210 = vld [vmem:[%s2004 + $0x334] sm:$0xf]
    %v2211 = vld [vmem:[%s2004 + $0x338] sm:$0xf]
    %v2212 = vld [vmem:[%s2004 + $0x33c] sm:$0xf]
    %v2213 = vld [vmem:[%s2004 + $0x340] sm:$0xf]
    %v2214 = vld [vmem:[%s2004 + $0x344] sm:$0xf]
    %v2215 = vld [vmem:[%s2004 + $0x348] sm:$0xf]
    %v2216 = vld [vmem:[%s2004 + $0x34c] sm:$0xf]
    %v2217 = vld [vmem:[%s2004 + $0x350] sm:$0xf]
    %v2218 = vld [vmem:[%s2004 + $0x354] sm:$0xf]
    %v2219 = vld [vmem:[%s2004 + $0x358] sm:$0xf]
    %v2220 = vld [vmem:[%s2004 + $0x35c] sm:$0xf]
    %v2221 = vld [vmem:[%s2004 + $0x360] sm:$0xf]
    %v2222 = vld [vmem:[%s2004 + $0x364] sm:$0xf]
    %v2223 = vld [vmem:[%s2004 + $0x368] sm:$0xf]
    %v2224 = vld [vmem:[%s2004 + $0x36c] sm:$0xf]
    %v2225 = vld [vmem:[%s2004 + $0x370] sm:$0xf]
    %v2226 = vld [vmem:[%s2004 + $0x374] sm:$0xf]
    %v2227 = vld [vmem:[%s2004 + $0x378] sm:$0xf]
    %v2228 = vld [vmem:[%s2004 + $0x37c] sm:$0xf]
    %v2229 = vld [vmem:[%s2004 + $0x380] sm:$0xf]
    %v2230 = vld [vmem:[%s2004 + $0x384] sm:$0xf]
    %v2231 = vld [vmem:[%s2004 + $0x388] sm:$0xf]
    %v2232 = vld [vmem:[%s2004 + $0x38c] sm:$0xf]
    %v2233 = vld [vmem:[%s2004 + $0x390] sm:$0xf]
    %v2234 = vld [vmem:[%s2004 + $0x394] sm:$0xf]
    %v2235 = vld [vmem:[%s2004 + $0x398] sm:$0xf]
    %v2236 = vld [vmem:[%s2004 + $0x39c] sm:$0xf]
    %v2237 = vld [vmem:[%s2004 + $0x3a0] sm:$0xf]
    %v2238 = vld [vmem:[%s2004 + $0x3a4] sm:$0xf]
    %v2239 = vld [vmem:[%s2004 + $0x3a8] sm:$0xf]
    %v2240 = vld [vmem:[%s2004 + $0x3ac] sm:$0xf]
    %v2241 = vld [vmem:[%s2004 + $0x3b0] sm:$0xf]
    %v2242 = vld [vmem:[%s2004 + $0x3b4] sm:$0xf]
    %v2243 = vld [vmem:[%s2004 + $0x3b8] sm:$0xf]
    %v2244 = vld [vmem:[%s2004 + $0x3bc] sm:$0xf]
    %v2245 = vld [vmem:[%s2004 + $0x3c0] sm:$0xf]
    %v2246 = vld [vmem:[%s2004 + $0x3c4] sm:$0xf]
    %v2247 = vld [vmem:[%s2004 + $0x3c8] sm:$0xf]
    %v2248 = vld [vmem:[%s2004 + $0x3cc] sm:$0xf]
    %v2249 = vld [vmem:[%s2004 + $0x3d0] sm:$0xf]
    %v2250 = vld [vmem:[%s2004 + $0x3d4] sm:$0xf]
    %v2251 = vld [vmem:[%s2004 + $0x3d8] sm:$0xf]
    %v2252 = vld [vmem:[%s2004 + $0x3dc] sm:$0xf]
    %v2253 = vld [vmem:[%s2004 + $0x3e0] sm:$0xf]
    %v2254 = vld [vmem:[%s2004 + $0x3e4] sm:$0xf]
    %v2255 = vld [vmem:[%s2004 + $0x3e8] sm:$0xf]
    %v2256 = vld [vmem:[%s2004 + $0x3ec] sm:$0xf]
    %v2257 = vld [vmem:[%s2004 + $0x3f0] sm:$0xf]
    %v2258 = vld [vmem:[%s2004 + $0x3f4] sm:$0xf]
    %v2259 = vld [vmem:[%s2004 + $0x3f8] sm:$0xf]
    %v2260 = vld [vmem:[%s2004 + $0x3fc] sm:$0xf]
    %s2261 = scalar_lea.vmem %s9, %s78
    %v2262 = vld [vmem:[%s2261] sm:$0x1]
    %v2264 = vlaneseq
    %v2265 = vshrl.u32 %v2264, 7
    %v2266 = vsub.s32 0, %v2265
    %v2267 = vrot.slane %v2262, %v2266
    %v2525 = vunpack.c.l.b16 %v2005
    %v2526 = vunpack.c.l.b16 %v2006
    %v2527 = vunpack.c.l.b16 %v2007
    %v2528 = vunpack.c.l.b16 %v2008
    %v2529 = vunpack.c.l.b16 %v2009
    %v2530 = vunpack.c.l.b16 %v2010
    %v2531 = vunpack.c.l.b16 %v2011
    %v2532 = vunpack.c.l.b16 %v2012
    %v2533 = vunpack.c.l.b16 %v2013
    %v2534 = vunpack.c.l.b16 %v2014
    %v2535 = vunpack.c.l.b16 %v2015
    %v2536 = vunpack.c.l.b16 %v2016
    %v2537 = vunpack.c.l.b16 %v2017
    %v2538 = vunpack.c.l.b16 %v2018
    %v2539 = vunpack.c.l.b16 %v2019
    %v2540 = vunpack.c.l.b16 %v2020
    %v2541 = vunpack.c.l.b16 %v2021
    %v2542 = vunpack.c.l.b16 %v2022
    %v2543 = vunpack.c.l.b16 %v2023
    %v2544 = vunpack.c.l.b16 %v2024
    %v2545 = vunpack.c.l.b16 %v2025
    %v2546 = vunpack.c.l.b16 %v2026
    %v2547 = vunpack.c.l.b16 %v2027
    %v2548 = vunpack.c.l.b16 %v2028
    %v2549 = vunpack.c.l.b16 %v2029
    %v2550 = vunpack.c.l.b16 %v2030
    %v2551 = vunpack.c.l.b16 %v2031
    %v2552 = vunpack.c.l.b16 %v2032
    %v2553 = vunpack.c.l.b16 %v2033
    %v2554 = vunpack.c.l.b16 %v2034
    %v2555 = vunpack.c.l.b16 %v2035
    %v2556 = vunpack.c.l.b16 %v2036
    %v2557 = vunpack.c.l.b16 %v2037
    %v2558 = vunpack.c.l.b16 %v2038
    %v2559 = vunpack.c.l.b16 %v2039
    %v2560 = vunpack.c.l.b16 %v2040
    %v2561 = vunpack.c.l.b16 %v2041
    %v2562 = vunpack.c.l.b16 %v2042
    %v2563 = vunpack.c.l.b16 %v2043
    %v2564 = vunpack.c.l.b16 %v2044
    %v2565 = vunpack.c.l.b16 %v2045
    %v2566 = vunpack.c.l.b16 %v2046
    %v2567 = vunpack.c.l.b16 %v2047
    %v2568 = vunpack.c.l.b16 %v2048
    %v2569 = vunpack.c.l.b16 %v2049
    %v2570 = vunpack.c.l.b16 %v2050
    %v2571 = vunpack.c.l.b16 %v2051
    %v2572 = vunpack.c.l.b16 %v2052
    %v2573 = vunpack.c.l.b16 %v2053
    %v2574 = vunpack.c.l.b16 %v2054
    %v2575 = vunpack.c.l.b16 %v2055
    %v2576 = vunpack.c.l.b16 %v2056
    %v2577 = vunpack.c.l.b16 %v2057
    %v2578 = vunpack.c.l.b16 %v2058
    %v2579 = vunpack.c.l.b16 %v2059
    %v2580 = vunpack.c.l.b16 %v2060
    %v2581 = vunpack.c.l.b16 %v2061
    %v2582 = vunpack.c.l.b16 %v2062
    %v2583 = vunpack.c.l.b16 %v2063
    %v2584 = vunpack.c.l.b16 %v2064
    %v2585 = vunpack.c.l.b16 %v2065
    %v2586 = vunpack.c.l.b16 %v2066
    %v2587 = vunpack.c.l.b16 %v2067
    %v2588 = vunpack.c.l.b16 %v2068
    %v2589 = vunpack.c.l.b16 %v2069
    %v2590 = vunpack.c.l.b16 %v2070
    %v2591 = vunpack.c.l.b16 %v2071
    %v2592 = vunpack.c.l.b16 %v2072
    %v2593 = vunpack.c.l.b16 %v2073
    %v2594 = vunpack.c.l.b16 %v2074
    %v2595 = vunpack.c.l.b16 %v2075
    %v2596 = vunpack.c.l.b16 %v2076
    %v2597 = vunpack.c.l.b16 %v2077
    %v2598 = vunpack.c.l.b16 %v2078
    %v2599 = vunpack.c.l.b16 %v2079
    %v2600 = vunpack.c.l.b16 %v2080
    %v2601 = vunpack.c.l.b16 %v2081
    %v2602 = vunpack.c.l.b16 %v2082
    %v2603 = vunpack.c.l.b16 %v2083
    %v2604 = vunpack.c.l.b16 %v2084
    %v2605 = vunpack.c.l.b16 %v2085
    %v2606 = vunpack.c.l.b16 %v2086
    %v2607 = vunpack.c.l.b16 %v2087
    %v2608 = vunpack.c.l.b16 %v2088
    %v2609 = vunpack.c.l.b16 %v2089
    %v2610 = vunpack.c.l.b16 %v2090
    %v2611 = vunpack.c.l.b16 %v2091
    %v2612 = vunpack.c.l.b16 %v2092
    %v2613 = vunpack.c.l.b16 %v2093
    %v2614 = vunpack.c.l.b16 %v2094
    %v2615 = vunpack.c.l.b16 %v2095
    %v2616 = vunpack.c.l.b16 %v2096
    %v2617 = vunpack.c.l.b16 %v2097
    %v2618 = vunpack.c.l.b16 %v2098
    %v2619 = vunpack.c.l.b16 %v2099
    %v2620 = vunpack.c.l.b16 %v2100
    %v2621 = vunpack.c.l.b16 %v2101
    %v2622 = vunpack.c.l.b16 %v2102
    %v2623 = vunpack.c.l.b16 %v2103
    %v2624 = vunpack.c.l.b16 %v2104
    %v2625 = vunpack.c.l.b16 %v2105
    %v2626 = vunpack.c.l.b16 %v2106
    %v2627 = vunpack.c.l.b16 %v2107
    %v2628 = vunpack.c.l.b16 %v2108
    %v2629 = vunpack.c.l.b16 %v2109
    %v2630 = vunpack.c.l.b16 %v2110
    %v2631 = vunpack.c.l.b16 %v2111
    %v2632 = vunpack.c.l.b16 %v2112
    %v2633 = vunpack.c.l.b16 %v2113
    %v2634 = vunpack.c.l.b16 %v2114
    %v2635 = vunpack.c.l.b16 %v2115
    %v2636 = vunpack.c.l.b16 %v2116
    %v2637 = vunpack.c.l.b16 %v2117
    %v2638 = vunpack.c.l.b16 %v2118
    %v2639 = vunpack.c.l.b16 %v2119
    %v2640 = vunpack.c.l.b16 %v2120
    %v2641 = vunpack.c.l.b16 %v2121
    %v2642 = vunpack.c.l.b16 %v2122
    %v2643 = vunpack.c.l.b16 %v2123
    %v2644 = vunpack.c.l.b16 %v2124
    %v2645 = vunpack.c.l.b16 %v2125
    %v2646 = vunpack.c.l.b16 %v2126
    %v2647 = vunpack.c.l.b16 %v2127
    %v2648 = vunpack.c.l.b16 %v2128
    %v2649 = vunpack.c.l.b16 %v2129
    %v2650 = vunpack.c.l.b16 %v2130
    %v2651 = vunpack.c.l.b16 %v2131
    %v2652 = vunpack.c.l.b16 %v2132
    %v2653 = vunpack.c.l.b16 %v2133
    %v2654 = vunpack.c.l.b16 %v2134
    %v2655 = vunpack.c.l.b16 %v2135
    %v2656 = vunpack.c.l.b16 %v2136
    %v2657 = vunpack.c.l.b16 %v2137
    %v2658 = vunpack.c.l.b16 %v2138
    %v2659 = vunpack.c.l.b16 %v2139
    %v2660 = vunpack.c.l.b16 %v2140
    %v2661 = vunpack.c.l.b16 %v2141
    %v2662 = vunpack.c.l.b16 %v2142
    %v2663 = vunpack.c.l.b16 %v2143
    %v2664 = vunpack.c.l.b16 %v2144
    %v2665 = vunpack.c.l.b16 %v2145
    %v2666 = vunpack.c.l.b16 %v2146
    %v2667 = vunpack.c.l.b16 %v2147
    %v2668 = vunpack.c.l.b16 %v2148
    %v2669 = vunpack.c.l.b16 %v2149
    %v2670 = vunpack.c.l.b16 %v2150
    %v2671 = vunpack.c.l.b16 %v2151
    %v2672 = vunpack.c.l.b16 %v2152
    %v2673 = vunpack.c.l.b16 %v2153
    %v2674 = vunpack.c.l.b16 %v2154
    %v2675 = vunpack.c.l.b16 %v2155
    %v2676 = vunpack.c.l.b16 %v2156
    %v2677 = vunpack.c.l.b16 %v2157
    %v2678 = vunpack.c.l.b16 %v2158
    %v2679 = vunpack.c.l.b16 %v2159
    %v2680 = vunpack.c.l.b16 %v2160
    %v2681 = vunpack.c.l.b16 %v2161
    %v2682 = vunpack.c.l.b16 %v2162
    %v2683 = vunpack.c.l.b16 %v2163
    %v2684 = vunpack.c.l.b16 %v2164
    %v2685 = vunpack.c.l.b16 %v2165
    %v2686 = vunpack.c.l.b16 %v2166
    %v2687 = vunpack.c.l.b16 %v2167
    %v2688 = vunpack.c.l.b16 %v2168
    %v2689 = vunpack.c.l.b16 %v2169
    %v2690 = vunpack.c.l.b16 %v2170
    %v2691 = vunpack.c.l.b16 %v2171
    %v2692 = vunpack.c.l.b16 %v2172
    %v2693 = vunpack.c.l.b16 %v2173
    %v2694 = vunpack.c.l.b16 %v2174
    %v2695 = vunpack.c.l.b16 %v2175
    %v2696 = vunpack.c.l.b16 %v2176
    %v2697 = vunpack.c.l.b16 %v2177
    %v2698 = vunpack.c.l.b16 %v2178
    %v2699 = vunpack.c.l.b16 %v2179
    %v2700 = vunpack.c.l.b16 %v2180
    %v2701 = vunpack.c.l.b16 %v2181
    %v2702 = vunpack.c.l.b16 %v2182
    %v2703 = vunpack.c.l.b16 %v2183
    %v2704 = vunpack.c.l.b16 %v2184
    %v2705 = vunpack.c.l.b16 %v2185
    %v2706 = vunpack.c.l.b16 %v2186
    %v2707 = vunpack.c.l.b16 %v2187
    %v2708 = vunpack.c.l.b16 %v2188
    %v2709 = vunpack.c.l.b16 %v2189
    %v2710 = vunpack.c.l.b16 %v2190
    %v2711 = vunpack.c.l.b16 %v2191
    %v2712 = vunpack.c.l.b16 %v2192
    %v2713 = vunpack.c.l.b16 %v2193
    %v2714 = vunpack.c.l.b16 %v2194
    %v2715 = vunpack.c.l.b16 %v2195
    %v2716 = vunpack.c.l.b16 %v2196
    %v2717 = vunpack.c.l.b16 %v2197
    %v2718 = vunpack.c.l.b16 %v2198
    %v2719 = vunpack.c.l.b16 %v2199
    %v2720 = vunpack.c.l.b16 %v2200
    %v2721 = vunpack.c.l.b16 %v2201
    %v2722 = vunpack.c.l.b16 %v2202
    %v2723 = vunpack.c.l.b16 %v2203
    %v2724 = vunpack.c.l.b16 %v2204
    %v2725 = vunpack.c.l.b16 %v2205
    %v2726 = vunpack.c.l.b16 %v2206
    %v2727 = vunpack.c.l.b16 %v2207
    %v2728 = vunpack.c.l.b16 %v2208
    %v2729 = vunpack.c.l.b16 %v2209
    %v2730 = vunpack.c.l.b16 %v2210
    %v2731 = vunpack.c.l.b16 %v2211
    %v2732 = vunpack.c.l.b16 %v2212
    %v2733 = vunpack.c.l.b16 %v2213
    %v2734 = vunpack.c.l.b16 %v2214
    %v2735 = vunpack.c.l.b16 %v2215
    %v2736 = vunpack.c.l.b16 %v2216
    %v2737 = vunpack.c.l.b16 %v2217
    %v2738 = vunpack.c.l.b16 %v2218
    %v2739 = vunpack.c.l.b16 %v2219
    %v2740 = vunpack.c.l.b16 %v2220
    %v2741 = vunpack.c.l.b16 %v2221
    %v2742 = vunpack.c.l.b16 %v2222
    %v2743 = vunpack.c.l.b16 %v2223
    %v2744 = vunpack.c.l.b16 %v2224
    %v2745 = vunpack.c.l.b16 %v2225
    %v2746 = vunpack.c.l.b16 %v2226
    %v2747 = vunpack.c.l.b16 %v2227
    %v2748 = vunpack.c.l.b16 %v2228
    %v2749 = vunpack.c.l.b16 %v2229
    %v2750 = vunpack.c.l.b16 %v2230
    %v2751 = vunpack.c.l.b16 %v2231
    %v2752 = vunpack.c.l.b16 %v2232
    %v2753 = vunpack.c.l.b16 %v2233
    %v2754 = vunpack.c.l.b16 %v2234
    %v2755 = vunpack.c.l.b16 %v2235
    %v2756 = vunpack.c.l.b16 %v2236
    %v2757 = vunpack.c.l.b16 %v2237
    %v2758 = vunpack.c.l.b16 %v2238
    %v2759 = vunpack.c.l.b16 %v2239
    %v2760 = vunpack.c.l.b16 %v2240
    %v2761 = vunpack.c.l.b16 %v2241
    %v2762 = vunpack.c.l.b16 %v2242
    %v2763 = vunpack.c.l.b16 %v2243
    %v2764 = vunpack.c.l.b16 %v2244
    %v2765 = vunpack.c.l.b16 %v2245
    %v2766 = vunpack.c.l.b16 %v2246
    %v2767 = vunpack.c.l.b16 %v2247
    %v2768 = vunpack.c.l.b16 %v2248
    %v2769 = vunpack.c.l.b16 %v2249
    %v2770 = vunpack.c.l.b16 %v2250
    %v2771 = vunpack.c.l.b16 %v2251
    %v2772 = vunpack.c.l.b16 %v2252
    %v2773 = vunpack.c.l.b16 %v2253
    %v2774 = vunpack.c.l.b16 %v2254
    %v2775 = vunpack.c.l.b16 %v2255
    %v2776 = vunpack.c.l.b16 %v2256
    %v2777 = vunpack.c.l.b16 %v2257
    %v2778 = vunpack.c.l.b16 %v2258
    %v2779 = vunpack.c.l.b16 %v2259
    %v2780 = vunpack.c.l.b16 %v2260
    %v2781 = vpack.c.b16 %v2526, %v2525
    %v2782 = vpack.c.b16 %v2528, %v2527
    %v2783 = vpack.c.b16 %v2530, %v2529
    %v2784 = vpack.c.b16 %v2532, %v2531
    %v2785 = vpack.c.b16 %v2534, %v2533
    %v2786 = vpack.c.b16 %v2536, %v2535
    %v2787 = vpack.c.b16 %v2538, %v2537
    %v2788 = vpack.c.b16 %v2540, %v2539
    %v2789 = vpack.c.b16 %v2542, %v2541
    %v2790 = vpack.c.b16 %v2544, %v2543
    %v2791 = vpack.c.b16 %v2546, %v2545
    %v2792 = vpack.c.b16 %v2548, %v2547
    %v2793 = vpack.c.b16 %v2550, %v2549
    %v2794 = vpack.c.b16 %v2552, %v2551
    %v2795 = vpack.c.b16 %v2554, %v2553
    %v2796 = vpack.c.b16 %v2556, %v2555
    %v2797 = vpack.c.b16 %v2558, %v2557
    %v2798 = vpack.c.b16 %v2560, %v2559
    %v2799 = vpack.c.b16 %v2562, %v2561
    %v2800 = vpack.c.b16 %v2564, %v2563
    %v2801 = vpack.c.b16 %v2566, %v2565
    %v2802 = vpack.c.b16 %v2568, %v2567
    %v2803 = vpack.c.b16 %v2570, %v2569
    %v2804 = vpack.c.b16 %v2572, %v2571
    %v2805 = vpack.c.b16 %v2574, %v2573
    %v2806 = vpack.c.b16 %v2576, %v2575
    %v2807 = vpack.c.b16 %v2578, %v2577
    %v2808 = vpack.c.b16 %v2580, %v2579
    %v2809 = vpack.c.b16 %v2582, %v2581
    %v2810 = vpack.c.b16 %v2584, %v2583
    %v2811 = vpack.c.b16 %v2586, %v2585
    %v2812 = vpack.c.b16 %v2588, %v2587
    %v2813 = vpack.c.b16 %v2590, %v2589
    %v2814 = vpack.c.b16 %v2592, %v2591
    %v2815 = vpack.c.b16 %v2594, %v2593
    %v2816 = vpack.c.b16 %v2596, %v2595
    %v2817 = vpack.c.b16 %v2598, %v2597
    %v2818 = vpack.c.b16 %v2600, %v2599
    %v2819 = vpack.c.b16 %v2602, %v2601
    %v2820 = vpack.c.b16 %v2604, %v2603
    %v2821 = vpack.c.b16 %v2606, %v2605
    %v2822 = vpack.c.b16 %v2608, %v2607
    %v2823 = vpack.c.b16 %v2610, %v2609
    %v2824 = vpack.c.b16 %v2612, %v2611
    %v2825 = vpack.c.b16 %v2614, %v2613
    %v2826 = vpack.c.b16 %v2616, %v2615
    %v2827 = vpack.c.b16 %v2618, %v2617
    %v2828 = vpack.c.b16 %v2620, %v2619
    %v2829 = vpack.c.b16 %v2622, %v2621
    %v2830 = vpack.c.b16 %v2624, %v2623
    %v2831 = vpack.c.b16 %v2626, %v2625
    %v2832 = vpack.c.b16 %v2628, %v2627
    %v2833 = vpack.c.b16 %v2630, %v2629
    %v2834 = vpack.c.b16 %v2632, %v2631
    %v2835 = vpack.c.b16 %v2634, %v2633
    %v2836 = vpack.c.b16 %v2636, %v2635
    %v2837 = vpack.c.b16 %v2638, %v2637
    %v2838 = vpack.c.b16 %v2640, %v2639
    %v2839 = vpack.c.b16 %v2642, %v2641
    %v2840 = vpack.c.b16 %v2644, %v2643
    %v2841 = vpack.c.b16 %v2646, %v2645
    %v2842 = vpack.c.b16 %v2648, %v2647
    %v2843 = vpack.c.b16 %v2650, %v2649
    %v2844 = vpack.c.b16 %v2652, %v2651
    %v2845 = vpack.c.b16 %v2654, %v2653
    %v2846 = vpack.c.b16 %v2656, %v2655
    %v2847 = vpack.c.b16 %v2658, %v2657
    %v2848 = vpack.c.b16 %v2660, %v2659
    %v2849 = vpack.c.b16 %v2662, %v2661
    %v2850 = vpack.c.b16 %v2664, %v2663
    %v2851 = vpack.c.b16 %v2666, %v2665
    %v2852 = vpack.c.b16 %v2668, %v2667
    %v2853 = vpack.c.b16 %v2670, %v2669
    %v2854 = vpack.c.b16 %v2672, %v2671
    %v2855 = vpack.c.b16 %v2674, %v2673
    %v2856 = vpack.c.b16 %v2676, %v2675
    %v2857 = vpack.c.b16 %v2678, %v2677
    %v2858 = vpack.c.b16 %v2680, %v2679
    %v2859 = vpack.c.b16 %v2682, %v2681
    %v2860 = vpack.c.b16 %v2684, %v2683
    %v2861 = vpack.c.b16 %v2686, %v2685
    %v2862 = vpack.c.b16 %v2688, %v2687
    %v2863 = vpack.c.b16 %v2690, %v2689
    %v2864 = vpack.c.b16 %v2692, %v2691
    %v2865 = vpack.c.b16 %v2694, %v2693
    %v2866 = vpack.c.b16 %v2696, %v2695
    %v2867 = vpack.c.b16 %v2698, %v2697
    %v2868 = vpack.c.b16 %v2700, %v2699
    %v2869 = vpack.c.b16 %v2702, %v2701
    %v2870 = vpack.c.b16 %v2704, %v2703
    %v2871 = vpack.c.b16 %v2706, %v2705
    %v2872 = vpack.c.b16 %v2708, %v2707
    %v2873 = vpack.c.b16 %v2710, %v2709
    %v2874 = vpack.c.b16 %v2712, %v2711
    %v2875 = vpack.c.b16 %v2714, %v2713
    %v2876 = vpack.c.b16 %v2716, %v2715
    %v2877 = vpack.c.b16 %v2718, %v2717
    %v2878 = vpack.c.b16 %v2720, %v2719
    %v2879 = vpack.c.b16 %v2722, %v2721
    %v2880 = vpack.c.b16 %v2724, %v2723
    %v2881 = vpack.c.b16 %v2726, %v2725
    %v2882 = vpack.c.b16 %v2728, %v2727
    %v2883 = vpack.c.b16 %v2730, %v2729
    %v2884 = vpack.c.b16 %v2732, %v2731
    %v2885 = vpack.c.b16 %v2734, %v2733
    %v2886 = vpack.c.b16 %v2736, %v2735
    %v2887 = vpack.c.b16 %v2738, %v2737
    %v2888 = vpack.c.b16 %v2740, %v2739
    %v2889 = vpack.c.b16 %v2742, %v2741
    %v2890 = vpack.c.b16 %v2744, %v2743
    %v2891 = vpack.c.b16 %v2746, %v2745
    %v2892 = vpack.c.b16 %v2748, %v2747
    %v2893 = vpack.c.b16 %v2750, %v2749
    %v2894 = vpack.c.b16 %v2752, %v2751
    %v2895 = vpack.c.b16 %v2754, %v2753
    %v2896 = vpack.c.b16 %v2756, %v2755
    %v2897 = vpack.c.b16 %v2758, %v2757
    %v2898 = vpack.c.b16 %v2760, %v2759
    %v2899 = vpack.c.b16 %v2762, %v2761
    %v2900 = vpack.c.b16 %v2764, %v2763
    %v2901 = vpack.c.b16 %v2766, %v2765
    %v2902 = vpack.c.b16 %v2768, %v2767
    %v2903 = vpack.c.b16 %v2770, %v2769
    %v2904 = vpack.c.b16 %v2772, %v2771
    %v2905 = vpack.c.b16 %v2774, %v2773
    %v2906 = vpack.c.b16 %v2776, %v2775
    %v2907 = vpack.c.b16 %v2778, %v2777
    %v2908 = vpack.c.b16 %v2780, %v2779
    %3037 = vmatprep.subr.bf16.mxu0 0
    %3038 = vmatpush1.bf16.msra.mxu0 %v2781
    %3039 = vmatprep.subr.bf16.mxu0 0
    %3040 = vmatpush1.bf16.msra.mxu0 %v2782
    %3041 = vmatprep.subr.bf16.mxu0 0
    %3042 = vmatpush1.bf16.msra.mxu0 %v2783
    %3043 = vmatprep.subr.bf16.mxu0 0
    %3044 = vmatpush1.bf16.msra.mxu0 %v2784
    %3045 = vmatprep.subr.bf16.mxu0 0
    %3046 = vmatpush1.bf16.msra.mxu0 %v2785
    %3047 = vmatprep.subr.bf16.mxu0 0
    %3048 = vmatpush1.bf16.msra.mxu0 %v2786
    %3049 = vmatprep.subr.bf16.mxu0 0
    %3050 = vmatpush1.bf16.msra.mxu0 %v2787
    %3051 = vmatprep.subr.bf16.mxu0 0
    %3052 = vmatpush1.bf16.msra.mxu0 %v2788
    %3053 = vmatprep.subr.bf16.mxu0 0
    %3054 = vmatpush1.bf16.msra.mxu0 %v2789
    %3055 = vmatprep.subr.bf16.mxu0 0
    %3056 = vmatpush1.bf16.msra.mxu0 %v2790
    %3057 = vmatprep.subr.bf16.mxu0 0
    %3058 = vmatpush1.bf16.msra.mxu0 %v2791
    %3059 = vmatprep.subr.bf16.mxu0 0
    %3060 = vmatpush1.bf16.msra.mxu0 %v2792
    %3061 = vmatprep.subr.bf16.mxu0 0
    %3062 = vmatpush1.bf16.msra.mxu0 %v2793
    %3063 = vmatprep.subr.bf16.mxu0 0
    %3064 = vmatpush1.bf16.msra.mxu0 %v2794
    %3065 = vmatprep.subr.bf16.mxu0 0
    %3066 = vmatpush1.bf16.msra.mxu0 %v2795
    %3067 = vmatprep.subr.bf16.mxu0 0
    %3068 = vmatpush1.bf16.msra.mxu0 %v2796
    %3069 = vmatprep.mubr.bf16.mxu0 %v1987
    %3070 = vmatmul.mubr.bf16.gmra.mrb[0].mxu0 %v1986
    %v3071 = vpop.f32.mrb[0].mxu0
    %v3072 = vadd.f32 %v2267, %v3071
    %v3073 = vpop.f32.mrb[0].mxu0
    %v3074 = vpop.f32.mrb[0].mxu0
    %v3075 = vadd.f32 %v2267, %v3074
    %v3076 = vpop.f32.mrb[0].mxu0
    %3077 = vdwg.mxu0
    %3078 = vmatprep.subr.bf16.mxu0 0
    %3079 = vmatpush1.bf16.msra.mxu0 %v2797
    %3080 = vmatprep.subr.bf16.mxu0 0
    %3081 = vmatpush1.bf16.msra.mxu0 %v2798
    %3082 = vmatprep.subr.bf16.mxu0 0
    %3083 = vmatpush1.bf16.msra.mxu0 %v2799
    %3084 = vmatprep.subr.bf16.mxu0 0
    %3085 = vmatpush1.bf16.msra.mxu0 %v2800
    %3086 = vmatprep.subr.bf16.mxu0 0
    %3087 = vmatpush1.bf16.msra.mxu0 %v2801
    %3088 = vmatprep.subr.bf16.mxu0 0
    %3089 = vmatpush1.bf16.msra.mxu0 %v2802
    %3090 = vmatprep.subr.bf16.mxu0 0
    %3091 = vmatpush1.bf16.msra.mxu0 %v2803
    %3092 = vmatprep.subr.bf16.mxu0 0
    %3093 = vmatpush1.bf16.msra.mxu0 %v2804
    %3094 = vmatprep.subr.bf16.mxu0 0
    %3095 = vmatpush1.bf16.msra.mxu0 %v2805
    %3096 = vmatprep.subr.bf16.mxu0 0
    %3097 = vmatpush1.bf16.msra.mxu0 %v2806
    %3098 = vmatprep.subr.bf16.mxu0 0
    %3099 = vmatpush1.bf16.msra.mxu0 %v2807
    %3100 = vmatprep.subr.bf16.mxu0 0
    %3101 = vmatpush1.bf16.msra.mxu0 %v2808
    %3102 = vmatprep.subr.bf16.mxu0 0
    %3103 = vmatpush1.bf16.msra.mxu0 %v2809
    %3104 = vmatprep.subr.bf16.mxu0 0
    %3105 = vmatpush1.bf16.msra.mxu0 %v2810
    %3106 = vmatprep.subr.bf16.mxu0 0
    %3107 = vmatpush1.bf16.msra.mxu0 %v2811
    %3108 = vmatprep.subr.bf16.mxu0 0
    %3109 = vmatpush1.bf16.msra.mxu0 %v2812
    %3110 = vmatprep.mubr.bf16.mxu0 %v1989
    %3111 = vmatmul.mubr.bf16.gmra.mrb[0].mxu0 %v1988
    %v3112 = vpop.f32.mrb[0].mxu0
    %v3113 = vadd.f32 %v3072, %v3112
    %v3114 = vpop.f32.mrb[0].mxu0
    %v3115 = vpop.f32.mrb[0].mxu0
    %v3116 = vadd.f32 %v3075, %v3115
    %v3117 = vpop.f32.mrb[0].mxu0
    %3118 = vdwg.mxu0
    %3119 = vmatprep.subr.bf16.mxu0 0
    %3120 = vmatpush1.bf16.msra.mxu0 %v2813
    %3121 = vmatprep.subr.bf16.mxu0 0
    %3122 = vmatpush1.bf16.msra.mxu0 %v2814
    %3123 = vmatprep.subr.bf16.mxu0 0
    %3124 = vmatpush1.bf16.msra.mxu0 %v2815
    %3125 = vmatprep.subr.bf16.mxu0 0
    %3126 = vmatpush1.bf16.msra.mxu0 %v2816
    %3127 = vmatprep.subr.bf16.mxu0 0
    %3128 = vmatpush1.bf16.msra.mxu0 %v2817
    %3129 = vmatprep.subr.bf16.mxu0 0
    %3130 = vmatpush1.bf16.msra.mxu0 %v2818
    %3131 = vmatprep.subr.bf16.mxu0 0
    %3132 = vmatpush1.bf16.msra.mxu0 %v2819
    %3133 = vmatprep.subr.bf16.mxu0 0
    %3134 = vmatpush1.bf16.msra.mxu0 %v2820
    %3135 = vmatprep.subr.bf16.mxu0 0
    %3136 = vmatpush1.bf16.msra.mxu0 %v2821
    %3137 = vmatprep.subr.bf16.mxu0 0
    %3138 = vmatpush1.bf16.msra.mxu0 %v2822
    %3139 = vmatprep.subr.bf16.mxu0 0
    %3140 = vmatpush1.bf16.msra.mxu0 %v2823
    %3141 = vmatprep.subr.bf16.mxu0 0
    %3142 = vmatpush1.bf16.msra.mxu0 %v2824
    %3143 = vmatprep.subr.bf16.mxu0 0
    %3144 = vmatpush1.bf16.msra.mxu0 %v2825
    %3145 = vmatprep.subr.bf16.mxu0 0
    %3146 = vmatpush1.bf16.msra.mxu0 %v2826
    %3147 = vmatprep.subr.bf16.mxu0 0
    %3148 = vmatpush1.bf16.msra.mxu0 %v2827
    %3149 = vmatprep.subr.bf16.mxu0 0
    %3150 = vmatpush1.bf16.msra.mxu0 %v2828
    %3151 = vmatprep.mubr.bf16.mxu0 %v1991
    %3152 = vmatmul.mubr.bf16.gmra.mrb[0].mxu0 %v1990
    %v3153 = vpop.f32.mrb[0].mxu0
    %v3154 = vadd.f32 %v3113, %v3153
    %v3155 = vpop.f32.mrb[0].mxu0
    %v3156 = vpop.f32.mrb[0].mxu0
    %v3157 = vadd.f32 %v3116, %v3156
    %v3158 = vpop.f32.mrb[0].mxu0
    %3159 = vdwg.mxu0
    %3160 = vmatprep.subr.bf16.mxu0 0
    %3161 = vmatpush1.bf16.msra.mxu0 %v2829
    %3162 = vmatprep.subr.bf16.mxu0 0
    %3163 = vmatpush1.bf16.msra.mxu0 %v2830
    %3164 = vmatprep.subr.bf16.mxu0 0
    %3165 = vmatpush1.bf16.msra.mxu0 %v2831
    %3166 = vmatprep.subr.bf16.mxu0 0
    %3167 = vmatpush1.bf16.msra.mxu0 %v2832
    %3168 = vmatprep.subr.bf16.mxu0 0
    %3169 = vmatpush1.bf16.msra.mxu0 %v2833
    %3170 = vmatprep.subr.bf16.mxu0 0
    %3171 = vmatpush1.bf16.msra.mxu0 %v2834
    %3172 = vmatprep.subr.bf16.mxu0 0
    %3173 = vmatpush1.bf16.msra.mxu0 %v2835
    %3174 = vmatprep.subr.bf16.mxu0 0
    %3175 = vmatpush1.bf16.msra.mxu0 %v2836
    %3176 = vmatprep.subr.bf16.mxu0 0
    %3177 = vmatpush1.bf16.msra.mxu0 %v2837
    %3178 = vmatprep.subr.bf16.mxu0 0
    %3179 = vmatpush1.bf16.msra.mxu0 %v2838
    %3180 = vmatprep.subr.bf16.mxu0 0
    %3181 = vmatpush1.bf16.msra.mxu0 %v2839
    %3182 = vmatprep.subr.bf16.mxu0 0
    %3183 = vmatpush1.bf16.msra.mxu0 %v2840
    %3184 = vmatprep.subr.bf16.mxu0 0
    %3185 = vmatpush1.bf16.msra.mxu0 %v2841
    %3186 = vmatprep.subr.bf16.mxu0 0
    %3187 = vmatpush1.bf16.msra.mxu0 %v2842
    %3188 = vmatprep.subr.bf16.mxu0 0
    %3189 = vmatpush1.bf16.msra.mxu0 %v2843
    %3190 = vmatprep.subr.bf16.mxu0 0
    %3191 = vmatpush1.bf16.msra.mxu0 %v2844
    %3192 = vmatprep.mubr.bf16.mxu0 %v1993
    %3193 = vmatmul.mubr.bf16.gmra.mrb[0].mxu0 %v1992
    %v3194 = vpop.f32.mrb[0].mxu0
    %v3195 = vadd.f32 %v3154, %v3194
    %v3196 = vpop.f32.mrb[0].mxu0
    %v3197 = vpop.f32.mrb[0].mxu0
    %v3198 = vadd.f32 %v3157, %v3197
    %v3199 = vpop.f32.mrb[0].mxu0
    %3200 = vdwg.mxu0
    %3201 = vmatprep.subr.bf16.mxu0 0
    %3202 = vmatpush1.bf16.msra.mxu0 %v2845
    %3203 = vmatprep.subr.bf16.mxu0 0
    %3204 = vmatpush1.bf16.msra.mxu0 %v2846
    %3205 = vmatprep.subr.bf16.mxu0 0
    %3206 = vmatpush1.bf16.msra.mxu0 %v2847
    %3207 = vmatprep.subr.bf16.mxu0 0
    %3208 = vmatpush1.bf16.msra.mxu0 %v2848
    %3209 = vmatprep.subr.bf16.mxu0 0
    %3210 = vmatpush1.bf16.msra.mxu0 %v2849
    %3211 = vmatprep.subr.bf16.mxu0 0
    %3212 = vmatpush1.bf16.msra.mxu0 %v2850
    %3213 = vmatprep.subr.bf16.mxu0 0
    %3214 = vmatpush1.bf16.msra.mxu0 %v2851
    %3215 = vmatprep.subr.bf16.mxu0 0
    %3216 = vmatpush1.bf16.msra.mxu0 %v2852
    %3217 = vmatprep.subr.bf16.mxu0 0
    %3218 = vmatpush1.bf16.msra.mxu0 %v2853
    %3219 = vmatprep.subr.bf16.mxu0 0
    %3220 = vmatpush1.bf16.msra.mxu0 %v2854
    %3221 = vmatprep.subr.bf16.mxu0 0
    %3222 = vmatpush1.bf16.msra.mxu0 %v2855
    %3223 = vmatprep.subr.bf16.mxu0 0
    %3224 = vmatpush1.bf16.msra.mxu0 %v2856
    %3225 = vmatprep.subr.bf16.mxu0 0
    %3226 = vmatpush1.bf16.msra.mxu0 %v2857
    %3227 = vmatprep.subr.bf16.mxu0 0
    %3228 = vmatpush1.bf16.msra.mxu0 %v2858
    %3229 = vmatprep.subr.bf16.mxu0 0
    %3230 = vmatpush1.bf16.msra.mxu0 %v2859
    %3231 = vmatprep.subr.bf16.mxu0 0
    %3232 = vmatpush1.bf16.msra.mxu0 %v2860
    %3233 = vmatprep.mubr.bf16.mxu0 %v1995
    %3234 = vmatmul.mubr.bf16.gmra.mrb[0].mxu0 %v1994
    %v3235 = vpop.f32.mrb[0].mxu0
    %v3236 = vadd.f32 %v3195, %v3235
    %v3237 = vpop.f32.mrb[0].mxu0
    %v3238 = vpop.f32.mrb[0].mxu0
    %v3239 = vadd.f32 %v3198, %v3238
    %v3240 = vpop.f32.mrb[0].mxu0
    %3241 = vdwg.mxu0
    %3242 = vmatprep.subr.bf16.mxu0 0
    %3243 = vmatpush1.bf16.msra.mxu0 %v2861
    %3244 = vmatprep.subr.bf16.mxu0 0
    %3245 = vmatpush1.bf16.msra.mxu0 %v2862
    %3246 = vmatprep.subr.bf16.mxu0 0
    %3247 = vmatpush1.bf16.msra.mxu0 %v2863
    %3248 = vmatprep.subr.bf16.mxu0 0
    %3249 = vmatpush1.bf16.msra.mxu0 %v2864
    %3250 = vmatprep.subr.bf16.mxu0 0
    %3251 = vmatpush1.bf16.msra.mxu0 %v2865
    %3252 = vmatprep.subr.bf16.mxu0 0
    %3253 = vmatpush1.bf16.msra.mxu0 %v2866
    %3254 = vmatprep.subr.bf16.mxu0 0
    %3255 = vmatpush1.bf16.msra.mxu0 %v2867
    %3256 = vmatprep.subr.bf16.mxu0 0
    %3257 = vmatpush1.bf16.msra.mxu0 %v2868
    %3258 = vmatprep.subr.bf16.mxu0 0
    %3259 = vmatpush1.bf16.msra.mxu0 %v2869
    %3260 = vmatprep.subr.bf16.mxu0 0
    %3261 = vmatpush1.bf16.msra.mxu0 %v2870
    %3262 = vmatprep.subr.bf16.mxu0 0
    %3263 = vmatpush1.bf16.msra.mxu0 %v2871
    %3264 = vmatprep.subr.bf16.mxu0 0
    %3265 = vmatpush1.bf16.msra.mxu0 %v2872
    %3266 = vmatprep.subr.bf16.mxu0 0
    %3267 = vmatpush1.bf16.msra.mxu0 %v2873
    %3268 = vmatprep.subr.bf16.mxu0 0
    %3269 = vmatpush1.bf16.msra.mxu0 %v2874
    %3270 = vmatprep.subr.bf16.mxu0 0
    %3271 = vmatpush1.bf16.msra.mxu0 %v2875
    %3272 = vmatprep.subr.bf16.mxu0 0
    %3273 = vmatpush1.bf16.msra.mxu0 %v2876
    %3274 = vmatprep.mubr.bf16.mxu0 %v1997
    %3275 = vmatmul.mubr.bf16.gmra.mrb[0].mxu0 %v1996
    %v3276 = vpop.f32.mrb[0].mxu0
    %v3277 = vadd.f32 %v3236, %v3276
    %v3278 = vpop.f32.mrb[0].mxu0
    %v3279 = vpop.f32.mrb[0].mxu0
    %v3280 = vadd.f32 %v3239, %v3279
    %v3281 = vpop.f32.mrb[0].mxu0
    %3282 = vdwg.mxu0
    %3283 = vmatprep.subr.bf16.mxu0 0
    %3284 = vmatpush1.bf16.msra.mxu0 %v2877
    %3285 = vmatprep.subr.bf16.mxu0 0
    %3286 = vmatpush1.bf16.msra.mxu0 %v2878
    %3287 = vmatprep.subr.bf16.mxu0 0
    %3288 = vmatpush1.bf16.msra.mxu0 %v2879
    %3289 = vmatprep.subr.bf16.mxu0 0
    %3290 = vmatpush1.bf16.msra.mxu0 %v2880
    %3291 = vmatprep.subr.bf16.mxu0 0
    %3292 = vmatpush1.bf16.msra.mxu0 %v2881
    %3293 = vmatprep.subr.bf16.mxu0 0
    %3294 = vmatpush1.bf16.msra.mxu0 %v2882
    %3295 = vmatprep.subr.bf16.mxu0 0
    %3296 = vmatpush1.bf16.msra.mxu0 %v2883
    %3297 = vmatprep.subr.bf16.mxu0 0
    %3298 = vmatpush1.bf16.msra.mxu0 %v2884
    %3299 = vmatprep.subr.bf16.mxu0 0
    %3300 = vmatpush1.bf16.msra.mxu0 %v2885
    %3301 = vmatprep.subr.bf16.mxu0 0
    %3302 = vmatpush1.bf16.msra.mxu0 %v2886
    %3303 = vmatprep.subr.bf16.mxu0 0
    %3304 = vmatpush1.bf16.msra.mxu0 %v2887
    %3305 = vmatprep.subr.bf16.mxu0 0
    %3306 = vmatpush1.bf16.msra.mxu0 %v2888
    %3307 = vmatprep.subr.bf16.mxu0 0
    %3308 = vmatpush1.bf16.msra.mxu0 %v2889
    %3309 = vmatprep.subr.bf16.mxu0 0
    %3310 = vmatpush1.bf16.msra.mxu0 %v2890
    %3311 = vmatprep.subr.bf16.mxu0 0
    %3312 = vmatpush1.bf16.msra.mxu0 %v2891
    %3313 = vmatprep.subr.bf16.mxu0 0
    %3314 = vmatpush1.bf16.msra.mxu0 %v2892
    %3315 = vmatprep.mubr.bf16.mxu0 %v1999
    %3316 = vmatmul.mubr.bf16.gmra.mrb[0].mxu0 %v1998
    %v3317 = vpop.f32.mrb[0].mxu0
    %v3318 = vadd.f32 %v3277, %v3317
    %v3319 = vpop.f32.mrb[0].mxu0
    %v3320 = vpop.f32.mrb[0].mxu0
    %v3321 = vadd.f32 %v3280, %v3320
    %v3322 = vpop.f32.mrb[0].mxu0
    %3323 = vdwg.mxu0
    %3324 = vmatprep.subr.bf16.mxu0 0
    %3325 = vmatpush1.bf16.msra.mxu0 %v2893
    %3326 = vmatprep.subr.bf16.mxu0 0
    %3327 = vmatpush1.bf16.msra.mxu0 %v2894
    %3328 = vmatprep.subr.bf16.mxu0 0
    %3329 = vmatpush1.bf16.msra.mxu0 %v2895
    %3330 = vmatprep.subr.bf16.mxu0 0
    %3331 = vmatpush1.bf16.msra.mxu0 %v2896
    %3332 = vmatprep.subr.bf16.mxu0 0
    %3333 = vmatpush1.bf16.msra.mxu0 %v2897
    %3334 = vmatprep.subr.bf16.mxu0 0
    %3335 = vmatpush1.bf16.msra.mxu0 %v2898
    %3336 = vmatprep.subr.bf16.mxu0 0
    %3337 = vmatpush1.bf16.msra.mxu0 %v2899
    %3338 = vmatprep.subr.bf16.mxu0 0
    %3339 = vmatpush1.bf16.msra.mxu0 %v2900
    %3340 = vmatprep.subr.bf16.mxu0 0
    %3341 = vmatpush1.bf16.msra.mxu0 %v2901
    %3342 = vmatprep.subr.bf16.mxu0 0
    %3343 = vmatpush1.bf16.msra.mxu0 %v2902
    %3344 = vmatprep.subr.bf16.mxu0 0
    %3345 = vmatpush1.bf16.msra.mxu0 %v2903
    %3346 = vmatprep.subr.bf16.mxu0 0
    %3347 = vmatpush1.bf16.msra.mxu0 %v2904
    %3348 = vmatprep.subr.bf16.mxu0 0
    %3349 = vmatpush1.bf16.msra.mxu0 %v2905
    %3350 = vmatprep.subr.bf16.mxu0 0
    %3351 = vmatpush1.bf16.msra.mxu0 %v2906
    %3352 = vmatprep.subr.bf16.mxu0 0
    %3353 = vmatpush1.bf16.msra.mxu0 %v2907
    %3354 = vmatprep.subr.bf16.mxu0 0
    %3355 = vmatpush1.bf16.msra.mxu0 %v2908
    %3356 = vmatprep.mubr.bf16.mxu0 %v2001
    %3357 = vmatmul.mubr.bf16.gmra.mrb[0].mxu0 %v2000
    %v3358 = vpop.f32.mrb[0].mxu0
    %v3359 = vadd.f32 %v3318, %v3358
    %v3360 = vpop.f32.mrb[0].mxu0
    %v3361 = vpop.f32.mrb[0].mxu0
    %v3362 = vadd.f32 %v3321, %v3361
    %v3363 = vpop.f32.mrb[0].mxu0
    %3364 = vdwg.mxu0
    %v3365 = vadd.f32 %v1195, %v3359
    %v3366 = vadd.f32 %v1196, %v3362
    %s3367 = scalar_lea.vmem %s12, %s78
    %v3368 = vld [vmem:[%s3367] sm:$0x1]
    %s3369 = scalar_lea.vmem %s13, %s78
    %v3370 = vld [vmem:[%s3369] sm:$0x1]
    %v3371 = vsel %vm74, %v3365, 0.0
    %3372 = vadd.xlane.f32.xlu0 %v3371
    %v3373 = vpop.xlane.xlu0 %3372
    %v3374 = vsel %vm74, %v3366, 0.0
    %3375 = vadd.xlane.f32.xlu0 %v3374
    %v3376 = vpop.xlane.xlu0 %3375
    %v3377 = vmul.f32 %v3373, %v1154
    %v3378 = vmul.f32 %v3376, %v1154
    %v3379 = vmul.f32 %v3365, %v3365
    %v3380 = vmul.f32 %v3366, %v3366
    %v3381 = vsel %vm74, %v3379, 0.0
    %3382 = vadd.xlane.f32.xlu0 %v3381
    %v3383 = vpop.xlane.xlu0 %3382
    %v3384 = vsel %vm74, %v3380, 0.0
    %3385 = vadd.xlane.f32.xlu0 %v3384
    %v3386 = vpop.xlane.xlu0 %3385
    %v3387 = vmul.f32 %v3383, %v1154
    %v3388 = vmul.f32 %v3386, %v1154
    %v3389 = vmul.f32 %v3377, %v3377
    %v3390 = vmul.f32 %v3378, %v3378
    %v3391 = vsub.f32 %v3387, %v3389
    %v3392 = vsub.f32 %v3388, %v3390
    %v3393 = vmax.f32 %v3391, 0.0
    %v3394 = vmax.f32 %v3392, 0.0
    %v3395 = vsub.f32 %v3365, %v3377
    %v3396 = vsub.f32 %v3366, %v3378
    %v3397 = vadd.f32 %v3393, 1e-05
    %v3398 = vadd.f32 %v3394, 1e-05
    %v3399 = vrsqrt.pop %v3397
    %v3400 = vrsqrt.pop %v3398
    %v3401 = vmul.f32 %v3395, %v3399
    %v3402 = vmul.f32 %v3396, %v3400
    %v3404 = vlaneseq
    %v3405 = vshrl.u32 %v3404, 7
    %v3406 = vsub.s32 0, %v3405
    %v3407 = vrot.slane %v3368, %v3406
    %v3409 = vmul.f32 %v3401, %v3407
    %v3410 = vmul.f32 %v3402, %v3407
    %v3412 = vlaneseq
    %v3413 = vshrl.u32 %v3412, 7
    %v3414 = vsub.s32 0, %v3413
    %v3415 = vrot.slane %v3370, %v3414
    %v3417 = vadd.f32 %v3409, %v3415
    %v3418 = vadd.f32 %v3410, %v3415
    %3419 = vst.msk [vmem:[#allocation2] sm:$0xff] %vm74, %v3417
    %3420 = vst.msk [vmem:[#allocation2 + $0x8] sm:$0xff] %vm74, %v3418
  $region70: #{_saint_forward_impl.1} parent=0 // loop_footer
    %s82 = sadd.s32 1, %s78
  $region71: #{_saint_forward_impl.1} parent=0 // loop_footer_branch
    %77 = sbr.rel target = $region67
  $region72: #{_saint_forward_impl.1} parent=0 // loop_exit
    _
  %v3421 = vld [vmem:[#allocation2] sm:$0xff]
  %v3422 = vld [vmem:[#allocation2 + $0x8] sm:$0xff]
  %v3423 = vsel %vm74, %v3421, 0.0
  %v3424 = vrot.slane %v3423, 4
  %v3425 = vadd.f32 %v3423, %v3424
  %v3426 = vrot.slane %v3425, 2
  %v3427 = vadd.f32 %v3425, %v3426
  %v3428 = vrot.slane %v3427, 1
  %v3429 = vadd.f32 %v3427, %v3428
  %v3430 = vsel %vm74, %v3422, 0.0
  %v3431 = vrot.slane %v3430, 4
  %v3432 = vadd.f32 %v3430, %v3431
  %v3433 = vrot.slane %v3432, 2
  %v3434 = vadd.f32 %v3432, %v3433
  %v3435 = vrot.slane %v3434, 1
  %v3436 = vadd.f32 %v3434, %v3435
  %v3437 = vrcp.pop 8.0
  %v3438 = vmul.f32 %v3429, %v3437
  %v3439 = vmul.f32 %v3436, %v3437
  %v3440 = vld [vmem:[%s14] sm:$0x1]
  %v3442 = vlaneseq
  %v3443 = vshrl.u32 %v3442, 7
  %v3444 = vsub.s32 0, %v3443
  %v3445 = vrot.slane %v3440, %v3444
  %v3447 = vmul.f32 %v3438, %v3445
  %v3448 = vmul.f32 %v3439, %v3445
  %v3451 = vrot.slane %v3448, 7
  %vm3452 = vcmask 1041409
  %v3453 = vsel %vm3452, %v3451, %v3447
  %vm3455 = vcmask 254976
  %v3456 = vsel %vm3455, %v3453, 0.0
  %3457 = vadd.xlane.f32.xlu0 %v3456
  %v3458 = vpop.xlane.xlu0 %3457
  %v3459 = vld [vmem:[#allocation3] sm:$0x1]
  %v3461 = vlaneseq
  %v3462 = vshrl.u32 %v3461, 7
  %v3463 = vsub.s32 0, %v3462
  %v3464 = vrot.slane %v3459, %v3463
  %v3466 = vadd.f32 %v3458, %v3464
  %vm3467 = vcmask 1024
  %3468 = vst.msk [vmem:[%s16] sm:$0x3] %vm3467, %v3466
  // Predicated region
  $region73: #{_saint_forward_impl.1} parent=0 // pred_check
    _
  $region74: #{_saint_forward_impl.1} parent=0 // pred_check_branch
    %3470 = sbr.rel (0) target = $region76
  $region75: #{_saint_forward_impl.1} parent=0 // pred_region
    _
  $region76: #{_saint_forward_impl.1} parent=0 // pred_fallthru
    _
  // Predicated region
  $region77: #{_saint_forward_impl.1} parent=0 // pred_check
    _
  $region78: #{_saint_forward_impl.1} parent=0 // pred_check_branch
    %3472 = sbr.rel (0) target = $region80
  $region79: #{_saint_forward_impl.1} parent=0 // pred_region
    _
  $region80: #{_saint_forward_impl.1} parent=0 // pred_fallthru
    _

</llo_original>
